<compile_context>
chip_gen: v7x
topology: tpu7x:2x2x1
jax: 0.10.0
libtpu: 0.0.40
codegen_flags: <defaults>
</compile_context>

<pallas_src>
import functools

import jax
import jax.numpy as jnp
from jax.experimental import pallas as pl
from jax.experimental.pallas import tpu as pltpu

EPS = 1e-5
LANE = 128


def _round_up(x, m):
    return (x + m - 1) // m * m


@functools.lru_cache()
def _vmem_limit_bytes():
    """Scoped-VMEM budget derived from the chip's physical VMEM (with headroom)."""
    cap = 64 * 1024 * 1024
    try:
        info = pltpu.get_tpu_info()
        cap = int(getattr(info, "vmem_capacity_bytes", cap))
    except Exception:
        pass
    # ~75% of physical (v7x: 48 MiB, v5e/v6e: 96 MiB), never above 100 MiB.
    return min(cap * 3 // 4, 100 * 1024 * 1024)


def _pick_tile_h(h, w, cp, budget):
    """Largest H-tile whose per-step footprint fits the VMEM budget."""
    wp2 = w + 2
    for th in range(h, 0, -1):
        if h % th:
            continue
        if (th * w) % 8 and th != h:          # keep pixel blocks sublane-friendly
            continue
        step_bytes = (
            2 * th * w * cp * 2               # y1 input tile (double-buffered, bf16)
            + 2 * 2 * w * cp * 2              # halo rows (double-buffered, bf16)
            + 2 * th * w * cp * 2             # y2 output tile (double-buffered, bf16)
            + 2 * 9 * cp * cp * 2             # resident conv2 weights (bf16)
            + ((th + 2) * wp2 + 8) * cp * 2   # flat padded activation scratch (bf16)
            + 3 * th * wp2 * cp * 4)          # f32 accumulator + epilogue temps
        if step_bytes <= budget:
            return th
    return 1


# ----------------------------- Pallas kernels ------------------------------

def _conv1_kernel(xc_ref, w_ref, y_ref, sums_ref):
    """conv1 on one im2col'd H-tile + BN1 batch-stat partials.

    xc_ref:   (1, TH*W, 9*Cin) f32   im2col'd input tile
    w_ref:    (9*Cin, Cp)      f32   weight, Cout lane-padded to Cp
    y_ref:    (1, TH*W, Cp)    bf16  pre-BN conv1 output
    sums_ref: (1, 1, 2, Cp)    f32   [sum, sum-of-squares] over this tile
    """
    acc = jnp.dot(xc_ref[0], w_ref[...], preferred_element_type=jnp.float32)
    y_ref[0] = acc.astype(y_ref.dtype)
    sums_ref[0, 0, 0:1, :] = jnp.sum(acc, axis=0, keepdims=True)
    sums_ref[0, 0, 1:2, :] = jnp.sum(acc * acc, axis=0, keepdims=True)


def _conv2_kernel(y1_ref, ah_ref, s_ref, t_ref, w_ref, y2_ref, sums_ref, apad_ref):
    """Fused BN1-affine + ReLU + 3x3 conv2 + BN2 batch-stat partials for one H-tile.

    y1_ref:   (1, TH*W, Cp)   bf16  pre-BN conv1 output tile
    ah_ref:   (1, 1, 2*W, Cp) bf16  post-ReLU halo rows (row above / below the tile)
    s_ref:    (1, Cp) f32 , t_ref: (1, Cp) f32   folded BN1 scale / shift
    w_ref:    (9, Cp, Cp)     bf16  conv2 weights, k = kh*3 + kw
    y2_ref:   (1, TH*W, Cp)   bf16  pre-BN conv2 output tile
    sums_ref: (1, 1, 2, Cp)   f32
    apad_ref: (NFLAT, Cp)     bf16  flattened spatially-padded activation scratch
    """
    cp = y1_ref.shape[2]
    w = ah_ref.shape[2] // 2
    th = y1_ref.shape[1] // w
    wp2 = w + 2

    # BN1 affine + ReLU in f32; cast to bf16 ONCE per tile (not once per tap).
    a1 = jnp.maximum(y1_ref[0].astype(jnp.float32) * s_ref[...] + t_ref[...], 0.0)
    a1 = a1.astype(apad_ref.dtype)
    ah = ah_ref[0, 0]                                  # (2*W, Cp) bf16, post-ReLU

    # Zero only the left/right halo columns — the only zero positions a real output
    # ever reads.  Rewritten every step so the kernel is megacore-safe.
    zrow = jnp.zeros((1, cp), apad_ref.dtype)
    for r in range(th + 2):
        apad_ref[r * wp2:r * wp2 + 1, :] = zrow
        apad_ref[r * wp2 + w + 1:r * wp2 + w + 2, :] = zrow

    # Halo rows (data from the neighbouring tiles, zeros at the image border).
    apad_ref[1:1 + w, :] = ah[:w]
    base_bot = (th + 1) * wp2 + 1
    apad_ref[base_bot:base_bot + w, :] = ah[w:]
    # Interior rows.
    for hh in range(th):
        base = (hh + 1) * wp2 + 1
        apad_ref[base:base + w, :] = a1[hh * w:(hh + 1) * w, :]

    # 3x3 conv = 9 accumulating MXU matmuls over *contiguous flat slices* of the
    # padded buffer (tap (di, dj) -> flat offset di*wp2 + dj); no per-tap window
    # copy.  Outputs are computed at padded width wp2 (junk columns dropped below).
    acc = jnp.zeros((th * wp2, cp), jnp.float32)
    for k in range(9):
        di, dj = k // 3, k % 3
        off = di * wp2 + dj
        acc = acc + jnp.dot(apad_ref[off:off + th * wp2, :], w_ref[k],
                            preferred_element_type=jnp.float32)

    # Epilogue: keep only the W real columns per row; emit bf16 y2 and f32
    # [sum, sum-of-squares] partials (over real pixels only) for BN2.
    sum_c = jnp.zeros((1, cp), jnp.float32)
    sq_c = jnp.zeros((1, cp), jnp.float32)
    for hh in range(th):
        row = acc[hh * wp2:hh * wp2 + w, :]
        y2_ref[0, hh * w:(hh + 1) * w, :] = row.astype(y2_ref.dtype)
        sum_c = sum_c + jnp.sum(row, axis=0, keepdims=True)
        sq_c = sq_c + jnp.sum(row * row, axis=0, keepdims=True)
    sums_ref[0, 0, 0:1, :] = sum_c
    sums_ref[0, 0, 1:2, :] = sq_c


def _bn_relu_kernel(y_ref, s_ref, t_ref, o_ref):
    """Final folded BN2 affine + ReLU; writes only the real Cout channels."""
    cout = o_ref.shape[-1]
    v = jnp.maximum(y_ref[0].astype(jnp.float32) * s_ref[...] + t_ref[...], 0.0)
    o_ref[0] = v[:, :cout]


# ------------------------------ pallas_call wrappers -------------------------

def _conv1_call(x_col, w1k, tile_h, w, cp):
    n, hw, k1 = x_col.shape
    nt = (hw // w) // tile_h
    return pl.pallas_call(
        _conv1_kernel,
        out_shape=(jax.ShapeDtypeStruct((n, hw, cp), jnp.bfloat16),
                   jax.ShapeDtypeStruct((n, nt, 2, cp), jnp.float32)),
        grid=(n, nt),
        in_specs=[
            pl.BlockSpec((1, tile_h * w, k1), lambda i, t: (i, t, 0)),
            pl.BlockSpec((k1, cp), lambda i, t: (0, 0)),       # resident weight
        ],
        out_specs=(
            pl.BlockSpec((1, tile_h * w, cp), lambda i, t: (i, t, 0)),
            pl.BlockSpec((1, 1, 2, cp), lambda i, t: (i, t, 0, 0)),
        ),
        compiler_params=pltpu.CompilerParams(
            dimension_semantics=("parallel", "parallel"),
            vmem_limit_bytes=_vmem_limit_bytes()),
    )(x_col, w1k)


def _conv2_call(y1, halo, s1, t1, w2k, tile_h, h, w, cp):
    n, hw, _ = y1.shape
    nt = h // tile_h
    wp2 = w + 2
    nflat = _round_up((tile_h + 2) * wp2 + 2, 8)   # +2: flat-shift overrun (junk only)
    return pl.pallas_call(
        _conv2_kernel,
        out_shape=(jax.ShapeDtypeStruct((n, hw, cp), jnp.bfloat16),
                   jax.ShapeDtypeStruct((n, nt, 2, cp), jnp.float32)),
        grid=(n, nt),
        in_specs=[
            pl.BlockSpec((1, tile_h * w, cp), lambda i, t: (i, t, 0)),
            pl.BlockSpec((1, 1, 2 * w, cp), lambda i, t: (i, t, 0, 0)),
            pl.BlockSpec((1, cp), lambda i, t: (0, 0)),
            pl.BlockSpec((1, cp), lambda i, t: (0, 0)),
            pl.BlockSpec((9, cp, cp), lambda i, t: (0, 0, 0)),  # resident bf16 weight
        ],
        out_specs=(
            pl.BlockSpec((1, tile_h * w, cp), lambda i, t: (i, t, 0)),
            pl.BlockSpec((1, 1, 2, cp), lambda i, t: (i, t, 0, 0)),
        ),
        scratch_shapes=[pltpu.VMEM((nflat, cp), jnp.bfloat16)],
        compiler_params=pltpu.CompilerParams(
            dimension_semantics=("parallel", "parallel"),
            vmem_limit_bytes=_vmem_limit_bytes()),
    )(y1, halo, s1, t1, w2k)


def _bn_relu_call(y2, s2, t2, cout, tile_h, w, cp):
    n, hw, _ = y2.shape
    nt = (hw // w) // tile_h
    return pl.pallas_call(
        _bn_relu_kernel,
        out_shape=jax.ShapeDtypeStruct((n, hw, cout), jnp.float32),
        grid=(n, nt),
        in_specs=[
            pl.BlockSpec((1, tile_h * w, cp), lambda i, t: (i, t, 0)),
            pl.BlockSpec((1, cp), lambda i, t: (0, 0)),
            pl.BlockSpec((1, cp), lambda i, t: (0, 0)),
        ],
        out_specs=pl.BlockSpec((1, tile_h * w, cout), lambda i, t: (i, t, 0)),
        compiler_params=pltpu.CompilerParams(
            dimension_semantics=("parallel", "parallel"),
            vmem_limit_bytes=_vmem_limit_bytes()),
    )(y2, s2, t2)


# ------------------------------- JAX glue -----------------------------------

def _stats_to_affine(sums, gamma, beta, count):
    """Per-tile [sum, sumsq] partials -> folded BN scale/shift (biased variance)."""
    total = jnp.sum(sums[:, :, 0, :], axis=(0, 1))
    totsq = jnp.sum(sums[:, :, 1, :], axis=(0, 1))
    mean = total / count
    var = jnp.maximum(totsq / count - mean * mean, 0.0)   # f32, clamped (see TODO)
    scale = gamma / jnp.sqrt(var + EPS)        # padded channels: gamma=0 -> scale=0
    shift = beta - mean * scale
    return scale.reshape(1, -1), shift.reshape(1, -1)


def _make_halo(y1, s1, t1, tile_h, h, w, cp):
    """Post-ReLU activation rows just above/below every H-tile (zeros at the image
    border).  Tiny side input that lets conv2 use non-overlapping BlockSpecs."""
    n = y1.shape[0]
    nt = h // tile_h
    y1i = y1.reshape(n, h, w, cp)
    tid = jnp.arange(nt)
    top = jnp.take(y1i, jnp.clip(tid * tile_h - 1, 0, h - 1), axis=1)
    bot = jnp.take(y1i, jnp.clip(tid * tile_h + tile_h, 0, h - 1), axis=1)
    sb = s1.reshape(1, 1, 1, cp)
    tb = t1.reshape(1, 1, 1, cp)
    top = jnp.maximum(top.astype(jnp.float32) * sb + tb, 0.0)
    bot = jnp.maximum(bot.astype(jnp.float32) * sb + tb, 0.0)
    top = jnp.where((tid > 0)[None, :, None, None], top, 0.0)
    bot = jnp.where((tid < nt - 1)[None, :, None, None], bot, 0.0)
    halo = jnp.stack([top, bot], axis=2).reshape(n, nt, 2 * w, cp)
    return halo.astype(jnp.bfloat16)


@functools.partial(jax.jit, static_argnames=("tile_h",))
def double_conv(x_nchw, w1, b1, g1, be1, w2, b2, g2, be2, *, tile_h=None):
    # Conv biases cancel exactly under training-mode BatchNorm -> drop them.
    del b1, b2
    n, cin, h, w = x_nchw.shape
    cout = w1.shape[0]
    cp = _round_up(cout, LANE)                       # lane-dense channel dim
    count = float(n * h * w)

    if tile_h is None:
        tile_h = _pick_tile_h(h, w, cp, _vmem_limit_bytes() // 2)
    if h % tile_h:
        raise ValueError(f"tile_h={tile_h} must divide H={h}")

    # --- conv1 input: wrapper-side im2col (Cin is tiny, so 9x blow-up is cheap) ---
    x = jnp.transpose(x_nchw, (0, 2, 3, 1)).astype(jnp.float32)         # NHWC
    xp = jnp.pad(x, ((0, 0), (1, 1), (1, 1), (0, 0)))
    cols = [xp[:, di:di + h, dj:dj + w, :] for di in range(3) for dj in range(3)]
    x_col = jnp.concatenate(cols, axis=-1).reshape(n, h * w, 9 * cin)

    # Weights: k = kh*3 + kw, Cout lane-padded.  conv1 stays f32 (tiny K); conv2
    # uses bf16 MXU operands with f32 accumulation.
    w1k = jnp.pad(jnp.transpose(w1, (2, 3, 1, 0)).reshape(9 * cin, cout),
                  ((0, 0), (0, cp - cout))).astype(jnp.float32)
    w2k = jnp.pad(jnp.transpose(w2, (2, 3, 1, 0)).reshape(9, cout, cout),
                  ((0, 0), (0, cp - cout), (0, cp - cout))).astype(jnp.bfloat16)

    gp1 = jnp.pad(g1.astype(jnp.float32), (0, cp - cout))
    bp1 = jnp.pad(be1.astype(jnp.float32), (0, cp - cout))
    gp2 = jnp.pad(g2.astype(jnp.float32), (0, cp - cout))
    bp2 = jnp.pad(be2.astype(jnp.float32), (0, cp - cout))

    # --- conv1 (+ BN1 batch-stat partials), y1 stored bf16 ---
    y1, sums1 = _conv1_call(x_col, w1k, tile_h, w, cp)
    s1, t1 = _stats_to_affine(sums1, gp1, bp1, count)

    # --- BN1+ReLU fused into conv2's load; conv2 + BN2 batch-stat partials ---
    halo = _make_halo(y1, s1, t1, tile_h, h, w, cp)
    y2, sums2 = _conv2_call(y1, halo, s1, t1, w2k, tile_h, h, w, cp)
    s2, t2 = _stats_to_affine(sums2, gp2, bp2, count)

    # --- final BN2-affine + ReLU; kernel emits only the real Cout channels ---
    out = _bn_relu_call(y2, s2, t2, cout, tile_h, w, cp)   # (N, H*W, Cout) f32
    out = out.reshape(n, h, w, cout)
    return jnp.transpose(out, (0, 3, 1, 2))                # NCHW


# ---------------------------- pure-JAX reference -----------------------------

def _ref_double_conv(x, w1, b1, g1, be1, w2, b2, g2, be2):
    def conv(x, w, b):
        y = jax.lax.conv_general_dilated(
            x, w, window_strides=(1, 1), padding=((1, 1), (1, 1)),
            dimension_numbers=("NCHW", "OIHW", "NCHW"))
        return y + b[None, :, None, None]

    def bn_relu_ref(y, g, be):
        mean = jnp.mean(y, axis=(0, 2, 3), keepdims=True)
        var = jnp.mean((y - mean) ** 2, axis=(0, 2, 3), keepdims=True)
        yn = (y - mean) / jnp.sqrt(var + EPS)
        return jnp.maximum(yn * g[None, :, None, None] + be[None, :, None, None], 0.0)

    y = bn_relu_ref(conv(x, w1, b1), g1, be1)
    return bn_relu_ref(conv(y, w2, b2), g2, be2)


# ---------------------------------- main -------------------------------------

if __name__ == "__main__":
    N, in_ch, out_ch, H, W = 2, 4, 8, 16, 16

    key = jax.random.PRNGKey(0)
    k_x, k_w1, k_b1, k_w2, k_b2 = jax.random.split(key, 5)

    x = jax.random.normal(k_x, (N, in_ch, H, W), dtype=jnp.float32)

    # Deterministic Kaiming-uniform-style init (shapes from nn.Conv2d(in, out, 3)).
    bound1 = 1.0 / (in_ch * 9) ** 0.5
    w1 = jax.random.uniform(k_w1, (out_ch, in_ch, 3, 3), jnp.float32, -bound1, bound1)
    b1 = jax.random.uniform(k_b1, (out_ch,), jnp.float32, -bound1, bound1)
    bound2 = 1.0 / (out_ch * 9) ** 0.5
    w2 = jax.random.uniform(k_w2, (out_ch, out_ch, 3, 3), jnp.float32, -bound2, bound2)
    b2 = jax.random.uniform(k_b2, (out_ch,), jnp.float32, -bound2, bound2)

    # BatchNorm params (PyTorch defaults: gamma=1, beta=0).
    g1 = jnp.ones((out_ch,), jnp.float32)
    be1 = jnp.zeros((out_ch,), jnp.float32)
    g2 = jnp.ones((out_ch,), jnp.float32)
    be2 = jnp.zeros((out_ch,), jnp.float32)

    # tile_h=8 -> 2 H-tiles per image: exercises the halo path on the tiny demo.
    out = double_conv(x, w1, b1, g1, be1, w2, b2, g2, be2, tile_h=8)
    out = jax.block_until_ready(out)

    ref = _ref_double_conv(x, w1, b1, g1, be1, w2, b2, g2, be2)
    assert out.shape == (N, out_ch, H, W), out.shape
    # bf16 MXU operands + bf16 y1/y2 intermediates (f32 accumulation and f32 BN
    # statistics) -> slightly loose tolerance.
    assert jnp.allclose(out, ref, atol=3e-2, rtol=3e-2), (
        float(jnp.max(jnp.abs(out - ref))))

    print("KERNEL_OK")
</pallas_src>

<mosaic_0001>
module attributes {stable_mosaic.version = 11 : i64} {
  func.func @_conv1_kernel(%arg0: i32, %arg1: i32, %arg2: memref<1x128x36xf32, #tpu.memory_space<vmem>>, %arg3: memref<36x128xf32, #tpu.memory_space<vmem>>, %arg4: memref<1x128x128xbf16, #tpu.memory_space<vmem>>, %arg5: memref<1x1x2x128xf32, #tpu.memory_space<vmem>>) attributes {dimension_semantics = [#tpu.dimension_semantics<parallel>, #tpu.dimension_semantics<parallel>], iteration_bounds = array<i64: 2, 2>, scalar_prefetch = 0 : i64, scratch_operands = 0 : i64, tpu.core_type = #tpu.core_type<tc>, window_params = [{transform_indices = @transform_0, window_bounds = array<i64: 1, 128, 36>}, {pipeline_mode = #tpu.pipeline_mode<synchronous>, transform_indices = @transform_1, window_bounds = array<i64: 36, 128>}, {transform_indices = @transform_2, window_bounds = array<i64: 1, 128, 128>}, {transform_indices = @transform_3, window_bounds = array<i64: 1, 1, 2, 128>}]} {
    %c0 = arith.constant 0 : index
    %c0_0 = arith.constant 0 : index
    %c0_1 = arith.constant 0 : index
    %0 = vector.load %arg2[%c0, %c0_0, %c0_1] : memref<1x128x36xf32, #tpu.memory_space<vmem>>, vector<1x128x36xf32>
    %1 = vector.shape_cast %0 : vector<1x128x36xf32> to vector<128x36xf32>
    %c0_2 = arith.constant 0 : index
    %c0_3 = arith.constant 0 : index
    %2 = vector.load %arg3[%c0_2, %c0_3] : memref<36x128xf32, #tpu.memory_space<vmem>>, vector<36x128xf32>
    %cst = arith.constant dense<0.000000e+00> : vector<128x128xf32>
    %3 = tpu.matmul %1, %2, %cst {dimension_numbers = #tpu.dot_dimension_numbers<[1], [0], [0], [1], [0, 0, 1, 1], [], []>} : vector<128x36xf32>, vector<36x128xf32>, vector<128x128xf32> -> vector<128x128xf32>
    %4 = arith.truncf %3 : vector<128x128xf32> to vector<128x128xbf16>
    %c0_4 = arith.constant 0 : index
    %c0_5 = arith.constant 0 : index
    %c0_6 = arith.constant 0 : index
    %5 = vector.load %arg4[%c0_4, %c0_5, %c0_6] : memref<1x128x128xbf16, #tpu.memory_space<vmem>>, vector<1x128x128xbf16>
    %6 = vector.shape_cast %5 : vector<1x128x128xbf16> to vector<128x128xbf16>
    %7 = vector.shape_cast %4 : vector<128x128xbf16> to vector<1x128x128xbf16>
    tpu.vector_store %arg4[%c0_4, %c0_5, %c0_6], %7 {strides = array<i32>} : memref<1x128x128xbf16, #tpu.memory_space<vmem>>, vector<1x128x128xbf16>,
    %cst_7 = arith.constant dense<0.000000e+00> : vector<128xf32>
    %8 = vector.multi_reduction <add>, %3, %cst_7 [0] : vector<128x128xf32> to vector<128xf32>
    %9 = vector.shape_cast %8 : vector<128xf32> to vector<1x128xf32>
    %c0_8 = arith.constant 0 : index
    %c0_9 = arith.constant 0 : index
    %c0_10 = arith.constant 0 : index
    %c0_11 = arith.constant 0 : index
    %10 = vector.load %arg5[%c0_8, %c0_9, %c0_10, %c0_11] : memref<1x1x2x128xf32, #tpu.memory_space<vmem>>, vector<1x1x1x128xf32>
    %11 = vector.shape_cast %10 : vector<1x1x1x128xf32> to vector<1x128xf32>
    %12 = vector.shape_cast %9 : vector<1x128xf32> to vector<1x1x1x128xf32>
    tpu.vector_store %arg5[%c0_8, %c0_9, %c0_10, %c0_11], %12 {strides = array<i32>} : memref<1x1x2x128xf32, #tpu.memory_space<vmem>>, vector<1x1x1x128xf32>,
    %13 = arith.mulf %3, %3 : vector<128x128xf32>
    %cst_12 = arith.constant dense<0.000000e+00> : vector<128xf32>
    %14 = vector.multi_reduction <add>, %13, %cst_12 [0] : vector<128x128xf32> to vector<128xf32>
    %15 = vector.shape_cast %14 : vector<128xf32> to vector<1x128xf32>
    %c0_13 = arith.constant 0 : index
    %c0_14 = arith.constant 0 : index
    %c1 = arith.constant 1 : index
    %c0_15 = arith.constant 0 : index
    %16 = vector.load %arg5[%c0_13, %c0_14, %c1, %c0_15] : memref<1x1x2x128xf32, #tpu.memory_space<vmem>>, vector<1x1x1x128xf32>
    %17 = vector.shape_cast %16 : vector<1x1x1x128xf32> to vector<1x128xf32>
    %18 = vector.shape_cast %15 : vector<1x128xf32> to vector<1x1x1x128xf32>
    tpu.vector_store %arg5[%c0_13, %c0_14, %c1, %c0_15], %18 {strides = array<i32>} : memref<1x1x2x128xf32, #tpu.memory_space<vmem>>, vector<1x1x1x128xf32>,
    return
  }
  func.func @transform_0(%arg0: i32, %arg1: i32) -> (i32, i32, i32) {
    %c0_i32 = arith.constant 0 : i32
    %c0_i32_0 = arith.constant 0 : i32
    return %arg0, %arg1, %c0_i32 : i32, i32, i32
  }
  func.func @transform_1(%arg0: i32, %arg1: i32) -> (i32, i32) {
    %c0_i32 = arith.constant 0 : i32
    %c0_i32_0 = arith.constant 0 : i32
    %c0_i32_1 = arith.constant 0 : i32
    return %c0_i32, %c0_i32_0 : i32, i32
  }
  func.func @transform_2(%arg0: i32, %arg1: i32) -> (i32, i32, i32) {
    %c0_i32 = arith.constant 0 : i32
    %c0_i32_0 = arith.constant 0 : i32
    return %arg0, %arg1, %c0_i32 : i32, i32, i32
  }
  func.func @transform_3(%arg0: i32, %arg1: i32) -> (i32, i32, i32, i32) {
    %c0_i32 = arith.constant 0 : i32
    %c0_i32_0 = arith.constant 0 : i32
    %c0_i32_1 = arith.constant 0 : i32
    return %arg0, %arg1, %c0_i32, %c0_i32_0 : i32, i32, i32, i32
  }
}

module attributes {stable_mosaic.version = 11 : i64} {
  func.func @_conv2_kernel(%arg0: i32, %arg1: i32, %arg2: memref<1x128x128xbf16, #tpu.memory_space<vmem>>, %arg3: memref<1x1x32x128xbf16, #tpu.memory_space<vmem>>, %arg4: memref<1x128xf32, #tpu.memory_space<vmem>>, %arg5: memref<1x128xf32, #tpu.memory_space<vmem>>, %arg6: memref<9x128x128xbf16, #tpu.memory_space<vmem>>, %arg7: memref<1x128x128xbf16, #tpu.memory_space<vmem>>, %arg8: memref<1x1x2x128xf32, #tpu.memory_space<vmem>>, %arg9: memref<184x128xbf16, #tpu.memory_space<vmem>>) attributes {dimension_semantics = [#tpu.dimension_semantics<parallel>, #tpu.dimension_semantics<parallel>], iteration_bounds = array<i64: 2, 2>, scalar_prefetch = 0 : i64, scratch_operands = 1 : i64, tpu.core_type = #tpu.core_type<tc>, window_params = [{transform_indices = @transform_0, window_bounds = array<i64: 1, 128, 128>}, {transform_indices = @transform_1, window_bounds = array<i64: 1, 1, 32, 128>}, {pipeline_mode = #tpu.pipeline_mode<synchronous>, transform_indices = @transform_2, window_bounds = array<i64: 1, 128>}, {pipeline_mode = #tpu.pipeline_mode<synchronous>, transform_indices = @transform_3, window_bounds = array<i64: 1, 128>}, {pipeline_mode = #tpu.pipeline_mode<synchronous>, transform_indices = @transform_4, window_bounds = array<i64: 9, 128, 128>}, {transform_indices = @transform_5, window_bounds = array<i64: 1, 128, 128>}, {transform_indices = @transform_6, window_bounds = array<i64: 1, 1, 2, 128>}]} {
    %c0 = arith.constant 0 : index
    %c0_0 = arith.constant 0 : index
    %c0_1 = arith.constant 0 : index
    %0 = vector.load %arg2[%c0, %c0_0, %c0_1] : memref<1x128x128xbf16, #tpu.memory_space<vmem>>, vector<1x128x128xbf16>
    %1 = vector.shape_cast %0 : vector<1x128x128xbf16> to vector<128x128xbf16>
    %2 = arith.extf %1 : vector<128x128xbf16> to vector<128x128xf32>
    %c0_2 = arith.constant 0 : index
    %c0_3 = arith.constant 0 : index
    %3 = vector.load %arg4[%c0_2, %c0_3] : memref<1x128xf32, #tpu.memory_space<vmem>>, vector<1x128xf32>
    %4 = vector.broadcast %3 : vector<1x128xf32> to vector<128x128xf32>
    %5 = arith.mulf %2, %4 : vector<128x128xf32>
    %c0_4 = arith.constant 0 : index
    %c0_5 = arith.constant 0 : index
    %6 = vector.load %arg5[%c0_4, %c0_5] : memref<1x128xf32, #tpu.memory_space<vmem>>, vector<1x128xf32>
    %7 = vector.broadcast %6 : vector<1x128xf32> to vector<128x128xf32>
    %8 = arith.addf %5, %7 : vector<128x128xf32>
    %cst = arith.constant 0.000000e+00 : f32
    %9 = vector.broadcast %cst : f32 to vector<128x128xf32>
    %10 = arith.maximumf %8, %9 : vector<128x128xf32>
    %11 = arith.truncf %10 : vector<128x128xf32> to vector<128x128xbf16>
    %c0_6 = arith.constant 0 : index
    %c0_7 = arith.constant 0 : index
    %c0_8 = arith.constant 0 : index
    %c0_9 = arith.constant 0 : index
    %12 = vector.load %arg3[%c0_6, %c0_7, %c0_8, %c0_9] : memref<1x1x32x128xbf16, #tpu.memory_space<vmem>>, vector<1x1x32x128xbf16>
    %13 = vector.shape_cast %12 : vector<1x1x32x128xbf16> to vector<32x128xbf16>
    %cst_10 = arith.constant 0.000000e+00 : bf16
    %14 = vector.broadcast %cst_10 : bf16 to vector<1x128xbf16>
    %c0_11 = arith.constant 0 : index
    %c0_12 = arith.constant 0 : index
    %15 = vector.load %arg9[%c0_11, %c0_12] : memref<184x128xbf16, #tpu.memory_space<vmem>>, vector<1x128xbf16>
    tpu.vector_store %arg9[%c0_11, %c0_12], %14 {strides = array<i32>} : memref<184x128xbf16, #tpu.memory_space<vmem>>, vector<1x128xbf16>,
    %c17 = arith.constant 17 : index
    %c0_13 = arith.constant 0 : index
    %16 = vector.load %arg9[%c17, %c0_13] : memref<184x128xbf16, #tpu.memory_space<vmem>>, vector<1x128xbf16>
    tpu.vector_store %arg9[%c17, %c0_13], %14 {strides = array<i32>} : memref<184x128xbf16, #tpu.memory_space<vmem>>, vector<1x128xbf16>,
    %c18 = arith.constant 18 : index
    %c0_14 = arith.constant 0 : index
    %17 = vector.load %arg9[%c18, %c0_14] : memref<184x128xbf16, #tpu.memory_space<vmem>>, vector<1x128xbf16>
    tpu.vector_store %arg9[%c18, %c0_14], %14 {strides = array<i32>} : memref<184x128xbf16, #tpu.memory_space<vmem>>, vector<1x128xbf16>,
    %c35 = arith.constant 35 : index
    %c0_15 = arith.constant 0 : index
    %18 = vector.load %arg9[%c35, %c0_15] : memref<184x128xbf16, #tpu.memory_space<vmem>>, vector<1x128xbf16>
    tpu.vector_store %arg9[%c35, %c0_15], %14 {strides = array<i32>} : memref<184x128xbf16, #tpu.memory_space<vmem>>, vector<1x128xbf16>,
    %c36 = arith.constant 36 : index
    %c0_16 = arith.constant 0 : index
    %19 = vector.load %arg9[%c36, %c0_16] : memref<184x128xbf16, #tpu.memory_space<vmem>>, vector<1x128xbf16>
    tpu.vector_store %arg9[%c36, %c0_16], %14 {strides = array<i32>} : memref<184x128xbf16, #tpu.memory_space<vmem>>, vector<1x128xbf16>,
    %c53 = arith.constant 53 : index
    %c0_17 = arith.constant 0 : index
    %20 = vector.load %arg9[%c53, %c0_17] : memref<184x128xbf16, #tpu.memory_space<vmem>>, vector<1x128xbf16>
    tpu.vector_store %arg9[%c53, %c0_17], %14 {strides = array<i32>} : memref<184x128xbf16, #tpu.memory_space<vmem>>, vector<1x128xbf16>,
    %c54 = arith.constant 54 : index
    %c0_18 = arith.constant 0 : index
    %21 = vector.load %arg9[%c54, %c0_18] : memref<184x128xbf16, #tpu.memory_space<vmem>>, vector<1x128xbf16>
    tpu.vector_store %arg9[%c54, %c0_18], %14 {strides = array<i32>} : memref<184x128xbf16, #tpu.memory_space<vmem>>, vector<1x128xbf16>,
    %c71 = arith.constant 71 : index
    %c0_19 = arith.constant 0 : index
    %22 = vector.load %arg9[%c71, %c0_19] : memref<184x128xbf16, #tpu.memory_space<vmem>>, vector<1x128xbf16>
    tpu.vector_store %arg9[%c71, %c0_19], %14 {strides = array<i32>} : memref<184x128xbf16, #tpu.memory_space<vmem>>, vector<1x128xbf16>,
    %c72 = arith.constant 72 : index
    %c0_20 = arith.constant 0 : index
    %23 = vector.load %arg9[%c72, %c0_20] : memref<184x128xbf16, #tpu.memory_space<vmem>>, vector<1x128xbf16>
    tpu.vector_store %arg9[%c72, %c0_20], %14 {strides = array<i32>} : memref<184x128xbf16, #tpu.memory_space<vmem>>, vector<1x128xbf16>,
    %c89 = arith.constant 89 : index
    %c0_21 = arith.constant 0 : index
    %24 = vector.load %arg9[%c89, %c0_21] : memref<184x128xbf16, #tpu.memory_space<vmem>>, vector<1x128xbf16>
    tpu.vector_store %arg9[%c89, %c0_21], %14 {strides = array<i32>} : memref<184x128xbf16, #tpu.memory_space<vmem>>, vector<1x128xbf16>,
    %c90 = arith.constant 90 : index
    %c0_22 = arith.constant 0 : index
    %25 = vector.load %arg9[%c90, %c0_22] : memref<184x128xbf16, #tpu.memory_space<vmem>>, vector<1x128xbf16>
    tpu.vector_store %arg9[%c90, %c0_22], %14 {strides = array<i32>} : memref<184x128xbf16, #tpu.memory_space<vmem>>, vector<1x128xbf16>,
    %c107 = arith.constant 107 : index
    %c0_23 = arith.constant 0 : index
    %26 = vector.load %arg9[%c107, %c0_23] : memref<184x128xbf16, #tpu.memory_space<vmem>>, vector<1x128xbf16>
    tpu.vector_store %arg9[%c107, %c0_23], %14 {strides = array<i32>} : memref<184x128xbf16, #tpu.memory_space<vmem>>, vector<1x128xbf16>,
    %c108 = arith.constant 108 : index
    %c0_24 = arith.constant 0 : index
    %27 = vector.load %arg9[%c108, %c0_24] : memref<184x128xbf16, #tpu.memory_space<vmem>>, vector<1x128xbf16>
    tpu.vector_store %arg9[%c108, %c0_24], %14 {strides = array<i32>} : memref<184x128xbf16, #tpu.memory_space<vmem>>, vector<1x128xbf16>,
    %c125 = arith.constant 125 : index
    %c0_25 = arith.constant 0 : index
    %28 = vector.load %arg9[%c125, %c0_25] : memref<184x128xbf16, #tpu.memory_space<vmem>>, vector<1x128xbf16>
    tpu.vector_store %arg9[%c125, %c0_25], %14 {strides = array<i32>} : memref<184x128xbf16, #tpu.memory_space<vmem>>, vector<1x128xbf16>,
    %c126 = arith.constant 126 : index
    %c0_26 = arith.constant 0 : index
    %29 = vector.load %arg9[%c126, %c0_26] : memref<184x128xbf16, #tpu.memory_space<vmem>>, vector<1x128xbf16>
    tpu.vector_store %arg9[%c126, %c0_26], %14 {strides = array<i32>} : memref<184x128xbf16, #tpu.memory_space<vmem>>, vector<1x128xbf16>,
    %c143 = arith.constant 143 : index
    %c0_27 = arith.constant 0 : index
    %30 = vector.load %arg9[%c143, %c0_27] : memref<184x128xbf16, #tpu.memory_space<vmem>>, vector<1x128xbf16>
    tpu.vector_store %arg9[%c143, %c0_27], %14 {strides = array<i32>} : memref<184x128xbf16, #tpu.memory_space<vmem>>, vector<1x128xbf16>,
    %c144 = arith.constant 144 : index
    %c0_28 = arith.constant 0 : index
    %31 = vector.load %arg9[%c144, %c0_28] : memref<184x128xbf16, #tpu.memory_space<vmem>>, vector<1x128xbf16>
    tpu.vector_store %arg9[%c144, %c0_28], %14 {strides = array<i32>} : memref<184x128xbf16, #tpu.memory_space<vmem>>, vector<1x128xbf16>,
    %c161 = arith.constant 161 : index
    %c0_29 = arith.constant 0 : index
    %32 = vector.load %arg9[%c161, %c0_29] : memref<184x128xbf16, #tpu.memory_space<vmem>>, vector<1x128xbf16>
    tpu.vector_store %arg9[%c161, %c0_29], %14 {strides = array<i32>} : memref<184x128xbf16, #tpu.memory_space<vmem>>, vector<1x128xbf16>,
    %c162 = arith.constant 162 : index
    %c0_30 = arith.constant 0 : index
    %33 = vector.load %arg9[%c162, %c0_30] : memref<184x128xbf16, #tpu.memory_space<vmem>>, vector<1x128xbf16>
    tpu.vector_store %arg9[%c162, %c0_30], %14 {strides = array<i32>} : memref<184x128xbf16, #tpu.memory_space<vmem>>, vector<1x128xbf16>,
    %c179 = arith.constant 179 : index
    %c0_31 = arith.constant 0 : index
    %34 = vector.load %arg9[%c179, %c0_31] : memref<184x128xbf16, #tpu.memory_space<vmem>>, vector<1x128xbf16>
    tpu.vector_store %arg9[%c179, %c0_31], %14 {strides = array<i32>} : memref<184x128xbf16, #tpu.memory_space<vmem>>, vector<1x128xbf16>,
    %35 = vector.extract_strided_slice %13 {offsets = [0, 0], sizes = [16, 128], strides = [1, 1]} : vector<32x128xbf16> to vector<16x128xbf16>
    %c1 = arith.constant 1 : index
    %c0_32 = arith.constant 0 : index
    %36 = vector.load %arg9[%c1, %c0_32] : memref<184x128xbf16, #tpu.memory_space<vmem>>, vector<16x128xbf16>
    tpu.vector_store %arg9[%c1, %c0_32], %35 {strides = array<i32>} : memref<184x128xbf16, #tpu.memory_space<vmem>>, vector<16x128xbf16>,
    %37 = vector.extract_strided_slice %13 {offsets = [16, 0], sizes = [16, 128], strides = [1, 1]} : vector<32x128xbf16> to vector<16x128xbf16>
    %c163 = arith.constant 163 : index
    %c0_33 = arith.constant 0 : index
    %38 = vector.load %arg9[%c163, %c0_33] : memref<184x128xbf16, #tpu.memory_space<vmem>>, vector<16x128xbf16>
    tpu.vector_store %arg9[%c163, %c0_33], %37 {strides = array<i32>} : memref<184x128xbf16, #tpu.memory_space<vmem>>, vector<16x128xbf16>,
    %39 = vector.extract_strided_slice %11 {offsets = [0, 0], sizes = [16, 128], strides = [1, 1]} : vector<128x128xbf16> to vector<16x128xbf16>
    %c19 = arith.constant 19 : index
    %c0_34 = arith.constant 0 : index
    %40 = vector.load %arg9[%c19, %c0_34] : memref<184x128xbf16, #tpu.memory_space<vmem>>, vector<16x128xbf16>
    tpu.vector_store %arg9[%c19, %c0_34], %39 {strides = array<i32>} : memref<184x128xbf16, #tpu.memory_space<vmem>>, vector<16x128xbf16>,
    %41 = vector.extract_strided_slice %11 {offsets = [16, 0], sizes = [16, 128], strides = [1, 1]} : vector<128x128xbf16> to vector<16x128xbf16>
    %c37 = arith.constant 37 : index
    %c0_35 = arith.constant 0 : index
    %42 = vector.load %arg9[%c37, %c0_35] : memref<184x128xbf16, #tpu.memory_space<vmem>>, vector<16x128xbf16>
    tpu.vector_store %arg9[%c37, %c0_35], %41 {strides = array<i32>} : memref<184x128xbf16, #tpu.memory_space<vmem>>, vector<16x128xbf16>,
    %43 = vector.extract_strided_slice %11 {offsets = [32, 0], sizes = [16, 128], strides = [1, 1]} : vector<128x128xbf16> to vector<16x128xbf16>
    %c55 = arith.constant 55 : index
    %c0_36 = arith.constant 0 : index
    %44 = vector.load %arg9[%c55, %c0_36] : memref<184x128xbf16, #tpu.memory_space<vmem>>, vector<16x128xbf16>
    tpu.vector_store %arg9[%c55, %c0_36], %43 {strides = array<i32>} : memref<184x128xbf16, #tpu.memory_space<vmem>>, vector<16x128xbf16>,
    %45 = vector.extract_strided_slice %11 {offsets = [48, 0], sizes = [16, 128], strides = [1, 1]} : vector<128x128xbf16> to vector<16x128xbf16>
    %c73 = arith.constant 73 : index
    %c0_37 = arith.constant 0 : index
    %46 = vector.load %arg9[%c73, %c0_37] : memref<184x128xbf16, #tpu.memory_space<vmem>>, vector<16x128xbf16>
    tpu.vector_store %arg9[%c73, %c0_37], %45 {strides = array<i32>} : memref<184x128xbf16, #tpu.memory_space<vmem>>, vector<16x128xbf16>,
    %47 = vector.extract_strided_slice %11 {offsets = [64, 0], sizes = [16, 128], strides = [1, 1]} : vector<128x128xbf16> to vector<16x128xbf16>
    %c91 = arith.constant 91 : index
    %c0_38 = arith.constant 0 : index
    %48 = vector.load %arg9[%c91, %c0_38] : memref<184x128xbf16, #tpu.memory_space<vmem>>, vector<16x128xbf16>
    tpu.vector_store %arg9[%c91, %c0_38], %47 {strides = array<i32>} : memref<184x128xbf16, #tpu.memory_space<vmem>>, vector<16x128xbf16>,
    %49 = vector.extract_strided_slice %11 {offsets = [80, 0], sizes = [16, 128], strides = [1, 1]} : vector<128x128xbf16> to vector<16x128xbf16>
    %c109 = arith.constant 109 : index
    %c0_39 = arith.constant 0 : index
    %50 = vector.load %arg9[%c109, %c0_39] : memref<184x128xbf16, #tpu.memory_space<vmem>>, vector<16x128xbf16>
    tpu.vector_store %arg9[%c109, %c0_39], %49 {strides = array<i32>} : memref<184x128xbf16, #tpu.memory_space<vmem>>, vector<16x128xbf16>,
    %51 = vector.extract_strided_slice %11 {offsets = [96, 0], sizes = [16, 128], strides = [1, 1]} : vector<128x128xbf16> to vector<16x128xbf16>
    %c127 = arith.constant 127 : index
    %c0_40 = arith.constant 0 : index
    %52 = vector.load %arg9[%c127, %c0_40] : memref<184x128xbf16, #tpu.memory_space<vmem>>, vector<16x128xbf16>
    tpu.vector_store %arg9[%c127, %c0_40], %51 {strides = array<i32>} : memref<184x128xbf16, #tpu.memory_space<vmem>>, vector<16x128xbf16>,
    %53 = vector.extract_strided_slice %11 {offsets = [112, 0], sizes = [16, 128], strides = [1, 1]} : vector<128x128xbf16> to vector<16x128xbf16>
    %c145 = arith.constant 145 : index
    %c0_41 = arith.constant 0 : index
    %54 = vector.load %arg9[%c145, %c0_41] : memref<184x128xbf16, #tpu.memory_space<vmem>>, vector<16x128xbf16>
    tpu.vector_store %arg9[%c145, %c0_41], %53 {strides = array<i32>} : memref<184x128xbf16, #tpu.memory_space<vmem>>, vector<16x128xbf16>,
    %cst_42 = arith.constant 0.000000e+00 : f32
    %55 = vector.broadcast %cst_42 : f32 to vector<144x128xf32>
    %c0_43 = arith.constant 0 : index
    %c0_44 = arith.constant 0 : index
    %56 = vector.load %arg9[%c0_43, %c0_44] : memref<184x128xbf16, #tpu.memory_space<vmem>>, vector<144x128xbf16>
    %c0_45 = arith.constant 0 : index
    %c0_46 = arith.constant 0 : index
    %c0_47 = arith.constant 0 : index
    %57 = vector.load %arg6[%c0_45, %c0_46, %c0_47] : memref<9x128x128xbf16, #tpu.memory_space<vmem>>, vector<1x128x128xbf16>
    %58 = vector.shape_cast %57 : vector<1x128x128xbf16> to vector<128x128xbf16>
    %cst_48 = arith.constant dense<0.000000e+00> : vector<144x128xf32>
    %59 = tpu.matmul %56, %58, %cst_48 {dimension_numbers = #tpu.dot_dimension_numbers<[1], [0], [0], [1], [0, 0, 1, 1], [], []>} : vector<144x128xbf16>, vector<128x128xbf16>, vector<144x128xf32> -> vector<144x128xf32>
    %60 = arith.addf %55, %59 : vector<144x128xf32>
    %c1_49 = arith.constant 1 : index
    %c0_50 = arith.constant 0 : index
    %61 = vector.load %arg9[%c1_49, %c0_50] : memref<184x128xbf16, #tpu.memory_space<vmem>>, vector<144x128xbf16>
    %c1_51 = arith.constant 1 : index
    %c0_52 = arith.constant 0 : index
    %c0_53 = arith.constant 0 : index
    %62 = vector.load %arg6[%c1_51, %c0_52, %c0_53] : memref<9x128x128xbf16, #tpu.memory_space<vmem>>, vector<1x128x128xbf16>
    %63 = vector.shape_cast %62 : vector<1x128x128xbf16> to vector<128x128xbf16>
    %cst_54 = arith.constant dense<0.000000e+00> : vector<144x128xf32>
    %64 = tpu.matmul %61, %63, %cst_54 {dimension_numbers = #tpu.dot_dimension_numbers<[1], [0], [0], [1], [0, 0, 1, 1], [], []>} : vector<144x128xbf16>, vector<128x128xbf16>, vector<144x128xf32> -> vector<144x128xf32>
    %65 = arith.addf %60, %64 : vector<144x128xf32>
    %c2 = arith.constant 2 : index
    %c0_55 = arith.constant 0 : index
    %66 = vector.load %arg9[%c2, %c0_55] : memref<184x128xbf16, #tpu.memory_space<vmem>>, vector<144x128xbf16>
    %c2_56 = arith.constant 2 : index
    %c0_57 = arith.constant 0 : index
    %c0_58 = arith.constant 0 : index
    %67 = vector.load %arg6[%c2_56, %c0_57, %c0_58] : memref<9x128x128xbf16, #tpu.memory_space<vmem>>, vector<1x128x128xbf16>
    %68 = vector.shape_cast %67 : vector<1x128x128xbf16> to vector<128x128xbf16>
    %cst_59 = arith.constant dense<0.000000e+00> : vector<144x128xf32>
    %69 = tpu.matmul %66, %68, %cst_59 {dimension_numbers = #tpu.dot_dimension_numbers<[1], [0], [0], [1], [0, 0, 1, 1], [], []>} : vector<144x128xbf16>, vector<128x128xbf16>, vector<144x128xf32> -> vector<144x128xf32>
    %70 = arith.addf %65, %69 : vector<144x128xf32>
    %c18_60 = arith.constant 18 : index
    %c0_61 = arith.constant 0 : index
    %71 = vector.load %arg9[%c18_60, %c0_61] : memref<184x128xbf16, #tpu.memory_space<vmem>>, vector<144x128xbf16>
    %c3 = arith.constant 3 : index
    %c0_62 = arith.constant 0 : index
    %c0_63 = arith.constant 0 : index
    %72 = vector.load %arg6[%c3, %c0_62, %c0_63] : memref<9x128x128xbf16, #tpu.memory_space<vmem>>, vector<1x128x128xbf16>
    %73 = vector.shape_cast %72 : vector<1x128x128xbf16> to vector<128x128xbf16>
    %cst_64 = arith.constant dense<0.000000e+00> : vector<144x128xf32>
    %74 = tpu.matmul %71, %73, %cst_64 {dimension_numbers = #tpu.dot_dimension_numbers<[1], [0], [0], [1], [0, 0, 1, 1], [], []>} : vector<144x128xbf16>, vector<128x128xbf16>, vector<144x128xf32> -> vector<144x128xf32>
    %75 = arith.addf %70, %74 : vector<144x128xf32>
    %c19_65 = arith.constant 19 : index
    %c0_66 = arith.constant 0 : index
    %76 = vector.load %arg9[%c19_65, %c0_66] : memref<184x128xbf16, #tpu.memory_space<vmem>>, vector<144x128xbf16>
    %c4 = arith.constant 4 : index
    %c0_67 = arith.constant 0 : index
    %c0_68 = arith.constant 0 : index
    %77 = vector.load %arg6[%c4, %c0_67, %c0_68] : memref<9x128x128xbf16, #tpu.memory_space<vmem>>, vector<1x128x128xbf16>
    %78 = vector.shape_cast %77 : vector<1x128x128xbf16> to vector<128x128xbf16>
    %cst_69 = arith.constant dense<0.000000e+00> : vector<144x128xf32>
    %79 = tpu.matmul %76, %78, %cst_69 {dimension_numbers = #tpu.dot_dimension_numbers<[1], [0], [0], [1], [0, 0, 1, 1], [], []>} : vector<144x128xbf16>, vector<128x128xbf16>, vector<144x128xf32> -> vector<144x128xf32>
    %80 = arith.addf %75, %79 : vector<144x128xf32>
    %c20 = arith.constant 20 : index
    %c0_70 = arith.constant 0 : index
    %81 = vector.load %arg9[%c20, %c0_70] : memref<184x128xbf16, #tpu.memory_space<vmem>>, vector<144x128xbf16>
    %c5 = arith.constant 5 : index
    %c0_71 = arith.constant 0 : index
    %c0_72 = arith.constant 0 : index
    %82 = vector.load %arg6[%c5, %c0_71, %c0_72] : memref<9x128x128xbf16, #tpu.memory_space<vmem>>, vector<1x128x128xbf16>
    %83 = vector.shape_cast %82 : vector<1x128x128xbf16> to vector<128x128xbf16>
    %cst_73 = arith.constant dense<0.000000e+00> : vector<144x128xf32>
    %84 = tpu.matmul %81, %83, %cst_73 {dimension_numbers = #tpu.dot_dimension_numbers<[1], [0], [0], [1], [0, 0, 1, 1], [], []>} : vector<144x128xbf16>, vector<128x128xbf16>, vector<144x128xf32> -> vector<144x128xf32>
    %85 = arith.addf %80, %84 : vector<144x128xf32>
    %c36_74 = arith.constant 36 : index
    %c0_75 = arith.constant 0 : index
    %86 = vector.load %arg9[%c36_74, %c0_75] : memref<184x128xbf16, #tpu.memory_space<vmem>>, vector<144x128xbf16>
    %c6 = arith.constant 6 : index
    %c0_76 = arith.constant 0 : index
    %c0_77 = arith.constant 0 : index
    %87 = vector.load %arg6[%c6, %c0_76, %c0_77] : memref<9x128x128xbf16, #tpu.memory_space<vmem>>, vector<1x128x128xbf16>
    %88 = vector.shape_cast %87 : vector<1x128x128xbf16> to vector<128x128xbf16>
    %cst_78 = arith.constant dense<0.000000e+00> : vector<144x128xf32>
    %89 = tpu.matmul %86, %88, %cst_78 {dimension_numbers = #tpu.dot_dimension_numbers<[1], [0], [0], [1], [0, 0, 1, 1], [], []>} : vector<144x128xbf16>, vector<128x128xbf16>, vector<144x128xf32> -> vector<144x128xf32>
    %90 = arith.addf %85, %89 : vector<144x128xf32>
    %c37_79 = arith.constant 37 : index
    %c0_80 = arith.constant 0 : index
    %91 = vector.load %arg9[%c37_79, %c0_80] : memref<184x128xbf16, #tpu.memory_space<vmem>>, vector<144x128xbf16>
    %c7 = arith.constant 7 : index
    %c0_81 = arith.constant 0 : index
    %c0_82 = arith.constant 0 : index
    %92 = vector.load %arg6[%c7, %c0_81, %c0_82] : memref<9x128x128xbf16, #tpu.memory_space<vmem>>, vector<1x128x128xbf16>
    %93 = vector.shape_cast %92 : vector<1x128x128xbf16> to vector<128x128xbf16>
    %cst_83 = arith.constant dense<0.000000e+00> : vector<144x128xf32>
    %94 = tpu.matmul %91, %93, %cst_83 {dimension_numbers = #tpu.dot_dimension_numbers<[1], [0], [0], [1], [0, 0, 1, 1], [], []>} : vector<144x128xbf16>, vector<128x128xbf16>, vector<144x128xf32> -> vector<144x128xf32>
    %95 = arith.addf %90, %94 : vector<144x128xf32>
    %c38 = arith.constant 38 : index
    %c0_84 = arith.constant 0 : index
    %96 = vector.load %arg9[%c38, %c0_84] : memref<184x128xbf16, #tpu.memory_space<vmem>>, vector<144x128xbf16>
    %c8 = arith.constant 8 : index
    %c0_85 = arith.constant 0 : index
    %c0_86 = arith.constant 0 : index
    %97 = vector.load %arg6[%c8, %c0_85, %c0_86] : memref<9x128x128xbf16, #tpu.memory_space<vmem>>, vector<1x128x128xbf16>
    %98 = vector.shape_cast %97 : vector<1x128x128xbf16> to vector<128x128xbf16>
    %cst_87 = arith.constant dense<0.000000e+00> : vector<144x128xf32>
    %99 = tpu.matmul %96, %98, %cst_87 {dimension_numbers = #tpu.dot_dimension_numbers<[1], [0], [0], [1], [0, 0, 1, 1], [], []>} : vector<144x128xbf16>, vector<128x128xbf16>, vector<144x128xf32> -> vector<144x128xf32>
    %100 = arith.addf %95, %99 : vector<144x128xf32>
    %cst_88 = arith.constant 0.000000e+00 : f32
    %101 = vector.broadcast %cst_88 : f32 to vector<1x128xf32>
    %cst_89 = arith.constant 0.000000e+00 : f32
    %102 = vector.broadcast %cst_89 : f32 to vector<1x128xf32>
    %103 = vector.extract_strided_slice %100 {offsets = [0, 0], sizes = [16, 128], strides = [1, 1]} : vector<144x128xf32> to vector<16x128xf32>
    %104 = arith.truncf %103 : vector<16x128xf32> to vector<16x128xbf16>
    %c0_90 = arith.constant 0 : index
    %c0_91 = arith.constant 0 : index
    %c0_92 = arith.constant 0 : index
    %105 = vector.load %arg7[%c0_90, %c0_91, %c0_92] : memref<1x128x128xbf16, #tpu.memory_space<vmem>>, vector<1x16x128xbf16>
    %106 = vector.shape_cast %105 : vector<1x16x128xbf16> to vector<16x128xbf16>
    %107 = vector.shape_cast %104 : vector<16x128xbf16> to vector<1x16x128xbf16>
    tpu.vector_store %arg7[%c0_90, %c0_91, %c0_92], %107 {strides = array<i32>} : memref<1x128x128xbf16, #tpu.memory_space<vmem>>, vector<1x16x128xbf16>,
    %cst_93 = arith.constant dense<0.000000e+00> : vector<128xf32>
    %108 = vector.multi_reduction <add>, %103, %cst_93 [0] : vector<16x128xf32> to vector<128xf32>
    %109 = vector.shape_cast %108 : vector<128xf32> to vector<1x128xf32>
    %110 = arith.addf %101, %109 : vector<1x128xf32>
    %111 = arith.mulf %103, %103 : vector<16x128xf32>
    %cst_94 = arith.constant dense<0.000000e+00> : vector<128xf32>
    %112 = vector.multi_reduction <add>, %111, %cst_94 [0] : vector<16x128xf32> to vector<128xf32>
    %113 = vector.shape_cast %112 : vector<128xf32> to vector<1x128xf32>
    %114 = arith.addf %102, %113 : vector<1x128xf32>
    %115 = vector.extract_strided_slice %100 {offsets = [18, 0], sizes = [16, 128], strides = [1, 1]} : vector<144x128xf32> to vector<16x128xf32>
    %116 = arith.truncf %115 : vector<16x128xf32> to vector<16x128xbf16>
    %c0_95 = arith.constant 0 : index
    %c16 = arith.constant 16 : index
    %c0_96 = arith.constant 0 : index
    %117 = vector.load %arg7[%c0_95, %c16, %c0_96] : memref<1x128x128xbf16, #tpu.memory_space<vmem>>, vector<1x16x128xbf16>
    %118 = vector.shape_cast %117 : vector<1x16x128xbf16> to vector<16x128xbf16>
    %119 = vector.shape_cast %116 : vector<16x128xbf16> to vector<1x16x128xbf16>
    tpu.vector_store %arg7[%c0_95, %c16, %c0_96], %119 {strides = array<i32>} : memref<1x128x128xbf16, #tpu.memory_space<vmem>>, vector<1x16x128xbf16>,
    %cst_97 = arith.constant dense<0.000000e+00> : vector<128xf32>
    %120 = vector.multi_reduction <add>, %115, %cst_97 [0] : vector<16x128xf32> to vector<128xf32>
    %121 = vector.shape_cast %120 : vector<128xf32> to vector<1x128xf32>
    %122 = arith.addf %110, %121 : vector<1x128xf32>
    %123 = arith.mulf %115, %115 : vector<16x128xf32>
    %cst_98 = arith.constant dense<0.000000e+00> : vector<128xf32>
    %124 = vector.multi_reduction <add>, %123, %cst_98 [0] : vector<16x128xf32> to vector<128xf32>
    %125 = vector.shape_cast %124 : vector<128xf32> to vector<1x128xf32>
    %126 = arith.addf %114, %125 : vector<1x128xf32>
    %127 = vector.extract_strided_slice %100 {offsets = [36, 0], sizes = [16, 128], strides = [1, 1]} : vector<144x128xf32> to vector<16x128xf32>
    %128 = arith.truncf %127 : vector<16x128xf32> to vector<16x128xbf16>
    %c0_99 = arith.constant 0 : index
    %c32 = arith.constant 32 : index
    %c0_100 = arith.constant 0 : index
    %129 = vector.load %arg7[%c0_99, %c32, %c0_100] : memref<1x128x128xbf16, #tpu.memory_space<vmem>>, vector<1x16x128xbf16>
    %130 = vector.shape_cast %129 : vector<1x16x128xbf16> to vector<16x128xbf16>
    %131 = vector.shape_cast %128 : vector<16x128xbf16> to vector<1x16x128xbf16>
    tpu.vector_store %arg7[%c0_99, %c32, %c0_100], %131 {strides = array<i32>} : memref<1x128x128xbf16, #tpu.memory_space<vmem>>, vector<1x16x128xbf16>,
    %cst_101 = arith.constant dense<0.000000e+00> : vector<128xf32>
    %132 = vector.multi_reduction <add>, %127, %cst_101 [0] : vector<16x128xf32> to vector<128xf32>
    %133 = vector.shape_cast %132 : vector<128xf32> to vector<1x128xf32>
    %134 = arith.addf %122, %133 : vector<1x128xf32>
    %135 = arith.mulf %127, %127 : vector<16x128xf32>
    %cst_102 = arith.constant dense<0.000000e+00> : vector<128xf32>
    %136 = vector.multi_reduction <add>, %135, %cst_102 [0] : vector<16x128xf32> to vector<128xf32>
    %137 = vector.shape_cast %136 : vector<128xf32> to vector<1x128xf32>
    %138 = arith.addf %126, %137 : vector<1x128xf32>
    %139 = vector.extract_strided_slice %100 {offsets = [54, 0], sizes = [16, 128], strides = [1, 1]} : vector<144x128xf32> to vector<16x128xf32>
    %140 = arith.truncf %139 : vector<16x128xf32> to vector<16x128xbf16>
    %c0_103 = arith.constant 0 : index
    %c48 = arith.constant 48 : index
    %c0_104 = arith.constant 0 : index
    %141 = vector.load %arg7[%c0_103, %c48, %c0_104] : memref<1x128x128xbf16, #tpu.memory_space<vmem>>, vector<1x16x128xbf16>
    %142 = vector.shape_cast %141 : vector<1x16x128xbf16> to vector<16x128xbf16>
    %143 = vector.shape_cast %140 : vector<16x128xbf16> to vector<1x16x128xbf16>
    tpu.vector_store %arg7[%c0_103, %c48, %c0_104], %143 {strides = array<i32>} : memref<1x128x128xbf16, #tpu.memory_space<vmem>>, vector<1x16x128xbf16>,
    %cst_105 = arith.constant dense<0.000000e+00> : vector<128xf32>
    %144 = vector.multi_reduction <add>, %139, %cst_105 [0] : vector<16x128xf32> to vector<128xf32>
    %145 = vector.shape_cast %144 : vector<128xf32> to vector<1x128xf32>
    %146 = arith.addf %134, %145 : vector<1x128xf32>
    %147 = arith.mulf %139, %139 : vector<16x128xf32>
    %cst_106 = arith.constant dense<0.000000e+00> : vector<128xf32>
    %148 = vector.multi_reduction <add>, %147, %cst_106 [0] : vector<16x128xf32> to vector<128xf32>
    %149 = vector.shape_cast %148 : vector<128xf32> to vector<1x128xf32>
    %150 = arith.addf %138, %149 : vector<1x128xf32>
    %151 = vector.extract_strided_slice %100 {offsets = [72, 0], sizes = [16, 128], strides = [1, 1]} : vector<144x128xf32> to vector<16x128xf32>
    %152 = arith.truncf %151 : vector<16x128xf32> to vector<16x128xbf16>
    %c0_107 = arith.constant 0 : index
    %c64 = arith.constant 64 : index
    %c0_108 = arith.constant 0 : index
    %153 = vector.load %arg7[%c0_107, %c64, %c0_108] : memref<1x128x128xbf16, #tpu.memory_space<vmem>>, vector<1x16x128xbf16>
    %154 = vector.shape_cast %153 : vector<1x16x128xbf16> to vector<16x128xbf16>
    %155 = vector.shape_cast %152 : vector<16x128xbf16> to vector<1x16x128xbf16>
    tpu.vector_store %arg7[%c0_107, %c64, %c0_108], %155 {strides = array<i32>} : memref<1x128x128xbf16, #tpu.memory_space<vmem>>, vector<1x16x128xbf16>,
    %cst_109 = arith.constant dense<0.000000e+00> : vector<128xf32>
    %156 = vector.multi_reduction <add>, %151, %cst_109 [0] : vector<16x128xf32> to vector<128xf32>
    %157 = vector.shape_cast %156 : vector<128xf32> to vector<1x128xf32>
    %158 = arith.addf %146, %157 : vector<1x128xf32>
    %159 = arith.mulf %151, %151 : vector<16x128xf32>
    %cst_110 = arith.constant dense<0.000000e+00> : vector<128xf32>
    %160 = vector.multi_reduction <add>, %159, %cst_110 [0] : vector<16x128xf32> to vector<128xf32>
    %161 = vector.shape_cast %160 : vector<128xf32> to vector<1x128xf32>
    %162 = arith.addf %150, %161 : vector<1x128xf32>
    %163 = vector.extract_strided_slice %100 {offsets = [90, 0], sizes = [16, 128], strides = [1, 1]} : vector<144x128xf32> to vector<16x128xf32>
    %164 = arith.truncf %163 : vector<16x128xf32> to vector<16x128xbf16>
    %c0_111 = arith.constant 0 : index
    %c80 = arith.constant 80 : index
    %c0_112 = arith.constant 0 : index
    %165 = vector.load %arg7[%c0_111, %c80, %c0_112] : memref<1x128x128xbf16, #tpu.memory_space<vmem>>, vector<1x16x128xbf16>
    %166 = vector.shape_cast %165 : vector<1x16x128xbf16> to vector<16x128xbf16>
    %167 = vector.shape_cast %164 : vector<16x128xbf16> to vector<1x16x128xbf16>
    tpu.vector_store %arg7[%c0_111, %c80, %c0_112], %167 {strides = array<i32>} : memref<1x128x128xbf16, #tpu.memory_space<vmem>>, vector<1x16x128xbf16>,
    %cst_113 = arith.constant dense<0.000000e+00> : vector<128xf32>
    %168 = vector.multi_reduction <add>, %163, %cst_113 [0] : vector<16x128xf32> to vector<128xf32>
    %169 = vector.shape_cast %168 : vector<128xf32> to vector<1x128xf32>
    %170 = arith.addf %158, %169 : vector<1x128xf32>
    %171 = arith.mulf %163, %163 : vector<16x128xf32>
    %cst_114 = arith.constant dense<0.000000e+00> : vector<128xf32>
    %172 = vector.multi_reduction <add>, %171, %cst_114 [0] : vector<16x128xf32> to vector<128xf32>
    %173 = vector.shape_cast %172 : vector<128xf32> to vector<1x128xf32>
    %174 = arith.addf %162, %173 : vector<1x128xf32>
    %175 = vector.extract_strided_slice %100 {offsets = [108, 0], sizes = [16, 128], strides = [1, 1]} : vector<144x128xf32> to vector<16x128xf32>
    %176 = arith.truncf %175 : vector<16x128xf32> to vector<16x128xbf16>
    %c0_115 = arith.constant 0 : index
    %c96 = arith.constant 96 : index
    %c0_116 = arith.constant 0 : index
    %177 = vector.load %arg7[%c0_115, %c96, %c0_116] : memref<1x128x128xbf16, #tpu.memory_space<vmem>>, vector<1x16x128xbf16>
    %178 = vector.shape_cast %177 : vector<1x16x128xbf16> to vector<16x128xbf16>
    %179 = vector.shape_cast %176 : vector<16x128xbf16> to vector<1x16x128xbf16>
    tpu.vector_store %arg7[%c0_115, %c96, %c0_116], %179 {strides = array<i32>} : memref<1x128x128xbf16, #tpu.memory_space<vmem>>, vector<1x16x128xbf16>,
    %cst_117 = arith.constant dense<0.000000e+00> : vector<128xf32>
    %180 = vector.multi_reduction <add>, %175, %cst_117 [0] : vector<16x128xf32> to vector<128xf32>
    %181 = vector.shape_cast %180 : vector<128xf32> to vector<1x128xf32>
    %182 = arith.addf %170, %181 : vector<1x128xf32>
    %183 = arith.mulf %175, %175 : vector<16x128xf32>
    %cst_118 = arith.constant dense<0.000000e+00> : vector<128xf32>
    %184 = vector.multi_reduction <add>, %183, %cst_118 [0] : vector<16x128xf32> to vector<128xf32>
    %185 = vector.shape_cast %184 : vector<128xf32> to vector<1x128xf32>
    %186 = arith.addf %174, %185 : vector<1x128xf32>
    %187 = vector.extract_strided_slice %100 {offsets = [126, 0], sizes = [16, 128], strides = [1, 1]} : vector<144x128xf32> to vector<16x128xf32>
    %188 = arith.truncf %187 : vector<16x128xf32> to vector<16x128xbf16>
    %c0_119 = arith.constant 0 : index
    %c112 = arith.constant 112 : index
    %c0_120 = arith.constant 0 : index
    %189 = vector.load %arg7[%c0_119, %c112, %c0_120] : memref<1x128x128xbf16, #tpu.memory_space<vmem>>, vector<1x16x128xbf16>
    %190 = vector.shape_cast %189 : vector<1x16x128xbf16> to vector<16x128xbf16>
    %191 = vector.shape_cast %188 : vector<16x128xbf16> to vector<1x16x128xbf16>
    tpu.vector_store %arg7[%c0_119, %c112, %c0_120], %191 {strides = array<i32>} : memref<1x128x128xbf16, #tpu.memory_space<vmem>>, vector<1x16x128xbf16>,
    %cst_121 = arith.constant dense<0.000000e+00> : vector<128xf32>
    %192 = vector.multi_reduction <add>, %187, %cst_121 [0] : vector<16x128xf32> to vector<128xf32>
    %193 = vector.shape_cast %192 : vector<128xf32> to vector<1x128xf32>
    %194 = arith.addf %182, %193 : vector<1x128xf32>
    %195 = arith.mulf %187, %187 : vector<16x128xf32>
    %cst_122 = arith.constant dense<0.000000e+00> : vector<128xf32>
    %196 = vector.multi_reduction <add>, %195, %cst_122 [0] : vector<16x128xf32> to vector<128xf32>
    %197 = vector.shape_cast %196 : vector<128xf32> to vector<1x128xf32>
    %198 = arith.addf %186, %197 : vector<1x128xf32>
    %c0_123 = arith.constant 0 : index
    %c0_124 = arith.constant 0 : index
    %c0_125 = arith.constant 0 : index
    %c0_126 = arith.constant 0 : index
    %199 = vector.load %arg8[%c0_123, %c0_124, %c0_125, %c0_126] : memref<1x1x2x128xf32, #tpu.memory_space<vmem>>, vector<1x1x1x128xf32>
    %200 = vector.shape_cast %199 : vector<1x1x1x128xf32> to vector<1x128xf32>
    %201 = vector.shape_cast %194 : vector<1x128xf32> to vector<1x1x1x128xf32>
    tpu.vector_store %arg8[%c0_123, %c0_124, %c0_125, %c0_126], %201 {strides = array<i32>} : memref<1x1x2x128xf32, #tpu.memory_space<vmem>>, vector<1x1x1x128xf32>,
    %c0_127 = arith.constant 0 : index
    %c0_128 = arith.constant 0 : index
    %c1_129 = arith.constant 1 : index
    %c0_130 = arith.constant 0 : index
    %202 = vector.load %arg8[%c0_127, %c0_128, %c1_129, %c0_130] : memref<1x1x2x128xf32, #tpu.memory_space<vmem>>, vector<1x1x1x128xf32>
    %203 = vector.shape_cast %202 : vector<1x1x1x128xf32> to vector<1x128xf32>
    %204 = vector.shape_cast %198 : vector<1x128xf32> to vector<1x1x1x128xf32>
    tpu.vector_store %arg8[%c0_127, %c0_128, %c1_129, %c0_130], %204 {strides = array<i32>} : memref<1x1x2x128xf32, #tpu.memory_space<vmem>>, vector<1x1x1x128xf32>,
    return
  }
  func.func @transform_0(%arg0: i32, %arg1: i32) -> (i32, i32, i32) {
    %c0_i32 = arith.constant 0 : i32
    %c0_i32_0 = arith.constant 0 : i32
    return %arg0, %arg1, %c0_i32 : i32, i32, i32
  }
  func.func @transform_1(%arg0: i32, %arg1: i32) -> (i32, i32, i32, i32) {
    %c0_i32 = arith.constant 0 : i32
    %c0_i32_0 = arith.constant 0 : i32
    %c0_i32_1 = arith.constant 0 : i32
    return %arg0, %arg1, %c0_i32, %c0_i32_0 : i32, i32, i32, i32
  }
  func.func @transform_2(%arg0: i32, %arg1: i32) -> (i32, i32) {
    %c0_i32 = arith.constant 0 : i32
    %c0_i32_0 = arith.constant 0 : i32
    %c0_i32_1 = arith.constant 0 : i32
    return %c0_i32, %c0_i32_0 : i32, i32
  }
  func.func @transform_3(%arg0: i32, %arg1: i32) -> (i32, i32) {
    %c0_i32 = arith.constant 0 : i32
    %c0_i32_0 = arith.constant 0 : i32
    %c0_i32_1 = arith.constant 0 : i32
    return %c0_i32, %c0_i32_0 : i32, i32
  }
  func.func @transform_4(%arg0: i32, %arg1: i32) -> (i32, i32, i32) {
    %c0_i32 = arith.constant 0 : i32
    %c0_i32_0 = arith.constant 0 : i32
    %c0_i32_1 = arith.constant 0 : i32
    %c0_i32_2 = arith.constant 0 : i32
    return %c0_i32, %c0_i32_0, %c0_i32_1 : i32, i32, i32
  }
  func.func @transform_5(%arg0: i32, %arg1: i32) -> (i32, i32, i32) {
    %c0_i32 = arith.constant 0 : i32
    %c0_i32_0 = arith.constant 0 : i32
    return %arg0, %arg1, %c0_i32 : i32, i32, i32
  }
  func.func @transform_6(%arg0: i32, %arg1: i32) -> (i32, i32, i32, i32) {
    %c0_i32 = arith.constant 0 : i32
    %c0_i32_0 = arith.constant 0 : i32
    %c0_i32_1 = arith.constant 0 : i32
    return %arg0, %arg1, %c0_i32, %c0_i32_0 : i32, i32, i32, i32
  }
}

module attributes {stable_mosaic.version = 11 : i64} {
  func.func @_bn_relu_kernel(%arg0: i32, %arg1: i32, %arg2: memref<1x128x128xbf16, #tpu.memory_space<vmem>>, %arg3: memref<1x128xf32, #tpu.memory_space<vmem>>, %arg4: memref<1x128xf32, #tpu.memory_space<vmem>>, %arg5: memref<1x128x8xf32, #tpu.memory_space<vmem>>) attributes {dimension_semantics = [#tpu.dimension_semantics<parallel>, #tpu.dimension_semantics<parallel>], iteration_bounds = array<i64: 2, 2>, scalar_prefetch = 0 : i64, scratch_operands = 0 : i64, tpu.core_type = #tpu.core_type<tc>, window_params = [{transform_indices = @transform_0, window_bounds = array<i64: 1, 128, 128>}, {pipeline_mode = #tpu.pipeline_mode<synchronous>, transform_indices = @transform_1, window_bounds = array<i64: 1, 128>}, {pipeline_mode = #tpu.pipeline_mode<synchronous>, transform_indices = @transform_2, window_bounds = array<i64: 1, 128>}, {transform_indices = @transform_3, window_bounds = array<i64: 1, 128, 8>}]} {
    %c0 = arith.constant 0 : index
    %c0_0 = arith.constant 0 : index
    %c0_1 = arith.constant 0 : index
    %0 = vector.load %arg2[%c0, %c0_0, %c0_1] : memref<1x128x128xbf16, #tpu.memory_space<vmem>>, vector<1x128x128xbf16>
    %1 = vector.shape_cast %0 : vector<1x128x128xbf16> to vector<128x128xbf16>
    %2 = arith.extf %1 : vector<128x128xbf16> to vector<128x128xf32>
    %c0_2 = arith.constant 0 : index
    %c0_3 = arith.constant 0 : index
    %3 = vector.load %arg3[%c0_2, %c0_3] : memref<1x128xf32, #tpu.memory_space<vmem>>, vector<1x128xf32>
    %4 = vector.broadcast %3 : vector<1x128xf32> to vector<128x128xf32>
    %5 = arith.mulf %2, %4 : vector<128x128xf32>
    %c0_4 = arith.constant 0 : index
    %c0_5 = arith.constant 0 : index
    %6 = vector.load %arg4[%c0_4, %c0_5] : memref<1x128xf32, #tpu.memory_space<vmem>>, vector<1x128xf32>
    %7 = vector.broadcast %6 : vector<1x128xf32> to vector<128x128xf32>
    %8 = arith.addf %5, %7 : vector<128x128xf32>
    %cst = arith.constant 0.000000e+00 : f32
    %9 = vector.broadcast %cst : f32 to vector<128x128xf32>
    %10 = arith.maximumf %8, %9 : vector<128x128xf32>
    %11 = vector.extract_strided_slice %10 {offsets = [0, 0], sizes = [128, 8], strides = [1, 1]} : vector<128x128xf32> to vector<128x8xf32>
    %c0_6 = arith.constant 0 : index
    %c0_7 = arith.constant 0 : index
    %c0_8 = arith.constant 0 : index
    %12 = vector.load %arg5[%c0_6, %c0_7, %c0_8] : memref<1x128x8xf32, #tpu.memory_space<vmem>>, vector<1x128x8xf32>
    %13 = vector.shape_cast %12 : vector<1x128x8xf32> to vector<128x8xf32>
    %14 = vector.shape_cast %11 : vector<128x8xf32> to vector<1x128x8xf32>
    tpu.vector_store %arg5[%c0_6, %c0_7, %c0_8], %14 {strides = array<i32>} : memref<1x128x8xf32, #tpu.memory_space<vmem>>, vector<1x128x8xf32>,
    return
  }
  func.func @transform_0(%arg0: i32, %arg1: i32) -> (i32, i32, i32) {
    %c0_i32 = arith.constant 0 : i32
    %c0_i32_0 = arith.constant 0 : i32
    return %arg0, %arg1, %c0_i32 : i32, i32, i32
  }
  func.func @transform_1(%arg0: i32, %arg1: i32) -> (i32, i32) {
    %c0_i32 = arith.constant 0 : i32
    %c0_i32_0 = arith.constant 0 : i32
    %c0_i32_1 = arith.constant 0 : i32
    return %c0_i32, %c0_i32_0 : i32, i32
  }
  func.func @transform_2(%arg0: i32, %arg1: i32) -> (i32, i32) {
    %c0_i32 = arith.constant 0 : i32
    %c0_i32_0 = arith.constant 0 : i32
    %c0_i32_1 = arith.constant 0 : i32
    return %c0_i32, %c0_i32_0 : i32, i32
  }
  func.func @transform_3(%arg0: i32, %arg1: i32) -> (i32, i32, i32) {
    %c0_i32 = arith.constant 0 : i32
    %c0_i32_0 = arith.constant 0 : i32
    return %arg0, %arg1, %c0_i32 : i32, i32, i32
  }
}

</mosaic_0001>

<llo_original>
// kernel: double_conv.3
$region0: #{double_conv.3}
  #allocation0 [shape = 'u32[]', space=smem, size = 0x4, offset = 0x4, fixed_abs, tag = 'smem constant byte address 0x4 - core index']
  #allocation1 [shape = 'u32[144,128]{1,0:T(1,128)}', space=vmem, size = 0x12000, scoped, tag = 'internal scratch']
  %s0 = inlined_call_operand.vmem [shape: f32[2,256,36], index: 0, kind: input, shape index: {}]
  %s1 = inlined_call_operand.vmem [shape: f32[36,128], index: 1, kind: input, shape index: {}]
  %s2 = inlined_call_operand.vmem [shape: bf16[2,256,128], index: 2, kind: output, shape index: {0}]
  %s3 = inlined_call_operand.vmem [shape: f32[2,2,2,128], index: 3, kind: output, shape index: {1}]
  %4 = xla_tuple %s2, %s3
  %s5 = sld [smem:[#allocation0]]
  $region49: #{double_conv.3} parent=0
    _
  %s7 = ssub.s32 1, %s5
  %s8 = scalar_select 0, %s7, %s5
  loop: start=0, step=1, limit=6
  $region2: #{double_conv.3} parent=0 // loop_pre_header
    _
  $region3: #{double_conv.3} parent=0 // loop_header
    %s10 = sphi 0, %s14
    %p11 = scmp.ge.s32.totalorder %s10, 6
    %s17 = sphi 0, %s29
    %s18 = sphi 0, %s25
    %s19 = sphi 0, %s17
    %s20 = sphi 0, %s18
    %s21 = sphi 0, %s19
    %s22 = sphi 0, %s20
    %s34 = sphi 0, %s36
    %s37 = sphi 0, %s34
    %s38 = sphi 0, %s37
    %s54 = sphi 0, %s38
    %s58 = sphi 0, %s58
    %s60 = sphi 0, %s58
    %s61 = sphi 0, %s60
    %s75 = sphi 0, %s61
    %s83 = sphi 0, %s85
    %s86 = sphi 0, %s83
    %s87 = sphi 0, %s86
    %s103 = sphi 0, %s87
    %s111 = sphi 0, %s113
    %s114 = sphi 0, %s111
    %s115 = sphi 0, %s114
    %s131 = sphi 0, %s115
  $region4: #{double_conv.3} parent=0 // loop_header_branch
    %13 = sbr.rel (%p11) target = $region8
  $region5: #{double_conv.3} parent=0 // loop_body
    %s15 = ssub.s32 %s10, 1
    %s16 = ssub.s32 %s10, 2
    %s23 = sadd.s32 1, %s18
    %p24 = scmp.ge.s32.totalorder %s23, 2
    %s25 = scalar_select %p24, 0, %s23
    %s26 = sadd.s32 1, %s17
    %s27 = scalar_select %p24, %s26, %s17
    %p28 = scmp.ge.s32.totalorder %s27, 2
    %s29 = scalar_select %p28, 0, %s27
    %s30 = ssub.s32 %s17, %s29
    %s31 = ssub.s32 %s18, %s25
    %s32 = sor.u32 %s30, %s31
    %p33 = scmp.eq.s32.totalorder %s32, 0
    %s35 = sadd.s32 %s34, 1
    %s36 = scalar_select %p33, %s34, %s35
    %p39 = pneg %p33
    %p40 = scmp.eq.s32.totalorder %s10, 3
    %p41 = por %p39, %p40
    %p42 = scmp.ne.s32.totalorder %s34, %s37
    %p43 = scmp.eq.s32.totalorder %s10, 0
    %p44 = por %p42, %p43
    %p45 = scmp.ne.s32.totalorder %s34, %s37
    %p46 = scmp.eq.s32.totalorder %s15, 3
    %p47 = por %p45, %p46
    %p48 = scmp.ne.s32.totalorder %s37, %s38
    %p49 = scmp.eq.s32.totalorder %s15, 0
    %p50 = por %p48, %p49
    %p51 = scmp.ne.s32.totalorder %s37, %s38
    %p52 = scmp.eq.s32.totalorder %s16, 3
    %p53 = por %p51, %p52
    %p55 = scmp.ne.s32.totalorder %s38, %s54
    %p56 = scmp.eq.s32.totalorder %s16, 0
    %p57 = por %p55, %p56
    %s59 = sadd.s32 %s58, 1
    %p62 = scmp.eq.s32.totalorder %s10, 3
    %p63 = scmp.ne.s32.totalorder %s58, %s60
    %p64 = scmp.eq.s32.totalorder %s10, 0
    %p65 = por %p63, %p64
    %p66 = scmp.ne.s32.totalorder %s58, %s60
    %p67 = scmp.eq.s32.totalorder %s15, 3
    %p68 = por %p66, %p67
    %p69 = scmp.ne.s32.totalorder %s60, %s61
    %p70 = scmp.eq.s32.totalorder %s15, 0
    %p71 = por %p69, %p70
    %p72 = scmp.ne.s32.totalorder %s60, %s61
    %p73 = scmp.eq.s32.totalorder %s16, 3
    %p74 = por %p72, %p73
    %p76 = scmp.ne.s32.totalorder %s61, %s75
    %p77 = scmp.eq.s32.totalorder %s16, 0
    %p78 = por %p76, %p77
    %s79 = ssub.s32 %s17, %s29
    %s80 = ssub.s32 %s18, %s25
    %s81 = sor.u32 %s79, %s80
    %p82 = scmp.eq.s32.totalorder %s81, 0
    %s84 = sadd.s32 %s83, 1
    %s85 = scalar_select %p82, %s83, %s84
    %p88 = pneg %p82
    %p89 = scmp.eq.s32.totalorder %s10, 3
    %p90 = por %p88, %p89
    %p91 = scmp.ne.s32.totalorder %s83, %s86
    %p92 = scmp.eq.s32.totalorder %s10, 0
    %p93 = por %p91, %p92
    %p94 = scmp.ne.s32.totalorder %s83, %s86
    %p95 = scmp.eq.s32.totalorder %s15, 3
    %p96 = por %p94, %p95
    %p97 = scmp.ne.s32.totalorder %s86, %s87
    %p98 = scmp.eq.s32.totalorder %s15, 0
    %p99 = por %p97, %p98
    %p100 = scmp.ne.s32.totalorder %s86, %s87
    %p101 = scmp.eq.s32.totalorder %s16, 3
    %p102 = por %p100, %p101
    %p104 = scmp.ne.s32.totalorder %s87, %s103
    %p105 = scmp.eq.s32.totalorder %s16, 0
    %p106 = por %p104, %p105
    %s107 = ssub.s32 %s17, %s29
    %s108 = ssub.s32 %s18, %s25
    %s109 = sor.u32 %s107, %s108
    %p110 = scmp.eq.s32.totalorder %s109, 0
    %s112 = sadd.s32 %s111, 1
    %s113 = scalar_select %p110, %s111, %s112
    %p116 = pneg %p110
    %p117 = scmp.eq.s32.totalorder %s10, 3
    %p118 = por %p116, %p117
    %p119 = scmp.ne.s32.totalorder %s111, %s114
    %p120 = scmp.eq.s32.totalorder %s10, 0
    %p121 = por %p119, %p120
    %p122 = scmp.ne.s32.totalorder %s111, %s114
    %p123 = scmp.eq.s32.totalorder %s15, 3
    %p124 = por %p122, %p123
    %p125 = scmp.ne.s32.totalorder %s114, %s115
    %p126 = scmp.eq.s32.totalorder %s15, 0
    %p127 = por %p125, %p126
    %p128 = scmp.ne.s32.totalorder %s114, %s115
    %p129 = scmp.eq.s32.totalorder %s16, 3
    %p130 = por %p128, %p129
    %p132 = scmp.ne.s32.totalorder %s115, %s131
    %p133 = scmp.eq.s32.totalorder %s16, 0
    %p134 = por %p132, %p133
    %p135 = scmp.le.s32.totalorder 1, %s10
    %p136 = scmp.lt.s32.totalorder %s10, 5
    %p137 = pnand %p135, %p136
    %p138 = pneg %p137
    // Predicated region
    $region9: #{double_conv.3} parent=5 // pred_check
      _
    $region10: #{double_conv.3} parent=5 // pred_check_branch
      %140 = sbr.rel (%p137) target = $region12
    $region11: #{double_conv.3} parent=5 // pred_region
      %s141 = ssub.s32 %s10, 1
      // Predicated region
      $region13: #{double_conv.3} parent=11 // pred_check
        %p142 = pneg %p71
      $region14: #{double_conv.3} parent=11 // pred_check_branch
        %144 = sbr.rel (%p142) target = $region16
      $region15: #{double_conv.3} parent=11 // pred_region
        _
      $region16: #{double_conv.3} parent=11 // pred_fallthru
        _
    $region12: #{double_conv.3} parent=5 // pred_fallthru
      _
    %p145 = scmp.lt.s32.totalorder %s10, 4
    // Predicated region
    $region17: #{double_conv.3} parent=5 // pred_check
      %p146 = pneg %p145
    $region18: #{double_conv.3} parent=5 // pred_check_branch
      %148 = sbr.rel (%p146) target = $region20
    $region19: #{double_conv.3} parent=5 // pred_region
      // Predicated region
      $region21: #{double_conv.3} parent=19 // pred_check
        %p149 = pneg %p44
      $region22: #{double_conv.3} parent=19 // pred_check_branch
        %151 = sbr.rel (%p149) target = $region24
      $region23: #{double_conv.3} parent=19 // pred_region
        %s152 = smul.u32 16, %s18
        %p153 = scmp.lt.s32.totalorder %s17, 1
        %s154 = scalar_select %p153, %s17, 1
        %p155 = scmp.lt.s32.totalorder %s152, 31
        %s156 = scalar_select %p155, %s152, 31
        %s157 = smul.addr %s154, 32
        %s158 = sadd.s32 %s156, %s157
        %s159 = smul.addr %s158, 8
        %s160 = scalar_lea.vmem %s0, %s159
        %s161 = smul.u32 16, %s18
      $region24: #{double_conv.3} parent=19 // pred_fallthru
        _
    $region20: #{double_conv.3} parent=5 // pred_fallthru
      _
    %p162 = scmp.le.s32.totalorder 1, %s10
    %p163 = scmp.lt.s32.totalorder %s10, 5
    %p164 = pnand %p162, %p163
    %p165 = pneg %p164
    // Predicated region
    $region25: #{double_conv.3} parent=5 // pred_check
      _
    $region26: #{double_conv.3} parent=5 // pred_check_branch
      %167 = sbr.rel (%p164) target = $region28
    $region27: #{double_conv.3} parent=5 // pred_region
      %s168 = ssub.s32 %s10, 1
      %s169 = smul.u32 16, %s20
      %p170 = scmp.lt.s32.totalorder %s19, 1
      %s171 = scalar_select %p170, %s19, 1
      %p172 = scmp.lt.s32.totalorder %s169, 31
      %s173 = scalar_select %p172, %s169, 31
      %s174 = smul.addr %s171, 32
      %s175 = sadd.s32 %s173, %s174
      %s176 = smul.addr %s175, 8
      %s177 = scalar_lea.vmem %s0, %s176
      %p178 = pneg %p50
      %p179 = pneg %p47
      %p180 = pneg %p71
      %p181 = pneg %p68
      %p182 = pneg %p99
      %p183 = pneg %p96
      %s184 = smul.u32 16, %s20
      %p185 = scmp.lt.s32.totalorder %s19, 1
      %s186 = scalar_select %p185, %s19, 1
      %p187 = scmp.lt.s32.totalorder %s184, 31
      %s188 = scalar_select %p187, %s184, 31
      %s189 = smul.addr %s186, 32
      %s190 = sadd.s32 %s188, %s189
      %s191 = smul.addr %s190, 4
      %s192 = scalar_lea.vmem %s2, %s191
      %p193 = pneg %p127
      %p194 = pneg %p124
      %p195 = scmp.lt.s32.totalorder %s19, 1
      %s196 = scalar_select %p195, %s19, 1
      %p197 = scmp.lt.s32.totalorder %s20, 1
      %s198 = scalar_select %p197, %s20, 1
      %s199 = smul.addr %s196, 2
      %s200 = sadd.s32 %s198, %s199
      %s201 = smul.addr %s200, 2
      %s202 = scalar_lea.vmem %s3, %s201
      %s203 = smul.u32 16, %s20
      %p204 = scmp.lt.s32.totalorder %s19, 1
      %s205 = scalar_select %p204, %s19, 1
      %p206 = scmp.lt.s32.totalorder %s203, 31
      %s207 = scalar_select %p206, %s203, 31
      %s208 = smul.addr %s205, 32
      %s209 = sadd.s32 %s207, %s208
      %s210 = smul.addr %s209, 8
      %s211 = scalar_lea.vmem %s0, %s210
      %s212 = smul.u32 16, %s20
      %s213 = smul.u32 16, %s20
      %p214 = scmp.lt.s32.totalorder %s19, 1
      %s215 = scalar_select %p214, %s19, 1
      %p216 = scmp.lt.s32.totalorder %s213, 31
      %s217 = scalar_select %p216, %s213, 31
      %s218 = smul.addr %s215, 32
      %s219 = sadd.s32 %s217, %s218
      %s220 = smul.addr %s219, 4
      %s221 = scalar_lea.vmem %s2, %s220
      %s222 = smul.u32 16, %s20
      %p223 = scmp.lt.s32.totalorder %s19, 1
      %s224 = scalar_select %p223, %s19, 1
      %p225 = scmp.lt.s32.totalorder %s20, 1
      %s226 = scalar_select %p225, %s20, 1
      %s227 = smul.addr %s224, 2
      %s228 = sadd.s32 %s226, %s227
      %s229 = smul.addr %s228, 2
      %s230 = scalar_lea.vmem %s3, %s229
      %v231 = vld [vmem:[%s211] sm:$0xff]
      %v232 = vld [vmem:[%s211 + $0x8] sm:$0xff]
      %v233 = vld [vmem:[%s211 + $0x10] sm:$0xff]
      %v234 = vld [vmem:[%s211 + $0x18] sm:$0xff]
      %v235 = vld [vmem:[%s211 + $0x20] sm:$0xff]
      %v236 = vld [vmem:[%s211 + $0x28] sm:$0xff]
      %v237 = vld [vmem:[%s211 + $0x30] sm:$0xff]
      %v238 = vld [vmem:[%s211 + $0x38] sm:$0xff]
      %v239 = vld [vmem:[%s211 + $0x40] sm:$0xff]
      %v240 = vld [vmem:[%s211 + $0x48] sm:$0xff]
      %v241 = vld [vmem:[%s211 + $0x50] sm:$0xff]
      %v242 = vld [vmem:[%s211 + $0x58] sm:$0xff]
      %v243 = vld [vmem:[%s211 + $0x60] sm:$0xff]
      %v244 = vld [vmem:[%s211 + $0x68] sm:$0xff]
      %v245 = vld [vmem:[%s211 + $0x70] sm:$0xff]
      %v246 = vld [vmem:[%s211 + $0x78] sm:$0xff]
      %v247 = vld [vmem:[%s1] sm:$0xff]
      %v248 = vld [vmem:[%s1 + $0x8] sm:$0xff]
      %v249 = vld [vmem:[%s1 + $0x10] sm:$0xff]
      %v250 = vld [vmem:[%s1 + $0x18] sm:$0xff]
      %v251 = vld [vmem:[%s1 + $0x20] sm:$0xf]
      %vm252 = vcmask 293888
      %v254 = vsel %vm252, %v231, 0
      %v257 = vsel %vm252, %v232, 0
      %v260 = vsel %vm252, %v233, 0
      %v263 = vsel %vm252, %v234, 0
      %v266 = vsel %vm252, %v235, 0
      %v269 = vsel %vm252, %v236, 0
      %v272 = vsel %vm252, %v237, 0
      %v275 = vsel %vm252, %v238, 0
      %v278 = vsel %vm252, %v239, 0
      %v281 = vsel %vm252, %v240, 0
      %v284 = vsel %vm252, %v241, 0
      %v287 = vsel %vm252, %v242, 0
      %v290 = vsel %vm252, %v243, 0
      %v293 = vsel %vm252, %v244, 0
      %v296 = vsel %vm252, %v245, 0
      %v299 = vsel %vm252, %v246, 0
      %vm301 = vcmask 1043456
      %v303 = vsel %vm301, %v251, 0
      %305 = vmatprep.subr.mxu0 0.0
      %306 = vmatpush1.msra.mxu0 %v247
      %307 = vmatprep.subr.mxu0 0.0
      %308 = vmatpush1.msra.mxu0 %v248
      %309 = vmatprep.subr.mxu0 0.0
      %310 = vmatpush1.msra.mxu0 %v249
      %311 = vmatprep.subr.mxu0 0.0
      %312 = vmatpush1.msra.mxu0 %v250
      %313 = vmatprep.subr.mxu0 0.0
      %314 = vmatpush1.msra.mxu0 %v303
      %315 = vmatprep.subr.mxu0 0.0
      %316 = vmatpush1.msra.mxu0 0.0
      %317 = vmatprep.subr.mxu0 0.0
      %318 = vmatpush1.msra.mxu0 0.0
      %319 = vmatprep.subr.mxu0 0.0
      %320 = vmatpush1.msra.mxu0 0.0
      %321 = vmatprep.subr.mxu0 0.0
      %322 = vmatpush1.msra.mxu0 0.0
      %323 = vmatprep.subr.mxu0 0.0
      %324 = vmatpush1.msra.mxu0 0.0
      %325 = vmatprep.subr.mxu0 0.0
      %326 = vmatpush1.msra.mxu0 0.0
      %327 = vmatprep.subr.mxu0 0.0
      %328 = vmatpush1.msra.mxu0 0.0
      %329 = vmatprep.subr.mxu0 0.0
      %330 = vmatpush1.msra.mxu0 0.0
      %331 = vmatprep.subr.mxu0 0.0
      %332 = vmatpush1.msra.mxu0 0.0
      %333 = vmatprep.subr.mxu0 0.0
      %334 = vmatpush1.msra.mxu0 0.0
      %335 = vmatprep.subr.mxu0 0.0
      %336 = vmatpush1.msra.mxu0 0.0
      %337 = vmatprep.subr.mxu0 0.0
      %338 = vmatpush1.msra.mxu0 0.0
      %339 = vmatprep.subr.mxu0 0.0
      %340 = vmatpush1.msra.mxu0 0.0
      %341 = vmatprep.subr.mxu0 0.0
      %342 = vmatpush1.msra.mxu0 0.0
      %343 = vmatprep.subr.mxu0 0.0
      %344 = vmatpush1.msra.mxu0 0.0
      %345 = vmatprep.subr.mxu0 0.0
      %346 = vmatpush1.msra.mxu0 0.0
      %347 = vmatprep.subr.mxu0 0.0
      %348 = vmatpush1.msra.mxu0 0.0
      %349 = vmatprep.subr.mxu0 0.0
      %350 = vmatpush1.msra.mxu0 0.0
      %351 = vmatprep.subr.mxu0 0.0
      %352 = vmatpush1.msra.mxu0 0.0
      %353 = vmatprep.subr.mxu0 0.0
      %354 = vmatpush1.msra.mxu0 0.0
      %355 = vmatprep.subr.mxu0 0.0
      %356 = vmatpush1.msra.mxu0 0.0
      %357 = vmatprep.subr.mxu0 0.0
      %358 = vmatpush1.msra.mxu0 0.0
      %359 = vmatprep.subr.mxu0 0.0
      %360 = vmatpush1.msra.mxu0 0.0
      %361 = vmatprep.subr.mxu0 0.0
      %362 = vmatpush1.msra.mxu0 0.0
      %363 = vmatprep.subr.mxu0 0.0
      %364 = vmatpush1.msra.mxu0 0.0
      %365 = vmatprep.subr.mxu0 0.0
      %366 = vmatpush1.msra.mxu0 0.0
      %367 = vmatprep.subr.mxu0 0.0
      %368 = vmatpush1.msra.mxu0 0.0
      %369 = vmatprep.mubr.f32.mxu0 0.0
      %370 = vmatmul.mubr.f32.gmra.mrb[0].mxu0 %v254
      %v371 = vpop.f32.mrb[0].mxu0
      %v372 = vadd.f32 0.0, %v371
      %v373 = vpop.f32.mrb[0].mxu0
      %374 = vmatprep.mubr.f32.mxu0 0.0
      %375 = vmatmul.mubr.f32.gmra.mrb[0].mxu0 %v257
      %v376 = vpop.f32.mrb[0].mxu0
      %v377 = vadd.f32 0.0, %v376
      %v378 = vpop.f32.mrb[0].mxu0
      %379 = vmatprep.mubr.f32.mxu0 0.0
      %380 = vmatmul.mubr.f32.gmra.mrb[0].mxu0 %v260
      %v381 = vpop.f32.mrb[0].mxu0
      %v382 = vadd.f32 0.0, %v381
      %v383 = vpop.f32.mrb[0].mxu0
      %384 = vmatprep.mubr.f32.mxu0 0.0
      %385 = vmatmul.mubr.f32.gmra.mrb[0].mxu0 %v263
      %v386 = vpop.f32.mrb[0].mxu0
      %v387 = vadd.f32 0.0, %v386
      %v388 = vpop.f32.mrb[0].mxu0
      %389 = vmatprep.mubr.f32.mxu0 0.0
      %390 = vmatmul.mubr.f32.gmra.mrb[0].mxu0 %v266
      %v391 = vpop.f32.mrb[0].mxu0
      %v392 = vadd.f32 0.0, %v391
      %v393 = vpop.f32.mrb[0].mxu0
      %394 = vmatprep.mubr.f32.mxu0 0.0
      %395 = vmatmul.mubr.f32.gmra.mrb[0].mxu0 %v269
      %v396 = vpop.f32.mrb[0].mxu0
      %v397 = vadd.f32 0.0, %v396
      %v398 = vpop.f32.mrb[0].mxu0
      %399 = vmatprep.mubr.f32.mxu0 0.0
      %400 = vmatmul.mubr.f32.gmra.mrb[0].mxu0 %v272
      %v401 = vpop.f32.mrb[0].mxu0
      %v402 = vadd.f32 0.0, %v401
      %v403 = vpop.f32.mrb[0].mxu0
      %404 = vmatprep.mubr.f32.mxu0 0.0
      %405 = vmatmul.mubr.f32.gmra.mrb[0].mxu0 %v275
      %v406 = vpop.f32.mrb[0].mxu0
      %v407 = vadd.f32 0.0, %v406
      %v408 = vpop.f32.mrb[0].mxu0
      %409 = vmatprep.mubr.f32.mxu0 0.0
      %410 = vmatmul.mubr.f32.gmra.mrb[0].mxu0 %v278
      %v411 = vpop.f32.mrb[0].mxu0
      %v412 = vadd.f32 0.0, %v411
      %v413 = vpop.f32.mrb[0].mxu0
      %414 = vmatprep.mubr.f32.mxu0 0.0
      %415 = vmatmul.mubr.f32.gmra.mrb[0].mxu0 %v281
      %v416 = vpop.f32.mrb[0].mxu0
      %v417 = vadd.f32 0.0, %v416
      %v418 = vpop.f32.mrb[0].mxu0
      %419 = vmatprep.mubr.f32.mxu0 0.0
      %420 = vmatmul.mubr.f32.gmra.mrb[0].mxu0 %v284
      %v421 = vpop.f32.mrb[0].mxu0
      %v422 = vadd.f32 0.0, %v421
      %v423 = vpop.f32.mrb[0].mxu0
      %424 = vmatprep.mubr.f32.mxu0 0.0
      %425 = vmatmul.mubr.f32.gmra.mrb[0].mxu0 %v287
      %v426 = vpop.f32.mrb[0].mxu0
      %v427 = vadd.f32 0.0, %v426
      %v428 = vpop.f32.mrb[0].mxu0
      %429 = vmatprep.mubr.f32.mxu0 0.0
      %430 = vmatmul.mubr.f32.gmra.mrb[0].mxu0 %v290
      %v431 = vpop.f32.mrb[0].mxu0
      %v432 = vadd.f32 0.0, %v431
      %v433 = vpop.f32.mrb[0].mxu0
      %434 = vmatprep.mubr.f32.mxu0 0.0
      %435 = vmatmul.mubr.f32.gmra.mrb[0].mxu0 %v293
      %v436 = vpop.f32.mrb[0].mxu0
      %v437 = vadd.f32 0.0, %v436
      %v438 = vpop.f32.mrb[0].mxu0
      %439 = vmatprep.mubr.f32.mxu0 0.0
      %440 = vmatmul.mubr.f32.gmra.mrb[0].mxu0 %v296
      %v441 = vpop.f32.mrb[0].mxu0
      %v442 = vadd.f32 0.0, %v441
      %v443 = vpop.f32.mrb[0].mxu0
      %444 = vmatprep.mubr.f32.mxu0 0.0
      %445 = vmatmul.mubr.f32.gmra.mrb[0].mxu0 %v299
      %v446 = vpop.f32.mrb[0].mxu0
      %v447 = vadd.f32 0.0, %v446
      %v448 = vpop.f32.mrb[0].mxu0
      %449 = vdwg.mxu0
      %v450 = vpack.c.bf16 %v377, %v372
      %v451 = vpack.c.bf16 %v387, %v382
      %v452 = vpack.c.bf16 %v397, %v392
      %v453 = vpack.c.bf16 %v407, %v402
      %v454 = vpack.c.bf16 %v417, %v412
      %v455 = vpack.c.bf16 %v427, %v422
      %v456 = vpack.c.bf16 %v437, %v432
      %v457 = vpack.c.bf16 %v447, %v442
      %v466 = vunpack.c.l.b16 %v450
      %v467 = vunpack.c.h.b16 %v450
      %v468 = vunpack.c.l.b16 %v451
      %v469 = vunpack.c.h.b16 %v451
      %v470 = vunpack.c.l.b16 %v452
      %v471 = vunpack.c.h.b16 %v452
      %v472 = vunpack.c.l.b16 %v453
      %v473 = vunpack.c.h.b16 %v453
      %v474 = vunpack.c.l.b16 %v454
      %v475 = vunpack.c.h.b16 %v454
      %v476 = vunpack.c.l.b16 %v455
      %v477 = vunpack.c.h.b16 %v455
      %v478 = vunpack.c.l.b16 %v456
      %v479 = vunpack.c.h.b16 %v456
      %v480 = vunpack.c.l.b16 %v457
      %v481 = vunpack.c.h.b16 %v457
      %v482 = vpack.c.b16 %v466, %v466
      %v483 = vpack.c.b16 %v467, %v467
      %v484 = vpack.c.b16 %v468, %v468
      %v485 = vpack.c.b16 %v469, %v469
      %v486 = vpack.c.b16 %v470, %v470
      %v487 = vpack.c.b16 %v471, %v471
      %v488 = vpack.c.b16 %v472, %v472
      %v489 = vpack.c.b16 %v473, %v473
      %v490 = vpack.c.b16 %v474, %v474
      %v491 = vpack.c.b16 %v475, %v475
      %v492 = vpack.c.b16 %v476, %v476
      %v493 = vpack.c.b16 %v477, %v477
      %v494 = vpack.c.b16 %v478, %v478
      %v495 = vpack.c.b16 %v479, %v479
      %v496 = vpack.c.b16 %v480, %v480
      %v497 = vpack.c.b16 %v481, %v481
      %514 = vst [vmem:[%s221] sm:$0xf] %v482
      %515 = vst [vmem:[%s221 + $0x4] sm:$0xf] %v483
      %516 = vst [vmem:[%s221 + $0x8] sm:$0xf] %v484
      %517 = vst [vmem:[%s221 + $0xc] sm:$0xf] %v485
      %518 = vst [vmem:[%s221 + $0x10] sm:$0xf] %v486
      %519 = vst [vmem:[%s221 + $0x14] sm:$0xf] %v487
      %520 = vst [vmem:[%s221 + $0x18] sm:$0xf] %v488
      %521 = vst [vmem:[%s221 + $0x1c] sm:$0xf] %v489
      %522 = vst [vmem:[%s221 + $0x20] sm:$0xf] %v490
      %523 = vst [vmem:[%s221 + $0x24] sm:$0xf] %v491
      %524 = vst [vmem:[%s221 + $0x28] sm:$0xf] %v492
      %525 = vst [vmem:[%s221 + $0x2c] sm:$0xf] %v493
      %526 = vst [vmem:[%s221 + $0x30] sm:$0xf] %v494
      %527 = vst [vmem:[%s221 + $0x34] sm:$0xf] %v495
      %528 = vst [vmem:[%s221 + $0x38] sm:$0xf] %v496
      %529 = vst [vmem:[%s221 + $0x3c] sm:$0xf] %v497
      %v530 = vadd.f32 %v372, %v377
      %v531 = vadd.f32 %v530, %v382
      %v532 = vadd.f32 %v531, %v387
      %v533 = vadd.f32 %v532, %v392
      %v534 = vadd.f32 %v533, %v397
      %v535 = vadd.f32 %v534, %v402
      %v536 = vadd.f32 %v535, %v407
      %v537 = vadd.f32 %v536, %v412
      %v538 = vadd.f32 %v537, %v417
      %v539 = vadd.f32 %v538, %v422
      %v540 = vadd.f32 %v539, %v427
      %v541 = vadd.f32 %v540, %v432
      %v542 = vadd.f32 %v541, %v437
      %v543 = vadd.f32 %v542, %v442
      %v544 = vadd.f32 %v543, %v447
      %v545 = vrot.slane %v544, 4
      %v546 = vadd.f32 %v544, %v545
      %v547 = vrot.slane %v546, 2
      %v548 = vadd.f32 %v546, %v547
      %v549 = vrot.slane %v548, 1
      %v550 = vadd.f32 %v548, %v549
      %551 = vst [vmem:[%s230] sm:$0x1] %v550
      %v552 = vmul.f32 %v372, %v372
      %v553 = vmul.f32 %v377, %v377
      %v554 = vmul.f32 %v382, %v382
      %v555 = vmul.f32 %v387, %v387
      %v556 = vmul.f32 %v392, %v392
      %v557 = vmul.f32 %v397, %v397
      %v558 = vmul.f32 %v402, %v402
      %v559 = vmul.f32 %v407, %v407
      %v560 = vmul.f32 %v412, %v412
      %v561 = vmul.f32 %v417, %v417
      %v562 = vmul.f32 %v422, %v422
      %v563 = vmul.f32 %v427, %v427
      %v564 = vmul.f32 %v432, %v432
      %v565 = vmul.f32 %v437, %v437
      %v566 = vmul.f32 %v442, %v442
      %v567 = vmul.f32 %v447, %v447
      %v568 = vadd.f32 %v552, %v553
      %v569 = vadd.f32 %v568, %v554
      %v570 = vadd.f32 %v569, %v555
      %v571 = vadd.f32 %v570, %v556
      %v572 = vadd.f32 %v571, %v557
      %v573 = vadd.f32 %v572, %v558
      %v574 = vadd.f32 %v573, %v559
      %v575 = vadd.f32 %v574, %v560
      %v576 = vadd.f32 %v575, %v561
      %v577 = vadd.f32 %v576, %v562
      %v578 = vadd.f32 %v577, %v563
      %v579 = vadd.f32 %v578, %v564
      %v580 = vadd.f32 %v579, %v565
      %v581 = vadd.f32 %v580, %v566
      %v582 = vadd.f32 %v581, %v567
      %v583 = vrot.slane %v582, 4
      %v584 = vadd.f32 %v582, %v583
      %v585 = vrot.slane %v584, 2
      %v586 = vadd.f32 %v584, %v585
      %v587 = vrot.slane %v586, 1
      %v588 = vadd.f32 %v586, %v587
      %589 = vst [vmem:[%s230 + $0x1] sm:$0x1] %v588
      %s590 = smul.u32 16, %s20
      %p591 = scmp.lt.s32.totalorder %s19, 1
      %s592 = scalar_select %p591, %s19, 1
      %p593 = scmp.lt.s32.totalorder %s590, 31
      %s594 = scalar_select %p593, %s590, 31
      %s595 = smul.addr %s592, 32
      %s596 = sadd.s32 %s594, %s595
      %s597 = smul.addr %s596, 4
      %s598 = scalar_lea.vmem %s2, %s597
      %p599 = scmp.lt.s32.totalorder %s19, 1
      %s600 = scalar_select %p599, %s19, 1
      %p601 = scmp.lt.s32.totalorder %s20, 1
      %s602 = scalar_select %p601, %s20, 1
      %s603 = smul.addr %s600, 2
      %s604 = sadd.s32 %s602, %s603
      %s605 = smul.addr %s604, 2
      %s606 = scalar_lea.vmem %s3, %s605
      // Predicated region
      $region29: #{double_conv.3} parent=27 // pred_check
        %p607 = pneg %p96
      $region30: #{double_conv.3} parent=27 // pred_check_branch
        %609 = sbr.rel (%p607) target = $region32
      $region31: #{double_conv.3} parent=27 // pred_region
        %s610 = smul.u32 16, %s20
      $region32: #{double_conv.3} parent=27 // pred_fallthru
        _
      // Predicated region
      $region33: #{double_conv.3} parent=27 // pred_check
        %p611 = pneg %p124
      $region34: #{double_conv.3} parent=27 // pred_check_branch
        %613 = sbr.rel (%p611) target = $region36
      $region35: #{double_conv.3} parent=27 // pred_region
        _
      $region36: #{double_conv.3} parent=27 // pred_fallthru
        _
    $region28: #{double_conv.3} parent=5 // pred_fallthru
      _
    %p614 = scmp.le.s32.totalorder 2, %s10
    // Predicated region
    $region37: #{double_conv.3} parent=5 // pred_check
      %p615 = pneg %p614
    $region38: #{double_conv.3} parent=5 // pred_check_branch
      %617 = sbr.rel (%p615) target = $region40
    $region39: #{double_conv.3} parent=5 // pred_region
      %s618 = ssub.s32 %s10, 2
      // Predicated region
      $region41: #{double_conv.3} parent=39 // pred_check
        %p619 = pneg %p102
      $region42: #{double_conv.3} parent=39 // pred_check_branch
        %621 = sbr.rel (%p619) target = $region44
      $region43: #{double_conv.3} parent=39 // pred_region
        %s622 = smul.u32 16, %s22
        %p623 = scmp.lt.s32.totalorder %s21, 1
        %s624 = scalar_select %p623, %s21, 1
        %p625 = scmp.lt.s32.totalorder %s622, 31
        %s626 = scalar_select %p625, %s622, 31
        %s627 = smul.addr %s624, 32
        %s628 = sadd.s32 %s626, %s627
        %s629 = smul.addr %s628, 4
        %s630 = scalar_lea.vmem %s2, %s629
      $region44: #{double_conv.3} parent=39 // pred_fallthru
        _
      // Predicated region
      $region45: #{double_conv.3} parent=39 // pred_check
        %p631 = pneg %p130
      $region46: #{double_conv.3} parent=39 // pred_check_branch
        %633 = sbr.rel (%p631) target = $region48
      $region47: #{double_conv.3} parent=39 // pred_region
        %p634 = scmp.lt.s32.totalorder %s21, 1
        %s635 = scalar_select %p634, %s21, 1
        %p636 = scmp.lt.s32.totalorder %s22, 1
        %s637 = scalar_select %p636, %s22, 1
        %s638 = smul.addr %s635, 2
        %s639 = sadd.s32 %s637, %s638
        %s640 = smul.addr %s639, 2
        %s641 = scalar_lea.vmem %s3, %s640
      $region48: #{double_conv.3} parent=39 // pred_fallthru
        _
    $region40: #{double_conv.3} parent=5 // pred_fallthru
      _
  $region6: #{double_conv.3} parent=0 // loop_footer
    %s14 = sadd.s32 1, %s10
  $region7: #{double_conv.3} parent=0 // loop_footer_branch
    %9 = sbr.rel target = $region3
  $region8: #{double_conv.3} parent=0 // loop_exit
    _

// kernel: double_conv.5
$region0: #{double_conv.5}
  #allocation0 [shape = 'u32[]', space=smem, size = 0x4, offset = 0x4, fixed_abs, tag = 'smem constant byte address 0x4 - core index']
  #allocation1 [shape = 'u32[144,128]{1,0:T(1,128)}', space=vmem, size = 0x12000, scoped, tag = 'internal scratch']
  %s0 = inlined_call_operand.vmem [shape: bf16[2,256,128], index: 0, kind: input, shape index: {}]
  %s1 = inlined_call_operand.vmem [shape: f32[1,128], index: 1, kind: input, shape index: {}]
  %s2 = inlined_call_operand.vmem [shape: f32[1,128], index: 2, kind: input, shape index: {}]
  %s3 = inlined_call_operand.vmem [shape: f32[2,256,8], index: 3, kind: output, shape index: {}]
  %s4 = sld [smem:[#allocation0]]
  $region45: #{double_conv.5} parent=0
    _
  %s6 = ssub.s32 1, %s4
  %s7 = scalar_select 0, %s6, %s4
  loop: start=0, step=1, limit=6
  $region2: #{double_conv.5} parent=0 // loop_pre_header
    _
  $region3: #{double_conv.5} parent=0 // loop_header
    %s9 = sphi 0, %s13
    %p10 = scmp.ge.s32.totalorder %s9, 6
    %s16 = sphi 0, %s28
    %s17 = sphi 0, %s24
    %s18 = sphi 0, %s16
    %s19 = sphi 0, %s17
    %s20 = sphi 0, %s18
    %s21 = sphi 0, %s19
    %s33 = sphi 0, %s35
    %s36 = sphi 0, %s33
    %s37 = sphi 0, %s36
    %s53 = sphi 0, %s37
    %s57 = sphi 0, %s57
    %s59 = sphi 0, %s57
    %s60 = sphi 0, %s59
    %s74 = sphi 0, %s60
    %s78 = sphi 0, %s78
    %s80 = sphi 0, %s78
    %s81 = sphi 0, %s80
    %s95 = sphi 0, %s81
    %s103 = sphi 0, %s105
    %s106 = sphi 0, %s103
    %s107 = sphi 0, %s106
    %s123 = sphi 0, %s107
  $region4: #{double_conv.5} parent=0 // loop_header_branch
    %12 = sbr.rel (%p10) target = $region8
  $region5: #{double_conv.5} parent=0 // loop_body
    %s14 = ssub.s32 %s9, 1
    %s15 = ssub.s32 %s9, 2
    %s22 = sadd.s32 1, %s17
    %p23 = scmp.ge.s32.totalorder %s22, 2
    %s24 = scalar_select %p23, 0, %s22
    %s25 = sadd.s32 1, %s16
    %s26 = scalar_select %p23, %s25, %s16
    %p27 = scmp.ge.s32.totalorder %s26, 2
    %s28 = scalar_select %p27, 0, %s26
    %s29 = ssub.s32 %s16, %s28
    %s30 = ssub.s32 %s17, %s24
    %s31 = sor.u32 %s29, %s30
    %p32 = scmp.eq.s32.totalorder %s31, 0
    %s34 = sadd.s32 %s33, 1
    %s35 = scalar_select %p32, %s33, %s34
    %p38 = pneg %p32
    %p39 = scmp.eq.s32.totalorder %s9, 3
    %p40 = por %p38, %p39
    %p41 = scmp.ne.s32.totalorder %s33, %s36
    %p42 = scmp.eq.s32.totalorder %s9, 0
    %p43 = por %p41, %p42
    %p44 = scmp.ne.s32.totalorder %s33, %s36
    %p45 = scmp.eq.s32.totalorder %s14, 3
    %p46 = por %p44, %p45
    %p47 = scmp.ne.s32.totalorder %s36, %s37
    %p48 = scmp.eq.s32.totalorder %s14, 0
    %p49 = por %p47, %p48
    %p50 = scmp.ne.s32.totalorder %s36, %s37
    %p51 = scmp.eq.s32.totalorder %s15, 3
    %p52 = por %p50, %p51
    %p54 = scmp.ne.s32.totalorder %s37, %s53
    %p55 = scmp.eq.s32.totalorder %s15, 0
    %p56 = por %p54, %p55
    %s58 = sadd.s32 %s57, 1
    %p61 = scmp.eq.s32.totalorder %s9, 3
    %p62 = scmp.ne.s32.totalorder %s57, %s59
    %p63 = scmp.eq.s32.totalorder %s9, 0
    %p64 = por %p62, %p63
    %p65 = scmp.ne.s32.totalorder %s57, %s59
    %p66 = scmp.eq.s32.totalorder %s14, 3
    %p67 = por %p65, %p66
    %p68 = scmp.ne.s32.totalorder %s59, %s60
    %p69 = scmp.eq.s32.totalorder %s14, 0
    %p70 = por %p68, %p69
    %p71 = scmp.ne.s32.totalorder %s59, %s60
    %p72 = scmp.eq.s32.totalorder %s15, 3
    %p73 = por %p71, %p72
    %p75 = scmp.ne.s32.totalorder %s60, %s74
    %p76 = scmp.eq.s32.totalorder %s15, 0
    %p77 = por %p75, %p76
    %s79 = sadd.s32 %s78, 1
    %p82 = scmp.eq.s32.totalorder %s9, 3
    %p83 = scmp.ne.s32.totalorder %s78, %s80
    %p84 = scmp.eq.s32.totalorder %s9, 0
    %p85 = por %p83, %p84
    %p86 = scmp.ne.s32.totalorder %s78, %s80
    %p87 = scmp.eq.s32.totalorder %s14, 3
    %p88 = por %p86, %p87
    %p89 = scmp.ne.s32.totalorder %s80, %s81
    %p90 = scmp.eq.s32.totalorder %s14, 0
    %p91 = por %p89, %p90
    %p92 = scmp.ne.s32.totalorder %s80, %s81
    %p93 = scmp.eq.s32.totalorder %s15, 3
    %p94 = por %p92, %p93
    %p96 = scmp.ne.s32.totalorder %s81, %s95
    %p97 = scmp.eq.s32.totalorder %s15, 0
    %p98 = por %p96, %p97
    %s99 = ssub.s32 %s16, %s28
    %s100 = ssub.s32 %s17, %s24
    %s101 = sor.u32 %s99, %s100
    %p102 = scmp.eq.s32.totalorder %s101, 0
    %s104 = sadd.s32 %s103, 1
    %s105 = scalar_select %p102, %s103, %s104
    %p108 = pneg %p102
    %p109 = scmp.eq.s32.totalorder %s9, 3
    %p110 = por %p108, %p109
    %p111 = scmp.ne.s32.totalorder %s103, %s106
    %p112 = scmp.eq.s32.totalorder %s9, 0
    %p113 = por %p111, %p112
    %p114 = scmp.ne.s32.totalorder %s103, %s106
    %p115 = scmp.eq.s32.totalorder %s14, 3
    %p116 = por %p114, %p115
    %p117 = scmp.ne.s32.totalorder %s106, %s107
    %p118 = scmp.eq.s32.totalorder %s14, 0
    %p119 = por %p117, %p118
    %p120 = scmp.ne.s32.totalorder %s106, %s107
    %p121 = scmp.eq.s32.totalorder %s15, 3
    %p122 = por %p120, %p121
    %p124 = scmp.ne.s32.totalorder %s107, %s123
    %p125 = scmp.eq.s32.totalorder %s15, 0
    %p126 = por %p124, %p125
    %p127 = scmp.le.s32.totalorder 1, %s9
    %p128 = scmp.lt.s32.totalorder %s9, 5
    %p129 = pnand %p127, %p128
    %p130 = pneg %p129
    // Predicated region
    $region9: #{double_conv.5} parent=5 // pred_check
      _
    $region10: #{double_conv.5} parent=5 // pred_check_branch
      %132 = sbr.rel (%p129) target = $region12
    $region11: #{double_conv.5} parent=5 // pred_region
      %s133 = ssub.s32 %s9, 1
      // Predicated region
      $region13: #{double_conv.5} parent=11 // pred_check
        %p134 = pneg %p70
      $region14: #{double_conv.5} parent=11 // pred_check_branch
        %136 = sbr.rel (%p134) target = $region16
      $region15: #{double_conv.5} parent=11 // pred_region
        _
      $region16: #{double_conv.5} parent=11 // pred_fallthru
        _
      // Predicated region
      $region17: #{double_conv.5} parent=11 // pred_check
        %p137 = pneg %p91
      $region18: #{double_conv.5} parent=11 // pred_check_branch
        %139 = sbr.rel (%p137) target = $region20
      $region19: #{double_conv.5} parent=11 // pred_region
        _
      $region20: #{double_conv.5} parent=11 // pred_fallthru
        _
    $region12: #{double_conv.5} parent=5 // pred_fallthru
      _
    %p140 = scmp.lt.s32.totalorder %s9, 4
    // Predicated region
    $region21: #{double_conv.5} parent=5 // pred_check
      %p141 = pneg %p140
    $region22: #{double_conv.5} parent=5 // pred_check_branch
      %143 = sbr.rel (%p141) target = $region24
    $region23: #{double_conv.5} parent=5 // pred_region
      // Predicated region
      $region25: #{double_conv.5} parent=23 // pred_check
        %p144 = pneg %p43
      $region26: #{double_conv.5} parent=23 // pred_check_branch
        %146 = sbr.rel (%p144) target = $region28
      $region27: #{double_conv.5} parent=23 // pred_region
        %s147 = smul.u32 16, %s17
        %p148 = scmp.lt.s32.totalorder %s16, 1
        %s149 = scalar_select %p148, %s16, 1
        %p150 = scmp.lt.s32.totalorder %s147, 31
        %s151 = scalar_select %p150, %s147, 31
        %s152 = smul.addr %s149, 32
        %s153 = sadd.s32 %s151, %s152
        %s154 = smul.addr %s153, 4
        %s155 = scalar_lea.vmem %s0, %s154
        %s156 = smul.u32 16, %s17
      $region28: #{double_conv.5} parent=23 // pred_fallthru
        _
    $region24: #{double_conv.5} parent=5 // pred_fallthru
      _
    %p157 = scmp.le.s32.totalorder 1, %s9
    %p158 = scmp.lt.s32.totalorder %s9, 5
    %p159 = pnand %p157, %p158
    %p160 = pneg %p159
    // Predicated region
    $region29: #{double_conv.5} parent=5 // pred_check
      _
    $region30: #{double_conv.5} parent=5 // pred_check_branch
      %162 = sbr.rel (%p159) target = $region32
    $region31: #{double_conv.5} parent=5 // pred_region
      %s163 = ssub.s32 %s9, 1
      %s164 = smul.u32 16, %s19
      %p165 = scmp.lt.s32.totalorder %s18, 1
      %s166 = scalar_select %p165, %s18, 1
      %p167 = scmp.lt.s32.totalorder %s164, 31
      %s168 = scalar_select %p167, %s164, 31
      %s169 = smul.addr %s166, 32
      %s170 = sadd.s32 %s168, %s169
      %s171 = smul.addr %s170, 4
      %s172 = scalar_lea.vmem %s0, %s171
      %p173 = pneg %p49
      %p174 = pneg %p46
      %p175 = pneg %p70
      %p176 = pneg %p67
      %p177 = pneg %p91
      %p178 = pneg %p88
      %p179 = pneg %p119
      %p180 = pneg %p116
      %s181 = smul.u32 16, %s19
      %p182 = scmp.lt.s32.totalorder %s18, 1
      %s183 = scalar_select %p182, %s18, 1
      %p184 = scmp.lt.s32.totalorder %s181, 31
      %s185 = scalar_select %p184, %s181, 31
      %s186 = smul.addr %s183, 32
      %s187 = sadd.s32 %s185, %s186
      %s188 = smul.addr %s187, 8
      %s189 = scalar_lea.vmem %s3, %s188
      %s190 = smul.u32 16, %s19
      %p191 = scmp.lt.s32.totalorder %s18, 1
      %s192 = scalar_select %p191, %s18, 1
      %p193 = scmp.lt.s32.totalorder %s190, 31
      %s194 = scalar_select %p193, %s190, 31
      %s195 = smul.addr %s192, 32
      %s196 = sadd.s32 %s194, %s195
      %s197 = smul.addr %s196, 4
      %s198 = scalar_lea.vmem %s0, %s197
      %s199 = smul.u32 16, %s19
      %s200 = smul.u32 16, %s19
      %p201 = scmp.lt.s32.totalorder %s18, 1
      %s202 = scalar_select %p201, %s18, 1
      %p203 = scmp.lt.s32.totalorder %s200, 31
      %s204 = scalar_select %p203, %s200, 31
      %s205 = smul.addr %s202, 32
      %s206 = sadd.s32 %s204, %s205
      %s207 = smul.addr %s206, 8
      %s208 = scalar_lea.vmem %s3, %s207
      %s209 = smul.u32 16, %s19
      %v210 = vld [vmem:[%s198] sm:$0xf]
      %v211 = vld [vmem:[%s198 + $0x4] sm:$0xf]
      %v212 = vld [vmem:[%s198 + $0x8] sm:$0xf]
      %v213 = vld [vmem:[%s198 + $0xc] sm:$0xf]
      %v214 = vld [vmem:[%s198 + $0x10] sm:$0xf]
      %v215 = vld [vmem:[%s198 + $0x14] sm:$0xf]
      %v216 = vld [vmem:[%s198 + $0x18] sm:$0xf]
      %v217 = vld [vmem:[%s198 + $0x1c] sm:$0xf]
      %v218 = vld [vmem:[%s198 + $0x20] sm:$0xf]
      %v219 = vld [vmem:[%s198 + $0x24] sm:$0xf]
      %v220 = vld [vmem:[%s198 + $0x28] sm:$0xf]
      %v221 = vld [vmem:[%s198 + $0x2c] sm:$0xf]
      %v222 = vld [vmem:[%s198 + $0x30] sm:$0xf]
      %v223 = vld [vmem:[%s198 + $0x34] sm:$0xf]
      %v224 = vld [vmem:[%s198 + $0x38] sm:$0xf]
      %v225 = vld [vmem:[%s198 + $0x3c] sm:$0xf]
      %v226 = vunpack.c.l.bf16 %v210
      %v227 = vunpack.c.l.bf16 %v211
      %v228 = vunpack.c.l.bf16 %v212
      %v229 = vunpack.c.l.bf16 %v213
      %v230 = vunpack.c.l.bf16 %v214
      %v231 = vunpack.c.l.bf16 %v215
      %v232 = vunpack.c.l.bf16 %v216
      %v233 = vunpack.c.l.bf16 %v217
      %v234 = vunpack.c.l.bf16 %v218
      %v235 = vunpack.c.l.bf16 %v219
      %v236 = vunpack.c.l.bf16 %v220
      %v237 = vunpack.c.l.bf16 %v221
      %v238 = vunpack.c.l.bf16 %v222
      %v239 = vunpack.c.l.bf16 %v223
      %v240 = vunpack.c.l.bf16 %v224
      %v241 = vunpack.c.l.bf16 %v225
      %v242 = vld [vmem:[%s1] sm:$0x1]
      %v244 = vlaneseq
      %v245 = vshrl.u32 %v244, 7
      %v246 = vsub.s32 0, %v245
      %v247 = vrot.slane %v242, %v246
      %v249 = vmul.f32 %v226, %v247
      %v250 = vmul.f32 %v227, %v247
      %v251 = vmul.f32 %v228, %v247
      %v252 = vmul.f32 %v229, %v247
      %v253 = vmul.f32 %v230, %v247
      %v254 = vmul.f32 %v231, %v247
      %v255 = vmul.f32 %v232, %v247
      %v256 = vmul.f32 %v233, %v247
      %v257 = vmul.f32 %v234, %v247
      %v258 = vmul.f32 %v235, %v247
      %v259 = vmul.f32 %v236, %v247
      %v260 = vmul.f32 %v237, %v247
      %v261 = vmul.f32 %v238, %v247
      %v262 = vmul.f32 %v239, %v247
      %v263 = vmul.f32 %v240, %v247
      %v264 = vmul.f32 %v241, %v247
      %v265 = vld [vmem:[%s2] sm:$0x1]
      %v267 = vlaneseq
      %v268 = vshrl.u32 %v267, 7
      %v269 = vsub.s32 0, %v268
      %v270 = vrot.slane %v265, %v269
      %v272 = vadd.f32 %v249, %v270
      %v273 = vadd.f32 %v250, %v270
      %v274 = vadd.f32 %v251, %v270
      %v275 = vadd.f32 %v252, %v270
      %v276 = vadd.f32 %v253, %v270
      %v277 = vadd.f32 %v254, %v270
      %v278 = vadd.f32 %v255, %v270
      %v279 = vadd.f32 %v256, %v270
      %v280 = vadd.f32 %v257, %v270
      %v281 = vadd.f32 %v258, %v270
      %v282 = vadd.f32 %v259, %v270
      %v283 = vadd.f32 %v260, %v270
      %v284 = vadd.f32 %v261, %v270
      %v285 = vadd.f32 %v262, %v270
      %v286 = vadd.f32 %v263, %v270
      %v287 = vadd.f32 %v264, %v270
      %v288 = vmax.f32 %v272, 0.0
      %v289 = vmax.f32 %v273, 0.0
      %v290 = vmax.f32 %v274, 0.0
      %v291 = vmax.f32 %v275, 0.0
      %v292 = vmax.f32 %v276, 0.0
      %v293 = vmax.f32 %v277, 0.0
      %v294 = vmax.f32 %v278, 0.0
      %v295 = vmax.f32 %v279, 0.0
      %v296 = vmax.f32 %v280, 0.0
      %v297 = vmax.f32 %v281, 0.0
      %v298 = vmax.f32 %v282, 0.0
      %v299 = vmax.f32 %v283, 0.0
      %v300 = vmax.f32 %v284, 0.0
      %v301 = vmax.f32 %v285, 0.0
      %v302 = vmax.f32 %v286, 0.0
      %v303 = vmax.f32 %v287, 0.0
      %vm304 = vcmask 64512
      %305 = vst.msk [vmem:[%s208] sm:$0xff] %vm304, %v288
      %306 = vst.msk [vmem:[%s208 + $0x8] sm:$0xff] %vm304, %v289
      %307 = vst.msk [vmem:[%s208 + $0x10] sm:$0xff] %vm304, %v290
      %308 = vst.msk [vmem:[%s208 + $0x18] sm:$0xff] %vm304, %v291
      %309 = vst.msk [vmem:[%s208 + $0x20] sm:$0xff] %vm304, %v292
      %310 = vst.msk [vmem:[%s208 + $0x28] sm:$0xff] %vm304, %v293
      %311 = vst.msk [vmem:[%s208 + $0x30] sm:$0xff] %vm304, %v294
      %312 = vst.msk [vmem:[%s208 + $0x38] sm:$0xff] %vm304, %v295
      %313 = vst.msk [vmem:[%s208 + $0x40] sm:$0xff] %vm304, %v296
      %314 = vst.msk [vmem:[%s208 + $0x48] sm:$0xff] %vm304, %v297
      %315 = vst.msk [vmem:[%s208 + $0x50] sm:$0xff] %vm304, %v298
      %316 = vst.msk [vmem:[%s208 + $0x58] sm:$0xff] %vm304, %v299
      %317 = vst.msk [vmem:[%s208 + $0x60] sm:$0xff] %vm304, %v300
      %318 = vst.msk [vmem:[%s208 + $0x68] sm:$0xff] %vm304, %v301
      %319 = vst.msk [vmem:[%s208 + $0x70] sm:$0xff] %vm304, %v302
      %320 = vst.msk [vmem:[%s208 + $0x78] sm:$0xff] %vm304, %v303
      %s321 = smul.u32 16, %s19
      %p322 = scmp.lt.s32.totalorder %s18, 1
      %s323 = scalar_select %p322, %s18, 1
      %p324 = scmp.lt.s32.totalorder %s321, 31
      %s325 = scalar_select %p324, %s321, 31
      %s326 = smul.addr %s323, 32
      %s327 = sadd.s32 %s325, %s326
      %s328 = smul.addr %s327, 8
      %s329 = scalar_lea.vmem %s3, %s328
      // Predicated region
      $region33: #{double_conv.5} parent=31 // pred_check
        %p330 = pneg %p116
      $region34: #{double_conv.5} parent=31 // pred_check_branch
        %332 = sbr.rel (%p330) target = $region36
      $region35: #{double_conv.5} parent=31 // pred_region
        %s333 = smul.u32 16, %s19
      $region36: #{double_conv.5} parent=31 // pred_fallthru
        _
    $region32: #{double_conv.5} parent=5 // pred_fallthru
      _
    %p334 = scmp.le.s32.totalorder 2, %s9
    // Predicated region
    $region37: #{double_conv.5} parent=5 // pred_check
      %p335 = pneg %p334
    $region38: #{double_conv.5} parent=5 // pred_check_branch
      %337 = sbr.rel (%p335) target = $region40
    $region39: #{double_conv.5} parent=5 // pred_region
      %s338 = ssub.s32 %s9, 2
      // Predicated region
      $region41: #{double_conv.5} parent=39 // pred_check
        %p339 = pneg %p122
      $region42: #{double_conv.5} parent=39 // pred_check_branch
        %341 = sbr.rel (%p339) target = $region44
      $region43: #{double_conv.5} parent=39 // pred_region
        %s342 = smul.u32 16, %s21
        %p343 = scmp.lt.s32.totalorder %s20, 1
        %s344 = scalar_select %p343, %s20, 1
        %p345 = scmp.lt.s32.totalorder %s342, 31
        %s346 = scalar_select %p345, %s342, 31
        %s347 = smul.addr %s344, 32
        %s348 = sadd.s32 %s346, %s347
        %s349 = smul.addr %s348, 8
        %s350 = scalar_lea.vmem %s3, %s349
      $region44: #{double_conv.5} parent=39 // pred_fallthru
        _
    $region40: #{double_conv.5} parent=5 // pred_fallthru
      _
  $region6: #{double_conv.5} parent=0 // loop_footer
    %s13 = sadd.s32 1, %s9
  $region7: #{double_conv.5} parent=0 // loop_footer_branch
    %8 = sbr.rel target = $region3
  $region8: #{double_conv.5} parent=0 // loop_exit
    _

// kernel: double_conv.4
$region0: #{double_conv.4}
  #allocation0 [shape = 'u32[]', space=smem, size = 0x4, offset = 0x4, fixed_abs, tag = 'smem constant byte address 0x4 - core index']
  #allocation1 [shape = 'u32[144,128]{1,0:T(1,128)}', space=vmem, size = 0x12000, scoped, tag = 'internal scratch']
  #allocation2 [shape = 'bf16[184,128]{1,0:T(8,128)(2,1)}', space=vmem, size = 0xb800, scoped, tag = 'scratch operand']
  %s0 = inlined_call_operand.vmem [shape: bf16[2,256,128], index: 0, kind: input, shape index: {}]
  %s1 = inlined_call_operand.vmem [shape: bf16[2,2,32,128], index: 1, kind: input, shape index: {}]
  %s2 = inlined_call_operand.vmem [shape: f32[1,128], index: 2, kind: input, shape index: {}]
  %s3 = inlined_call_operand.vmem [shape: f32[1,128], index: 3, kind: input, shape index: {}]
  %s4 = inlined_call_operand.vmem [shape: bf16[9,128,128], index: 4, kind: input, shape index: {}]
  %s5 = inlined_call_operand.vmem [shape: bf16[2,256,128], index: 5, kind: output, shape index: {0}]
  %s6 = inlined_call_operand.vmem [shape: f32[2,2,2,128], index: 6, kind: output, shape index: {1}]
  %7 = xla_tuple %s5, %s6
  %s8 = sld [smem:[#allocation0]]
  $region61: #{double_conv.4} parent=0
    _
  %s10 = ssub.s32 1, %s8
  %s11 = scalar_select 0, %s10, %s8
  loop: start=0, step=1, limit=6
  $region2: #{double_conv.4} parent=0 // loop_pre_header
    _
  $region3: #{double_conv.4} parent=0 // loop_header
    %s13 = sphi 0, %s17
    %p14 = scmp.ge.s32.totalorder %s13, 6
    %s20 = sphi 0, %s32
    %s21 = sphi 0, %s28
    %s22 = sphi 0, %s20
    %s23 = sphi 0, %s21
    %s24 = sphi 0, %s22
    %s25 = sphi 0, %s23
    %s37 = sphi 0, %s39
    %s40 = sphi 0, %s37
    %s41 = sphi 0, %s40
    %s57 = sphi 0, %s41
    %s65 = sphi 0, %s67
    %s68 = sphi 0, %s65
    %s69 = sphi 0, %s68
    %s85 = sphi 0, %s69
    %s89 = sphi 0, %s89
    %s91 = sphi 0, %s89
    %s92 = sphi 0, %s91
    %s106 = sphi 0, %s92
    %s110 = sphi 0, %s110
    %s112 = sphi 0, %s110
    %s113 = sphi 0, %s112
    %s127 = sphi 0, %s113
    %s131 = sphi 0, %s131
    %s133 = sphi 0, %s131
    %s134 = sphi 0, %s133
    %s148 = sphi 0, %s134
    %s156 = sphi 0, %s158
    %s159 = sphi 0, %s156
    %s160 = sphi 0, %s159
    %s176 = sphi 0, %s160
    %s184 = sphi 0, %s186
    %s187 = sphi 0, %s184
    %s188 = sphi 0, %s187
    %s204 = sphi 0, %s188
  $region4: #{double_conv.4} parent=0 // loop_header_branch
    %16 = sbr.rel (%p14) target = $region8
  $region5: #{double_conv.4} parent=0 // loop_body
    %s18 = ssub.s32 %s13, 1
    %s19 = ssub.s32 %s13, 2
    %s26 = sadd.s32 1, %s21
    %p27 = scmp.ge.s32.totalorder %s26, 2
    %s28 = scalar_select %p27, 0, %s26
    %s29 = sadd.s32 1, %s20
    %s30 = scalar_select %p27, %s29, %s20
    %p31 = scmp.ge.s32.totalorder %s30, 2
    %s32 = scalar_select %p31, 0, %s30
    %s33 = ssub.s32 %s20, %s32
    %s34 = ssub.s32 %s21, %s28
    %s35 = sor.u32 %s33, %s34
    %p36 = scmp.eq.s32.totalorder %s35, 0
    %s38 = sadd.s32 %s37, 1
    %s39 = scalar_select %p36, %s37, %s38
    %p42 = pneg %p36
    %p43 = scmp.eq.s32.totalorder %s13, 3
    %p44 = por %p42, %p43
    %p45 = scmp.ne.s32.totalorder %s37, %s40
    %p46 = scmp.eq.s32.totalorder %s13, 0
    %p47 = por %p45, %p46
    %p48 = scmp.ne.s32.totalorder %s37, %s40
    %p49 = scmp.eq.s32.totalorder %s18, 3
    %p50 = por %p48, %p49
    %p51 = scmp.ne.s32.totalorder %s40, %s41
    %p52 = scmp.eq.s32.totalorder %s18, 0
    %p53 = por %p51, %p52
    %p54 = scmp.ne.s32.totalorder %s40, %s41
    %p55 = scmp.eq.s32.totalorder %s19, 3
    %p56 = por %p54, %p55
    %p58 = scmp.ne.s32.totalorder %s41, %s57
    %p59 = scmp.eq.s32.totalorder %s19, 0
    %p60 = por %p58, %p59
    %s61 = ssub.s32 %s20, %s32
    %s62 = ssub.s32 %s21, %s28
    %s63 = sor.u32 %s61, %s62
    %p64 = scmp.eq.s32.totalorder %s63, 0
    %s66 = sadd.s32 %s65, 1
    %s67 = scalar_select %p64, %s65, %s66
    %p70 = pneg %p64
    %p71 = scmp.eq.s32.totalorder %s13, 3
    %p72 = por %p70, %p71
    %p73 = scmp.ne.s32.totalorder %s65, %s68
    %p74 = scmp.eq.s32.totalorder %s13, 0
    %p75 = por %p73, %p74
    %p76 = scmp.ne.s32.totalorder %s65, %s68
    %p77 = scmp.eq.s32.totalorder %s18, 3
    %p78 = por %p76, %p77
    %p79 = scmp.ne.s32.totalorder %s68, %s69
    %p80 = scmp.eq.s32.totalorder %s18, 0
    %p81 = por %p79, %p80
    %p82 = scmp.ne.s32.totalorder %s68, %s69
    %p83 = scmp.eq.s32.totalorder %s19, 3
    %p84 = por %p82, %p83
    %p86 = scmp.ne.s32.totalorder %s69, %s85
    %p87 = scmp.eq.s32.totalorder %s19, 0
    %p88 = por %p86, %p87
    %s90 = sadd.s32 %s89, 1
    %p93 = scmp.eq.s32.totalorder %s13, 3
    %p94 = scmp.ne.s32.totalorder %s89, %s91
    %p95 = scmp.eq.s32.totalorder %s13, 0
    %p96 = por %p94, %p95
    %p97 = scmp.ne.s32.totalorder %s89, %s91
    %p98 = scmp.eq.s32.totalorder %s18, 3
    %p99 = por %p97, %p98
    %p100 = scmp.ne.s32.totalorder %s91, %s92
    %p101 = scmp.eq.s32.totalorder %s18, 0
    %p102 = por %p100, %p101
    %p103 = scmp.ne.s32.totalorder %s91, %s92
    %p104 = scmp.eq.s32.totalorder %s19, 3
    %p105 = por %p103, %p104
    %p107 = scmp.ne.s32.totalorder %s92, %s106
    %p108 = scmp.eq.s32.totalorder %s19, 0
    %p109 = por %p107, %p108
    %s111 = sadd.s32 %s110, 1
    %p114 = scmp.eq.s32.totalorder %s13, 3
    %p115 = scmp.ne.s32.totalorder %s110, %s112
    %p116 = scmp.eq.s32.totalorder %s13, 0
    %p117 = por %p115, %p116
    %p118 = scmp.ne.s32.totalorder %s110, %s112
    %p119 = scmp.eq.s32.totalorder %s18, 3
    %p120 = por %p118, %p119
    %p121 = scmp.ne.s32.totalorder %s112, %s113
    %p122 = scmp.eq.s32.totalorder %s18, 0
    %p123 = por %p121, %p122
    %p124 = scmp.ne.s32.totalorder %s112, %s113
    %p125 = scmp.eq.s32.totalorder %s19, 3
    %p126 = por %p124, %p125
    %p128 = scmp.ne.s32.totalorder %s113, %s127
    %p129 = scmp.eq.s32.totalorder %s19, 0
    %p130 = por %p128, %p129
    %s132 = sadd.s32 %s131, 1
    %p135 = scmp.eq.s32.totalorder %s13, 3
    %p136 = scmp.ne.s32.totalorder %s131, %s133
    %p137 = scmp.eq.s32.totalorder %s13, 0
    %p138 = por %p136, %p137
    %p139 = scmp.ne.s32.totalorder %s131, %s133
    %p140 = scmp.eq.s32.totalorder %s18, 3
    %p141 = por %p139, %p140
    %p142 = scmp.ne.s32.totalorder %s133, %s134
    %p143 = scmp.eq.s32.totalorder %s18, 0
    %p144 = por %p142, %p143
    %p145 = scmp.ne.s32.totalorder %s133, %s134
    %p146 = scmp.eq.s32.totalorder %s19, 3
    %p147 = por %p145, %p146
    %p149 = scmp.ne.s32.totalorder %s134, %s148
    %p150 = scmp.eq.s32.totalorder %s19, 0
    %p151 = por %p149, %p150
    %s152 = ssub.s32 %s20, %s32
    %s153 = ssub.s32 %s21, %s28
    %s154 = sor.u32 %s152, %s153
    %p155 = scmp.eq.s32.totalorder %s154, 0
    %s157 = sadd.s32 %s156, 1
    %s158 = scalar_select %p155, %s156, %s157
    %p161 = pneg %p155
    %p162 = scmp.eq.s32.totalorder %s13, 3
    %p163 = por %p161, %p162
    %p164 = scmp.ne.s32.totalorder %s156, %s159
    %p165 = scmp.eq.s32.totalorder %s13, 0
    %p166 = por %p164, %p165
    %p167 = scmp.ne.s32.totalorder %s156, %s159
    %p168 = scmp.eq.s32.totalorder %s18, 3
    %p169 = por %p167, %p168
    %p170 = scmp.ne.s32.totalorder %s159, %s160
    %p171 = scmp.eq.s32.totalorder %s18, 0
    %p172 = por %p170, %p171
    %p173 = scmp.ne.s32.totalorder %s159, %s160
    %p174 = scmp.eq.s32.totalorder %s19, 3
    %p175 = por %p173, %p174
    %p177 = scmp.ne.s32.totalorder %s160, %s176
    %p178 = scmp.eq.s32.totalorder %s19, 0
    %p179 = por %p177, %p178
    %s180 = ssub.s32 %s20, %s32
    %s181 = ssub.s32 %s21, %s28
    %s182 = sor.u32 %s180, %s181
    %p183 = scmp.eq.s32.totalorder %s182, 0
    %s185 = sadd.s32 %s184, 1
    %s186 = scalar_select %p183, %s184, %s185
    %p189 = pneg %p183
    %p190 = scmp.eq.s32.totalorder %s13, 3
    %p191 = por %p189, %p190
    %p192 = scmp.ne.s32.totalorder %s184, %s187
    %p193 = scmp.eq.s32.totalorder %s13, 0
    %p194 = por %p192, %p193
    %p195 = scmp.ne.s32.totalorder %s184, %s187
    %p196 = scmp.eq.s32.totalorder %s18, 3
    %p197 = por %p195, %p196
    %p198 = scmp.ne.s32.totalorder %s187, %s188
    %p199 = scmp.eq.s32.totalorder %s18, 0
    %p200 = por %p198, %p199
    %p201 = scmp.ne.s32.totalorder %s187, %s188
    %p202 = scmp.eq.s32.totalorder %s19, 3
    %p203 = por %p201, %p202
    %p205 = scmp.ne.s32.totalorder %s188, %s204
    %p206 = scmp.eq.s32.totalorder %s19, 0
    %p207 = por %p205, %p206
    %p208 = scmp.le.s32.totalorder 1, %s13
    %p209 = scmp.lt.s32.totalorder %s13, 5
    %p210 = pnand %p208, %p209
    %p211 = pneg %p210
    // Predicated region
    $region9: #{double_conv.4} parent=5 // pred_check
      _
    $region10: #{double_conv.4} parent=5 // pred_check_branch
      %213 = sbr.rel (%p210) target = $region12
    $region11: #{double_conv.4} parent=5 // pred_region
      %s214 = ssub.s32 %s13, 1
      // Predicated region
      $region13: #{double_conv.4} parent=11 // pred_check
        %p215 = pneg %p102
      $region14: #{double_conv.4} parent=11 // pred_check_branch
        %217 = sbr.rel (%p215) target = $region16
      $region15: #{double_conv.4} parent=11 // pred_region
        _
      $region16: #{double_conv.4} parent=11 // pred_fallthru
        _
      // Predicated region
      $region17: #{double_conv.4} parent=11 // pred_check
        %p218 = pneg %p123
      $region18: #{double_conv.4} parent=11 // pred_check_branch
        %220 = sbr.rel (%p218) target = $region20
      $region19: #{double_conv.4} parent=11 // pred_region
        _
      $region20: #{double_conv.4} parent=11 // pred_fallthru
        _
      // Predicated region
      $region21: #{double_conv.4} parent=11 // pred_check
        %p221 = pneg %p144
      $region22: #{double_conv.4} parent=11 // pred_check_branch
        %223 = sbr.rel (%p221) target = $region24
      $region23: #{double_conv.4} parent=11 // pred_region
        _
      $region24: #{double_conv.4} parent=11 // pred_fallthru
        _
    $region12: #{double_conv.4} parent=5 // pred_fallthru
      _
    %p224 = scmp.lt.s32.totalorder %s13, 4
    // Predicated region
    $region25: #{double_conv.4} parent=5 // pred_check
      %p225 = pneg %p224
    $region26: #{double_conv.4} parent=5 // pred_check_branch
      %227 = sbr.rel (%p225) target = $region28
    $region27: #{double_conv.4} parent=5 // pred_region
      // Predicated region
      $region29: #{double_conv.4} parent=27 // pred_check
        %p228 = pneg %p47
      $region30: #{double_conv.4} parent=27 // pred_check_branch
        %230 = sbr.rel (%p228) target = $region32
      $region31: #{double_conv.4} parent=27 // pred_region
        %s231 = smul.u32 16, %s21
        %p232 = scmp.lt.s32.totalorder %s20, 1
        %s233 = scalar_select %p232, %s20, 1
        %p234 = scmp.lt.s32.totalorder %s231, 31
        %s235 = scalar_select %p234, %s231, 31
        %s236 = smul.addr %s233, 32
        %s237 = sadd.s32 %s235, %s236
        %s238 = smul.addr %s237, 4
        %s239 = scalar_lea.vmem %s0, %s238
        %s240 = smul.u32 16, %s21
      $region32: #{double_conv.4} parent=27 // pred_fallthru
        _
      // Predicated region
      $region33: #{double_conv.4} parent=27 // pred_check
        %p241 = pneg %p75
      $region34: #{double_conv.4} parent=27 // pred_check_branch
        %243 = sbr.rel (%p241) target = $region36
      $region35: #{double_conv.4} parent=27 // pred_region
        %p244 = scmp.lt.s32.totalorder %s20, 1
        %s245 = scalar_select %p244, %s20, 1
        %p246 = scmp.lt.s32.totalorder %s21, 1
        %s247 = scalar_select %p246, %s21, 1
        %s248 = smul.addr %s247, 4
        %s249 = smul.addr %s245, 8
        %s250 = sadd.s32 %s248, %s249
        %s251 = smul.addr %s250, 4
        %s252 = scalar_lea.vmem %s1, %s251
      $region36: #{double_conv.4} parent=27 // pred_fallthru
        _
    $region28: #{double_conv.4} parent=5 // pred_fallthru
      _
    %p253 = scmp.le.s32.totalorder 1, %s13
    %p254 = scmp.lt.s32.totalorder %s13, 5
    %p255 = pnand %p253, %p254
    %p256 = pneg %p255
    // Predicated region
    $region37: #{double_conv.4} parent=5 // pred_check
      _
    $region38: #{double_conv.4} parent=5 // pred_check_branch
      %258 = sbr.rel (%p255) target = $region40
    $region39: #{double_conv.4} parent=5 // pred_region
      %s259 = ssub.s32 %s13, 1
      %s260 = smul.u32 16, %s23
      %p261 = scmp.lt.s32.totalorder %s22, 1
      %s262 = scalar_select %p261, %s22, 1
      %p263 = scmp.lt.s32.totalorder %s260, 31
      %s264 = scalar_select %p263, %s260, 31
      %s265 = smul.addr %s262, 32
      %s266 = sadd.s32 %s264, %s265
      %s267 = smul.addr %s266, 4
      %s268 = scalar_lea.vmem %s0, %s267
      %p269 = pneg %p53
      %p270 = pneg %p50
      %p271 = scmp.lt.s32.totalorder %s22, 1
      %s272 = scalar_select %p271, %s22, 1
      %p273 = scmp.lt.s32.totalorder %s23, 1
      %s274 = scalar_select %p273, %s23, 1
      %s275 = smul.addr %s274, 4
      %s276 = smul.addr %s272, 8
      %s277 = sadd.s32 %s275, %s276
      %s278 = smul.addr %s277, 4
      %s279 = scalar_lea.vmem %s1, %s278
      %p280 = pneg %p81
      %p281 = pneg %p78
      %p282 = pneg %p102
      %p283 = pneg %p99
      %p284 = pneg %p123
      %p285 = pneg %p120
      %p286 = pneg %p144
      %p287 = pneg %p141
      %p288 = pneg %p172
      %p289 = pneg %p169
      %s290 = smul.u32 16, %s23
      %p291 = scmp.lt.s32.totalorder %s22, 1
      %s292 = scalar_select %p291, %s22, 1
      %p293 = scmp.lt.s32.totalorder %s290, 31
      %s294 = scalar_select %p293, %s290, 31
      %s295 = smul.addr %s292, 32
      %s296 = sadd.s32 %s294, %s295
      %s297 = smul.addr %s296, 4
      %s298 = scalar_lea.vmem %s5, %s297
      %p299 = pneg %p200
      %p300 = pneg %p197
      %p301 = scmp.lt.s32.totalorder %s22, 1
      %s302 = scalar_select %p301, %s22, 1
      %p303 = scmp.lt.s32.totalorder %s23, 1
      %s304 = scalar_select %p303, %s23, 1
      %s305 = smul.addr %s302, 2
      %s306 = sadd.s32 %s304, %s305
      %s307 = smul.addr %s306, 2
      %s308 = scalar_lea.vmem %s6, %s307
      %s309 = smul.u32 16, %s23
      %p310 = scmp.lt.s32.totalorder %s22, 1
      %s311 = scalar_select %p310, %s22, 1
      %p312 = scmp.lt.s32.totalorder %s309, 31
      %s313 = scalar_select %p312, %s309, 31
      %s314 = smul.addr %s311, 32
      %s315 = sadd.s32 %s313, %s314
      %s316 = smul.addr %s315, 4
      %s317 = scalar_lea.vmem %s0, %s316
      %s318 = smul.u32 16, %s23
      %p319 = scmp.lt.s32.totalorder %s22, 1
      %s320 = scalar_select %p319, %s22, 1
      %p321 = scmp.lt.s32.totalorder %s23, 1
      %s322 = scalar_select %p321, %s23, 1
      %s323 = smul.addr %s322, 4
      %s324 = smul.addr %s320, 8
      %s325 = sadd.s32 %s323, %s324
      %s326 = smul.addr %s325, 4
      %s327 = scalar_lea.vmem %s1, %s326
      %s328 = smul.u32 16, %s23
      %p329 = scmp.lt.s32.totalorder %s22, 1
      %s330 = scalar_select %p329, %s22, 1
      %p331 = scmp.lt.s32.totalorder %s328, 31
      %s332 = scalar_select %p331, %s328, 31
      %s333 = smul.addr %s330, 32
      %s334 = sadd.s32 %s332, %s333
      %s335 = smul.addr %s334, 4
      %s336 = scalar_lea.vmem %s5, %s335
      %s337 = smul.u32 16, %s23
      %p338 = scmp.lt.s32.totalorder %s22, 1
      %s339 = scalar_select %p338, %s22, 1
      %p340 = scmp.lt.s32.totalorder %s23, 1
      %s341 = scalar_select %p340, %s23, 1
      %s342 = smul.addr %s339, 2
      %s343 = sadd.s32 %s341, %s342
      %s344 = smul.addr %s343, 2
      %s345 = scalar_lea.vmem %s6, %s344
      %v347 = vld [vmem:[%s317] sm:$0xf]
      %v348 = vld [vmem:[%s317 + $0x4] sm:$0xf]
      %v349 = vld [vmem:[%s317 + $0x8] sm:$0xf]
      %v350 = vld [vmem:[%s317 + $0xc] sm:$0xf]
      %v351 = vld [vmem:[%s317 + $0x10] sm:$0xf]
      %v352 = vld [vmem:[%s317 + $0x14] sm:$0xf]
      %v353 = vld [vmem:[%s317 + $0x18] sm:$0xf]
      %v354 = vld [vmem:[%s317 + $0x1c] sm:$0xf]
      %v355 = vld [vmem:[%s317 + $0x20] sm:$0xf]
      %v356 = vld [vmem:[%s317 + $0x24] sm:$0xf]
      %v357 = vld [vmem:[%s317 + $0x28] sm:$0xf]
      %v358 = vld [vmem:[%s317 + $0x2c] sm:$0xf]
      %v359 = vld [vmem:[%s317 + $0x30] sm:$0xf]
      %v360 = vld [vmem:[%s317 + $0x34] sm:$0xf]
      %v361 = vld [vmem:[%s317 + $0x38] sm:$0xf]
      %v362 = vld [vmem:[%s317 + $0x3c] sm:$0xf]
      %v363 = vunpack.c.l.bf16 %v347
      %v364 = vunpack.c.l.bf16 %v348
      %v365 = vunpack.c.l.bf16 %v349
      %v366 = vunpack.c.l.bf16 %v350
      %v367 = vunpack.c.l.bf16 %v351
      %v368 = vunpack.c.l.bf16 %v352
      %v369 = vunpack.c.l.bf16 %v353
      %v370 = vunpack.c.l.bf16 %v354
      %v371 = vunpack.c.l.bf16 %v355
      %v372 = vunpack.c.l.bf16 %v356
      %v373 = vunpack.c.l.bf16 %v357
      %v374 = vunpack.c.l.bf16 %v358
      %v375 = vunpack.c.l.bf16 %v359
      %v376 = vunpack.c.l.bf16 %v360
      %v377 = vunpack.c.l.bf16 %v361
      %v378 = vunpack.c.l.bf16 %v362
      %v379 = vld [vmem:[%s2] sm:$0x1]
      %v381 = vlaneseq
      %v382 = vshrl.u32 %v381, 7
      %v383 = vsub.s32 0, %v382
      %v384 = vrot.slane %v379, %v383
      %v386 = vmul.f32 %v363, %v384
      %v387 = vmul.f32 %v364, %v384
      %v388 = vmul.f32 %v365, %v384
      %v389 = vmul.f32 %v366, %v384
      %v390 = vmul.f32 %v367, %v384
      %v391 = vmul.f32 %v368, %v384
      %v392 = vmul.f32 %v369, %v384
      %v393 = vmul.f32 %v370, %v384
      %v394 = vmul.f32 %v371, %v384
      %v395 = vmul.f32 %v372, %v384
      %v396 = vmul.f32 %v373, %v384
      %v397 = vmul.f32 %v374, %v384
      %v398 = vmul.f32 %v375, %v384
      %v399 = vmul.f32 %v376, %v384
      %v400 = vmul.f32 %v377, %v384
      %v401 = vmul.f32 %v378, %v384
      %v402 = vld [vmem:[%s3] sm:$0x1]
      %v404 = vlaneseq
      %v405 = vshrl.u32 %v404, 7
      %v406 = vsub.s32 0, %v405
      %v407 = vrot.slane %v402, %v406
      %v409 = vadd.f32 %v386, %v407
      %v410 = vadd.f32 %v387, %v407
      %v411 = vadd.f32 %v388, %v407
      %v412 = vadd.f32 %v389, %v407
      %v413 = vadd.f32 %v390, %v407
      %v414 = vadd.f32 %v391, %v407
      %v415 = vadd.f32 %v392, %v407
      %v416 = vadd.f32 %v393, %v407
      %v417 = vadd.f32 %v394, %v407
      %v418 = vadd.f32 %v395, %v407
      %v419 = vadd.f32 %v396, %v407
      %v420 = vadd.f32 %v397, %v407
      %v421 = vadd.f32 %v398, %v407
      %v422 = vadd.f32 %v399, %v407
      %v423 = vadd.f32 %v400, %v407
      %v424 = vadd.f32 %v401, %v407
      %v425 = vmax.f32 %v409, 0.0
      %v426 = vmax.f32 %v410, 0.0
      %v427 = vmax.f32 %v411, 0.0
      %v428 = vmax.f32 %v412, 0.0
      %v429 = vmax.f32 %v413, 0.0
      %v430 = vmax.f32 %v414, 0.0
      %v431 = vmax.f32 %v415, 0.0
      %v432 = vmax.f32 %v416, 0.0
      %v433 = vmax.f32 %v417, 0.0
      %v434 = vmax.f32 %v418, 0.0
      %v435 = vmax.f32 %v419, 0.0
      %v436 = vmax.f32 %v420, 0.0
      %v437 = vmax.f32 %v421, 0.0
      %v438 = vmax.f32 %v422, 0.0
      %v439 = vmax.f32 %v423, 0.0
      %v440 = vmax.f32 %v424, 0.0
      %v441 = vpack.c.bf16 %v426, %v425
      %v442 = vpack.c.bf16 %v428, %v427
      %v443 = vpack.c.bf16 %v430, %v429
      %v444 = vpack.c.bf16 %v432, %v431
      %v445 = vpack.c.bf16 %v434, %v433
      %v446 = vpack.c.bf16 %v436, %v435
      %v447 = vpack.c.bf16 %v438, %v437
      %v448 = vpack.c.bf16 %v440, %v439
      %v449 = vld [vmem:[%s327] sm:$0xf]
      %v450 = vld [vmem:[%s327 + $0x4] sm:$0xf]
      %v451 = vld [vmem:[%s327 + $0x8] sm:$0xf]
      %v452 = vld [vmem:[%s327 + $0xc] sm:$0xf]
      %vm453 = vcmask 1040384
      %vm454 = vsmask.f32 256
      %vm455 = vmand %vm453, %vm454
      %v456 = vld [vmem:[#allocation2] sm:$0x1]
      %v457 = vsel %vm455, 0, %v456
      %458 = vst [vmem:[#allocation2] sm:$0x1] %v457
      %vm459 = vsmask.f32 7938
      %vm460 = vmand %vm453, %vm459
      %v461 = vld [vmem:[#allocation2 + $0x8] sm:$0x1]
      %v462 = vsel %vm460, 0, %v461
      %463 = vst [vmem:[#allocation2 + $0x8] sm:$0x1] %v462
      %vm464 = vcmask 1041409
      %vm465 = vsmask.f32 1280
      %vm466 = vmand %vm464, %vm465
      %v467 = vld [vmem:[#allocation2 + $0x8] sm:$0x2]
      %v468 = vsel %vm466, 0, %v467
      %469 = vst [vmem:[#allocation2 + $0x8] sm:$0x2] %v468
      %vm470 = vsmask.f32 7942
      %vm471 = vmand %vm464, %vm470
      %v472 = vld [vmem:[#allocation2 + $0x10] sm:$0x2]
      %v473 = vsel %vm471, 0, %v472
      %474 = vst [vmem:[#allocation2 + $0x10] sm:$0x2] %v473
      %vm475 = vcmask 1042434
      %vm476 = vsmask.f32 2304
      %vm477 = vmand %vm475, %vm476
      %v478 = vld [vmem:[#allocation2 + $0x10] sm:$0x4]
      %v479 = vsel %vm477, 0, %v478
      %480 = vst [vmem:[#allocation2 + $0x10] sm:$0x4] %v479
      %vm481 = vsmask.f32 7946
      %vm482 = vmand %vm475, %vm481
      %v483 = vld [vmem:[#allocation2 + $0x18] sm:$0x4]
      %v484 = vsel %vm482, 0, %v483
      %485 = vst [vmem:[#allocation2 + $0x18] sm:$0x4] %v484
      %vm486 = vcmask 1043459
      %vm487 = vsmask.f32 3328
      %vm488 = vmand %vm486, %vm487
      %v489 = vld [vmem:[#allocation2 + $0x18] sm:$0x8]
      %v490 = vsel %vm488, 0, %v489
      %491 = vst [vmem:[#allocation2 + $0x18] sm:$0x8] %v490
      %vm492 = vsmask.f32 7950
      %vm493 = vmand %vm486, %vm492
      %v494 = vld [vmem:[#allocation2 + $0x20] sm:$0x8]
      %v495 = vsel %vm493, 0, %v494
      %496 = vst [vmem:[#allocation2 + $0x20] sm:$0x8] %v495
      %v497 = vld [vmem:[#allocation2 + $0x24] sm:$0x1]
      %v498 = vsel %vm455, 0, %v497
      %499 = vst [vmem:[#allocation2 + $0x24] sm:$0x1] %v498
      %v500 = vld [vmem:[#allocation2 + $0x2c] sm:$0x1]
      %v501 = vsel %vm460, 0, %v500
      %502 = vst [vmem:[#allocation2 + $0x2c] sm:$0x1] %v501
      %v503 = vld [vmem:[#allocation2 + $0x2c] sm:$0x2]
      %v504 = vsel %vm466, 0, %v503
      %505 = vst [vmem:[#allocation2 + $0x2c] sm:$0x2] %v504
      %v506 = vld [vmem:[#allocation2 + $0x34] sm:$0x2]
      %v507 = vsel %vm471, 0, %v506
      %508 = vst [vmem:[#allocation2 + $0x34] sm:$0x2] %v507
      %v509 = vld [vmem:[#allocation2 + $0x34] sm:$0x4]
      %v510 = vsel %vm477, 0, %v509
      %511 = vst [vmem:[#allocation2 + $0x34] sm:$0x4] %v510
      %v512 = vld [vmem:[#allocation2 + $0x3c] sm:$0x4]
      %v513 = vsel %vm482, 0, %v512
      %514 = vst [vmem:[#allocation2 + $0x3c] sm:$0x4] %v513
      %v515 = vld [vmem:[#allocation2 + $0x3c] sm:$0x8]
      %v516 = vsel %vm488, 0, %v515
      %517 = vst [vmem:[#allocation2 + $0x3c] sm:$0x8] %v516
      %v518 = vld [vmem:[#allocation2 + $0x44] sm:$0x8]
      %v519 = vsel %vm493, 0, %v518
      %520 = vst [vmem:[#allocation2 + $0x44] sm:$0x8] %v519
      %v521 = vld [vmem:[#allocation2 + $0x48] sm:$0x1]
      %v522 = vsel %vm455, 0, %v521
      %523 = vst [vmem:[#allocation2 + $0x48] sm:$0x1] %v522
      %v524 = vld [vmem:[#allocation2 + $0x50] sm:$0x1]
      %v525 = vsel %vm460, 0, %v524
      %526 = vst [vmem:[#allocation2 + $0x50] sm:$0x1] %v525
      %v527 = vld [vmem:[#allocation2 + $0x50] sm:$0x2]
      %v528 = vsel %vm466, 0, %v527
      %529 = vst [vmem:[#allocation2 + $0x50] sm:$0x2] %v528
      %v530 = vld [vmem:[#allocation2 + $0x58] sm:$0x2]
      %v531 = vsel %vm471, 0, %v530
      %532 = vst [vmem:[#allocation2 + $0x58] sm:$0x2] %v531
      %vm533 = vsmask.f32 4368
      %vm534 = vmor %vm454, %vm533
      %v536 = vshrl.u32 %v449, 16
      %v538 = vrot.slane %v536, 7
      %v539 = vshll.u32 %v449, 16
      %v541 = vor.u32 %v538, %v539
      %v542 = vrot.slane %v538, 4
      %v544 = vshrl.u32 %v450, 16
      %v546 = vrot.slane %v544, 7
      %v547 = vshll.u32 %v450, 16
      %v549 = vor.u32 %v546, %v547
      %v550 = vsel %vm534, %v542, %v549
      %v551 = vrot.slane %v546, 4
      %vm555 = vcmask 1043456
      %vm556 = vmand %vm555, %vm459
      %v557 = vld [vmem:[#allocation2] sm:$0xf]
      %v558 = vsel %vm556, %v541, %v557
      %559 = vst [vmem:[#allocation2] sm:$0xf] %v558
      %560 = vst [vmem:[#allocation2 + $0x4] sm:$0xf] %v550
      %v561 = vld [vmem:[#allocation2 + $0x8] sm:$0x1]
      %v562 = vsel %vm455, %v551, %v561
      %563 = vst [vmem:[#allocation2 + $0x8] sm:$0x1] %v562
      %vm564 = vsmask.f32 5392
      %vm565 = vmor %vm465, %vm564
      %v567 = vshrl.u32 %v451, 16
      %v569 = vrot.slane %v567, 6
      %v570 = vshll.u32 %v451, 16
      %v572 = vrot.slane %v570, 7
      %v573 = vor.u32 %v569, %v572
      %v574 = vrot.slane %v573, 4
      %v576 = vshrl.u32 %v452, 16
      %v578 = vrot.slane %v576, 6
      %v579 = vshll.u32 %v452, 16
      %v581 = vrot.slane %v579, 7
      %v582 = vor.u32 %v578, %v581
      %v583 = vsel %vm565, %v574, %v582
      %v584 = vrot.slane %v582, 4
      %vm588 = vcmask 1043457
      %vm589 = vmand %vm588, %vm470
      %v590 = vld [vmem:[#allocation2 + $0x50] sm:$0xe]
      %v591 = vsel %vm589, %v573, %v590
      %592 = vst [vmem:[#allocation2 + $0x50] sm:$0xe] %v591
      %593 = vst [vmem:[#allocation2 + $0x54] sm:$0xf] %v583
      %vm594 = vcmask 1041408
      %vm595 = vmand %vm594, %vm465
      %v596 = vld [vmem:[#allocation2 + $0x58] sm:$0x3]
      %v597 = vsel %vm595, %v584, %v596
      %598 = vst [vmem:[#allocation2 + $0x58] sm:$0x3] %v597
      %v600 = vunpack.c.l.b16 %v441
      %v601 = vunpack.c.h.b16 %v441
      %v602 = vpack.c.b16 %v600, %v600
      %v603 = vpack.c.b16 %v601, %v601
      %v605 = vshrl.u32 %v602, 16
      %v607 = vrot.slane %v605, 6
      %v608 = vshll.u32 %v602, 16
      %v610 = vrot.slane %v608, 7
      %v611 = vor.u32 %v607, %v610
      %v612 = vrot.slane %v611, 4
      %v614 = vshrl.u32 %v603, 16
      %v616 = vrot.slane %v614, 6
      %v617 = vshll.u32 %v603, 16
      %v619 = vrot.slane %v617, 7
      %v620 = vor.u32 %v616, %v619
      %v621 = vsel %vm565, %v612, %v620
      %v622 = vrot.slane %v620, 4
      %v626 = vld [vmem:[#allocation2 + $0x8] sm:$0xe]
      %v627 = vsel %vm589, %v611, %v626
      %628 = vst [vmem:[#allocation2 + $0x8] sm:$0xe] %v627
      %629 = vst [vmem:[#allocation2 + $0xc] sm:$0xf] %v621
      %v630 = vld [vmem:[#allocation2 + $0x10] sm:$0x3]
      %v631 = vsel %vm595, %v622, %v630
      %632 = vst [vmem:[#allocation2 + $0x10] sm:$0x3] %v631
      %v634 = vunpack.c.l.b16 %v442
      %v635 = vunpack.c.h.b16 %v442
      %v636 = vpack.c.b16 %v634, %v634
      %v637 = vpack.c.b16 %v635, %v635
      %vm638 = vsmask.f32 6416
      %vm639 = vmor %vm476, %vm638
      %v641 = vshrl.u32 %v636, 16
      %v643 = vrot.slane %v641, 5
      %v644 = vshll.u32 %v636, 16
      %v646 = vrot.slane %v644, 6
      %v647 = vor.u32 %v643, %v646
      %v648 = vrot.slane %v647, 4
      %v650 = vshrl.u32 %v637, 16
      %v652 = vrot.slane %v650, 5
      %v653 = vshll.u32 %v637, 16
      %v655 = vrot.slane %v653, 6
      %v656 = vor.u32 %v652, %v655
      %v657 = vsel %vm639, %v648, %v656
      %v658 = vrot.slane %v656, 4
      %vm662 = vcmask 1043458
      %vm663 = vmand %vm662, %vm481
      %v664 = vld [vmem:[#allocation2 + $0x10] sm:$0xc]
      %v665 = vsel %vm663, %v647, %v664
      %666 = vst [vmem:[#allocation2 + $0x10] sm:$0xc] %v665
      %667 = vst [vmem:[#allocation2 + $0x14] sm:$0xf] %v657
      %vm668 = vcmask 1042432
      %vm669 = vmand %vm668, %vm476
      %v670 = vld [vmem:[#allocation2 + $0x18] sm:$0x7]
      %v671 = vsel %vm669, %v658, %v670
      %672 = vst [vmem:[#allocation2 + $0x18] sm:$0x7] %v671
      %v674 = vunpack.c.l.b16 %v443
      %v675 = vunpack.c.h.b16 %v443
      %v676 = vpack.c.b16 %v674, %v674
      %v677 = vpack.c.b16 %v675, %v675
      %vm678 = vsmask.f32 7440
      %vm679 = vmor %vm487, %vm678
      %v681 = vshll.u32 %v676, 16
      %v683 = vrot.slane %v681, 5
      %v684 = vshrl.u32 %v676, 16
      %v686 = vrot.slane %v684, 4
      %v687 = vor.u32 %v686, %v683
      %v688 = vrot.slane %v687, 4
      %v690 = vshll.u32 %v677, 16
      %v692 = vrot.slane %v690, 5
      %v693 = vsel %vm679, %v688, %v692
      %v694 = vshrl.u32 %v677, 16
      %v696 = vrot.slane %v694, 4
      %v697 = vor.u32 %v696, %v692
      %v698 = vrot.slane %v697, 4
      %v702 = vld [vmem:[#allocation2 + $0x18] sm:$0x8]
      %v703 = vsel %vm493, %v683, %v702
      %704 = vst [vmem:[#allocation2 + $0x18] sm:$0x8] %v703
      %705 = vst [vmem:[#allocation2 + $0x1c] sm:$0xf] %v693
      %vm706 = vmand %vm555, %vm487
      %v707 = vld [vmem:[#allocation2 + $0x20] sm:$0xf]
      %v708 = vsel %vm706, %v698, %v707
      %709 = vst [vmem:[#allocation2 + $0x20] sm:$0xf] %v708
      %v711 = vunpack.c.l.b16 %v444
      %v712 = vunpack.c.h.b16 %v444
      %v713 = vpack.c.b16 %v711, %v711
      %v714 = vpack.c.b16 %v712, %v712
      %v716 = vshrl.u32 %v713, 16
      %v718 = vrot.slane %v716, 7
      %v719 = vshll.u32 %v713, 16
      %v721 = vor.u32 %v718, %v719
      %v722 = vrot.slane %v718, 4
      %v724 = vshrl.u32 %v714, 16
      %v726 = vrot.slane %v724, 7
      %v727 = vshll.u32 %v714, 16
      %v729 = vor.u32 %v726, %v727
      %v730 = vsel %vm534, %v722, %v729
      %v731 = vrot.slane %v726, 4
      %v735 = vld [vmem:[#allocation2 + $0x24] sm:$0xf]
      %v736 = vsel %vm556, %v721, %v735
      %737 = vst [vmem:[#allocation2 + $0x24] sm:$0xf] %v736
      %738 = vst [vmem:[#allocation2 + $0x28] sm:$0xf] %v730
      %v739 = vld [vmem:[#allocation2 + $0x2c] sm:$0x1]
      %v740 = vsel %vm455, %v731, %v739
      %741 = vst [vmem:[#allocation2 + $0x2c] sm:$0x1] %v740
      %v743 = vunpack.c.l.b16 %v445
      %v744 = vunpack.c.h.b16 %v445
      %v745 = vpack.c.b16 %v743, %v743
      %v746 = vpack.c.b16 %v744, %v744
      %v748 = vshrl.u32 %v745, 16
      %v750 = vrot.slane %v748, 6
      %v751 = vshll.u32 %v745, 16
      %v753 = vrot.slane %v751, 7
      %v754 = vor.u32 %v750, %v753
      %v755 = vrot.slane %v754, 4
      %v757 = vshrl.u32 %v746, 16
      %v759 = vrot.slane %v757, 6
      %v760 = vshll.u32 %v746, 16
      %v762 = vrot.slane %v760, 7
      %v763 = vor.u32 %v759, %v762
      %v764 = vsel %vm565, %v755, %v763
      %v765 = vrot.slane %v763, 4
      %v769 = vld [vmem:[#allocation2 + $0x2c] sm:$0xe]
      %v770 = vsel %vm589, %v754, %v769
      %771 = vst [vmem:[#allocation2 + $0x2c] sm:$0xe] %v770
      %772 = vst [vmem:[#allocation2 + $0x30] sm:$0xf] %v764
      %v773 = vld [vmem:[#allocation2 + $0x34] sm:$0x3]
      %v774 = vsel %vm595, %v765, %v773
      %775 = vst [vmem:[#allocation2 + $0x34] sm:$0x3] %v774
      %v777 = vunpack.c.l.b16 %v446
      %v778 = vunpack.c.h.b16 %v446
      %v779 = vpack.c.b16 %v777, %v777
      %v780 = vpack.c.b16 %v778, %v778
      %v782 = vshrl.u32 %v779, 16
      %v784 = vrot.slane %v782, 5
      %v785 = vshll.u32 %v779, 16
      %v787 = vrot.slane %v785, 6
      %v788 = vor.u32 %v784, %v787
      %v789 = vrot.slane %v788, 4
      %v791 = vshrl.u32 %v780, 16
      %v793 = vrot.slane %v791, 5
      %v794 = vshll.u32 %v780, 16
      %v796 = vrot.slane %v794, 6
      %v797 = vor.u32 %v793, %v796
      %v798 = vsel %vm639, %v789, %v797
      %v799 = vrot.slane %v797, 4
      %v803 = vld [vmem:[#allocation2 + $0x34] sm:$0xc]
      %v804 = vsel %vm663, %v788, %v803
      %805 = vst [vmem:[#allocation2 + $0x34] sm:$0xc] %v804
      %806 = vst [vmem:[#allocation2 + $0x38] sm:$0xf] %v798
      %v807 = vld [vmem:[#allocation2 + $0x3c] sm:$0x7]
      %v808 = vsel %vm669, %v799, %v807
      %809 = vst [vmem:[#allocation2 + $0x3c] sm:$0x7] %v808
      %v811 = vunpack.c.l.b16 %v447
      %v812 = vunpack.c.h.b16 %v447
      %v813 = vpack.c.b16 %v811, %v811
      %v814 = vpack.c.b16 %v812, %v812
      %v816 = vshll.u32 %v813, 16
      %v818 = vrot.slane %v816, 5
      %v819 = vshrl.u32 %v813, 16
      %v821 = vrot.slane %v819, 4
      %v822 = vor.u32 %v821, %v818
      %v823 = vrot.slane %v822, 4
      %v825 = vshll.u32 %v814, 16
      %v827 = vrot.slane %v825, 5
      %v828 = vsel %vm679, %v823, %v827
      %v829 = vshrl.u32 %v814, 16
      %v831 = vrot.slane %v829, 4
      %v832 = vor.u32 %v831, %v827
      %v833 = vrot.slane %v832, 4
      %v837 = vld [vmem:[#allocation2 + $0x3c] sm:$0x8]
      %v838 = vsel %vm493, %v818, %v837
      %839 = vst [vmem:[#allocation2 + $0x3c] sm:$0x8] %v838
      %840 = vst [vmem:[#allocation2 + $0x40] sm:$0xf] %v828
      %v841 = vld [vmem:[#allocation2 + $0x44] sm:$0xf]
      %v842 = vsel %vm706, %v833, %v841
      %843 = vst [vmem:[#allocation2 + $0x44] sm:$0xf] %v842
      %v845 = vunpack.c.l.b16 %v448
      %v846 = vunpack.c.h.b16 %v448
      %v847 = vpack.c.b16 %v845, %v845
      %v848 = vpack.c.b16 %v846, %v846
      %v850 = vshrl.u32 %v847, 16
      %v852 = vrot.slane %v850, 7
      %v853 = vshll.u32 %v847, 16
      %v855 = vor.u32 %v852, %v853
      %v856 = vrot.slane %v852, 4
      %v858 = vshrl.u32 %v848, 16
      %v860 = vrot.slane %v858, 7
      %v861 = vshll.u32 %v848, 16
      %v863 = vor.u32 %v860, %v861
      %v864 = vsel %vm534, %v856, %v863
      %v865 = vrot.slane %v860, 4
      %v869 = vld [vmem:[#allocation2 + $0x48] sm:$0xf]
      %v870 = vsel %vm556, %v855, %v869
      %871 = vst [vmem:[#allocation2 + $0x48] sm:$0xf] %v870
      %872 = vst [vmem:[#allocation2 + $0x4c] sm:$0xf] %v864
      %v873 = vld [vmem:[#allocation2 + $0x50] sm:$0x1]
      %v874 = vsel %vm455, %v865, %v873
      %875 = vst [vmem:[#allocation2 + $0x50] sm:$0x1] %v874
      %v876 = vld [vmem:[#allocation2] sm:$0xf]
      %v877 = vld [vmem:[#allocation2 + $0x4] sm:$0xf]
      %v878 = vld [vmem:[#allocation2 + $0x8] sm:$0xf]
      %v879 = vld [vmem:[#allocation2 + $0xc] sm:$0xf]
      %v880 = vld [vmem:[#allocation2 + $0x10] sm:$0xf]
      %v881 = vld [vmem:[#allocation2 + $0x14] sm:$0xf]
      %v882 = vld [vmem:[#allocation2 + $0x18] sm:$0xf]
      %v883 = vld [vmem:[#allocation2 + $0x1c] sm:$0xf]
      %v884 = vld [vmem:[#allocation2 + $0x20] sm:$0xf]
      %v885 = vld [vmem:[#allocation2 + $0x24] sm:$0xf]
      %v886 = vld [vmem:[#allocation2 + $0x28] sm:$0xf]
      %v887 = vld [vmem:[#allocation2 + $0x2c] sm:$0xf]
      %v888 = vld [vmem:[#allocation2 + $0x30] sm:$0xf]
      %v889 = vld [vmem:[#allocation2 + $0x34] sm:$0xf]
      %v890 = vld [vmem:[#allocation2 + $0x38] sm:$0xf]
      %v891 = vld [vmem:[#allocation2 + $0x3c] sm:$0xf]
      %v892 = vld [vmem:[#allocation2 + $0x40] sm:$0xf]
      %v893 = vld [vmem:[#allocation2 + $0x44] sm:$0xf]
      %v894 = vld [vmem:[%s4] sm:$0xf]
      %v895 = vld [vmem:[%s4 + $0x4] sm:$0xf]
      %v896 = vld [vmem:[%s4 + $0x8] sm:$0xf]
      %v897 = vld [vmem:[%s4 + $0xc] sm:$0xf]
      %v898 = vld [vmem:[%s4 + $0x10] sm:$0xf]
      %v899 = vld [vmem:[%s4 + $0x14] sm:$0xf]
      %v900 = vld [vmem:[%s4 + $0x18] sm:$0xf]
      %v901 = vld [vmem:[%s4 + $0x1c] sm:$0xf]
      %v902 = vld [vmem:[%s4 + $0x20] sm:$0xf]
      %v903 = vld [vmem:[%s4 + $0x24] sm:$0xf]
      %v904 = vld [vmem:[%s4 + $0x28] sm:$0xf]
      %v905 = vld [vmem:[%s4 + $0x2c] sm:$0xf]
      %v906 = vld [vmem:[%s4 + $0x30] sm:$0xf]
      %v907 = vld [vmem:[%s4 + $0x34] sm:$0xf]
      %v908 = vld [vmem:[%s4 + $0x38] sm:$0xf]
      %v909 = vld [vmem:[%s4 + $0x3c] sm:$0xf]
      %v910 = vld [vmem:[#allocation2 + $0x48] sm:$0x1]
      %s911 = scalar_lea.vmem %s4, 64
      %v912 = vld [vmem:[%s911] sm:$0xf]
      %v913 = vld [vmem:[%s911 + $0x4] sm:$0xf]
      %v914 = vld [vmem:[%s911 + $0x8] sm:$0xf]
      %v915 = vld [vmem:[%s911 + $0xc] sm:$0xf]
      %v916 = vld [vmem:[%s911 + $0x10] sm:$0xf]
      %v917 = vld [vmem:[%s911 + $0x14] sm:$0xf]
      %v918 = vld [vmem:[%s911 + $0x18] sm:$0xf]
      %v919 = vld [vmem:[%s911 + $0x1c] sm:$0xf]
      %v920 = vld [vmem:[%s911 + $0x20] sm:$0xf]
      %v921 = vld [vmem:[%s911 + $0x24] sm:$0xf]
      %v922 = vld [vmem:[%s911 + $0x28] sm:$0xf]
      %v923 = vld [vmem:[%s911 + $0x2c] sm:$0xf]
      %v924 = vld [vmem:[%s911 + $0x30] sm:$0xf]
      %v925 = vld [vmem:[%s911 + $0x34] sm:$0xf]
      %v926 = vld [vmem:[%s911 + $0x38] sm:$0xf]
      %v927 = vld [vmem:[%s911 + $0x3c] sm:$0xf]
      %v947 = vunpack.c.l.b16 %v876
      %v948 = vunpack.c.l.b16 %v877
      %v949 = vunpack.c.l.b16 %v878
      %v950 = vunpack.c.l.b16 %v879
      %v951 = vunpack.c.l.b16 %v880
      %v952 = vunpack.c.l.b16 %v881
      %v953 = vunpack.c.l.b16 %v882
      %v954 = vunpack.c.l.b16 %v883
      %v955 = vunpack.c.l.b16 %v884
      %v956 = vunpack.c.l.b16 %v885
      %v957 = vunpack.c.l.b16 %v886
      %v958 = vunpack.c.l.b16 %v887
      %v959 = vunpack.c.l.b16 %v888
      %v960 = vunpack.c.l.b16 %v889
      %v961 = vunpack.c.l.b16 %v890
      %v962 = vunpack.c.l.b16 %v891
      %v963 = vunpack.c.l.b16 %v892
      %v964 = vunpack.c.l.b16 %v893
      %v965 = vunpack.c.l.b16 %v910
      %v966 = vpack.c.b16 %v948, %v947
      %v967 = vpack.c.b16 %v950, %v949
      %v968 = vpack.c.b16 %v952, %v951
      %v969 = vpack.c.b16 %v954, %v953
      %v970 = vpack.c.b16 %v956, %v955
      %v971 = vpack.c.b16 %v958, %v957
      %v972 = vpack.c.b16 %v960, %v959
      %v973 = vpack.c.b16 %v962, %v961
      %v974 = vpack.c.b16 %v964, %v963
      %v975 = vpack.c.b16 %v965, %v965
      %vm976 = vsmask.f32 7424
      %v978 = vshrl.u32 %v966, 16
      %v980 = vshll.u32 %v966, 16
      %v982 = vrot.slane %v980, 1
      %v983 = vor.u32 %v978, %v982
      %v985 = vshll.u32 %v967, 16
      %v987 = vrot.slane %v985, 1
      %v988 = vsel %vm976, %v983, %v987
      %v989 = vshrl.u32 %v967, 16
      %v991 = vor.u32 %v989, %v987
      %v993 = vshll.u32 %v968, 16
      %v995 = vrot.slane %v993, 1
      %v996 = vsel %vm976, %v991, %v995
      %v997 = vshrl.u32 %v968, 16
      %v999 = vor.u32 %v997, %v995
      %v1001 = vshll.u32 %v969, 16
      %v1003 = vrot.slane %v1001, 1
      %v1004 = vsel %vm976, %v999, %v1003
      %v1005 = vshrl.u32 %v969, 16
      %v1007 = vor.u32 %v1005, %v1003
      %v1009 = vshll.u32 %v970, 16
      %v1011 = vrot.slane %v1009, 1
      %v1012 = vsel %vm976, %v1007, %v1011
      %v1013 = vshrl.u32 %v970, 16
      %v1015 = vor.u32 %v1013, %v1011
      %v1017 = vshll.u32 %v971, 16
      %v1019 = vrot.slane %v1017, 1
      %v1020 = vsel %vm976, %v1015, %v1019
      %v1021 = vshrl.u32 %v971, 16
      %v1023 = vor.u32 %v1021, %v1019
      %v1025 = vshll.u32 %v972, 16
      %v1027 = vrot.slane %v1025, 1
      %v1028 = vsel %vm976, %v1023, %v1027
      %v1029 = vshrl.u32 %v972, 16
      %v1031 = vor.u32 %v1029, %v1027
      %v1033 = vshll.u32 %v973, 16
      %v1035 = vrot.slane %v1033, 1
      %v1036 = vsel %vm976, %v1031, %v1035
      %v1037 = vshrl.u32 %v973, 16
      %v1039 = vor.u32 %v1037, %v1035
      %v1041 = vshll.u32 %v974, 16
      %v1043 = vrot.slane %v1041, 1
      %v1044 = vsel %vm976, %v1039, %v1043
      %v1045 = vshrl.u32 %v974, 16
      %v1047 = vor.u32 %v1045, %v1043
      %v1049 = vshll.u32 %v975, 16
      %v1051 = vrot.slane %v1049, 1
      %v1052 = vsel %vm976, %v1047, %v1051
      %v1078 = vunpack.c.l.b16 %v912
      %v1079 = vunpack.c.l.b16 %v913
      %v1080 = vunpack.c.l.b16 %v914
      %v1081 = vunpack.c.l.b16 %v915
      %v1082 = vunpack.c.l.b16 %v916
      %v1083 = vunpack.c.l.b16 %v917
      %v1084 = vunpack.c.l.b16 %v918
      %v1085 = vunpack.c.l.b16 %v919
      %v1086 = vunpack.c.l.b16 %v920
      %v1087 = vunpack.c.l.b16 %v921
      %v1088 = vunpack.c.l.b16 %v922
      %v1089 = vunpack.c.l.b16 %v923
      %v1090 = vunpack.c.l.b16 %v924
      %v1091 = vunpack.c.l.b16 %v925
      %v1092 = vunpack.c.l.b16 %v926
      %v1093 = vunpack.c.l.b16 %v927
      %v1094 = vpack.c.b16 %v1079, %v1078
      %v1095 = vpack.c.b16 %v1081, %v1080
      %v1096 = vpack.c.b16 %v1083, %v1082
      %v1097 = vpack.c.b16 %v1085, %v1084
      %v1098 = vpack.c.b16 %v1087, %v1086
      %v1099 = vpack.c.b16 %v1089, %v1088
      %v1100 = vpack.c.b16 %v1091, %v1090
      %v1101 = vpack.c.b16 %v1093, %v1092
      %1110 = vmatprep.subr.bf16.mxu0 0
      %1111 = vmatpush1.bf16.msra.mxu0 %v1094
      %1112 = vmatprep.subr.bf16.mxu0 0
      %1113 = vmatpush1.bf16.msra.mxu0 %v1095
      %1114 = vmatprep.subr.bf16.mxu0 0
      %1115 = vmatpush1.bf16.msra.mxu0 %v1096
      %1116 = vmatprep.subr.bf16.mxu0 0
      %1117 = vmatpush1.bf16.msra.mxu0 %v1097
      %1118 = vmatprep.subr.bf16.mxu0 0
      %1119 = vmatpush1.bf16.msra.mxu0 %v1098
      %1120 = vmatprep.subr.bf16.mxu0 0
      %1121 = vmatpush1.bf16.msra.mxu0 %v1099
      %1122 = vmatprep.subr.bf16.mxu0 0
      %1123 = vmatpush1.bf16.msra.mxu0 %v1100
      %1124 = vmatprep.subr.bf16.mxu0 0
      %1125 = vmatpush1.bf16.msra.mxu0 %v1101
      %1126 = vmatprep.subr.bf16.mxu0 0
      %1127 = vmatpush1.bf16.msra.mxu0 0
      %1128 = vmatprep.subr.bf16.mxu0 0
      %1129 = vmatpush1.bf16.msra.mxu0 0
      %1130 = vmatprep.subr.bf16.mxu0 0
      %1131 = vmatpush1.bf16.msra.mxu0 0
      %1132 = vmatprep.subr.bf16.mxu0 0
      %1133 = vmatpush1.bf16.msra.mxu0 0
      %1134 = vmatprep.subr.bf16.mxu0 0
      %1135 = vmatpush1.bf16.msra.mxu0 0
      %1136 = vmatprep.subr.bf16.mxu0 0
      %1137 = vmatpush1.bf16.msra.mxu0 0
      %1138 = vmatprep.subr.bf16.mxu0 0
      %1139 = vmatpush1.bf16.msra.mxu0 0
      %1140 = vmatprep.subr.bf16.mxu0 0
      %1141 = vmatpush1.bf16.msra.mxu0 0
      %1142 = vmatprep.mubr.bf16.mxu0 0
      %1143 = vmatmul.mubr.bf16.gmra.mrb[0].mxu0 %v988
      %v1144 = vpop.f32.mrb[0].mxu0
      %v1145 = vadd.f32 0.0, %v1144
      %v1146 = vpop.f32.mrb[0].mxu0
      %v1147 = vpop.f32.mrb[0].mxu0
      %v1148 = vadd.f32 0.0, %v1147
      %v1149 = vpop.f32.mrb[0].mxu0
      %1150 = vmatprep.mubr.bf16.mxu0 0
      %1151 = vmatmul.mubr.bf16.gmra.mrb[0].mxu0 %v996
      %v1152 = vpop.f32.mrb[0].mxu0
      %v1153 = vadd.f32 0.0, %v1152
      %v1154 = vpop.f32.mrb[0].mxu0
      %v1155 = vpop.f32.mrb[0].mxu0
      %v1156 = vadd.f32 0.0, %v1155
      %v1157 = vpop.f32.mrb[0].mxu0
      %1158 = vmatprep.mubr.bf16.mxu0 0
      %1159 = vmatmul.mubr.bf16.gmra.mrb[0].mxu0 %v1004
      %v1160 = vpop.f32.mrb[0].mxu0
      %v1161 = vadd.f32 0.0, %v1160
      %v1162 = vpop.f32.mrb[0].mxu0
      %v1163 = vpop.f32.mrb[0].mxu0
      %v1164 = vadd.f32 0.0, %v1163
      %v1165 = vpop.f32.mrb[0].mxu0
      %1166 = vmatprep.mubr.bf16.mxu0 0
      %1167 = vmatmul.mubr.bf16.gmra.mrb[0].mxu0 %v1012
      %v1168 = vpop.f32.mrb[0].mxu0
      %v1169 = vadd.f32 0.0, %v1168
      %v1170 = vpop.f32.mrb[0].mxu0
      %v1171 = vpop.f32.mrb[0].mxu0
      %v1172 = vadd.f32 0.0, %v1171
      %v1173 = vpop.f32.mrb[0].mxu0
      %1174 = vmatprep.mubr.bf16.mxu0 0
      %1175 = vmatmul.mubr.bf16.gmra.mrb[0].mxu0 %v1020
      %v1176 = vpop.f32.mrb[0].mxu0
      %v1177 = vadd.f32 0.0, %v1176
      %v1178 = vpop.f32.mrb[0].mxu0
      %v1179 = vpop.f32.mrb[0].mxu0
      %v1180 = vadd.f32 0.0, %v1179
      %v1181 = vpop.f32.mrb[0].mxu0
      %1182 = vmatprep.mubr.bf16.mxu0 0
      %1183 = vmatmul.mubr.bf16.gmra.mrb[0].mxu0 %v1028
      %v1184 = vpop.f32.mrb[0].mxu0
      %v1185 = vadd.f32 0.0, %v1184
      %v1186 = vpop.f32.mrb[0].mxu0
      %v1187 = vpop.f32.mrb[0].mxu0
      %v1188 = vadd.f32 0.0, %v1187
      %v1189 = vpop.f32.mrb[0].mxu0
      %1190 = vmatprep.mubr.bf16.mxu0 0
      %1191 = vmatmul.mubr.bf16.gmra.mrb[0].mxu0 %v1036
      %v1192 = vpop.f32.mrb[0].mxu0
      %v1193 = vadd.f32 0.0, %v1192
      %v1194 = vpop.f32.mrb[0].mxu0
      %v1195 = vpop.f32.mrb[0].mxu0
      %v1196 = vadd.f32 0.0, %v1195
      %v1197 = vpop.f32.mrb[0].mxu0
      %1198 = vmatprep.mubr.bf16.mxu0 0
      %1199 = vmatmul.mubr.bf16.gmra.mrb[0].mxu0 %v1044
      %v1200 = vpop.f32.mrb[0].mxu0
      %v1201 = vadd.f32 0.0, %v1200
      %v1202 = vpop.f32.mrb[0].mxu0
      %v1203 = vpop.f32.mrb[0].mxu0
      %v1204 = vadd.f32 0.0, %v1203
      %v1205 = vpop.f32.mrb[0].mxu0
      %1206 = vmatprep.mubr.bf16.mxu0 0
      %1207 = vmatmul.mubr.bf16.gmra.mrb[0].mxu0 %v1052
      %v1208 = vpop.f32.mrb[0].mxu0
      %v1209 = vadd.f32 0.0, %v1208
      %v1210 = vpop.f32.mrb[0].mxu0
      %v1211 = vpop.f32.mrb[0].mxu0
      %v1212 = vadd.f32 0.0, %v1211
      %v1213 = vpop.f32.mrb[0].mxu0
      %1214 = vdwg.mxu0
      %v1240 = vunpack.c.l.b16 %v894
      %v1241 = vunpack.c.l.b16 %v895
      %v1242 = vunpack.c.l.b16 %v896
      %v1243 = vunpack.c.l.b16 %v897
      %v1244 = vunpack.c.l.b16 %v898
      %v1245 = vunpack.c.l.b16 %v899
      %v1246 = vunpack.c.l.b16 %v900
      %v1247 = vunpack.c.l.b16 %v901
      %v1248 = vunpack.c.l.b16 %v902
      %v1249 = vunpack.c.l.b16 %v903
      %v1250 = vunpack.c.l.b16 %v904
      %v1251 = vunpack.c.l.b16 %v905
      %v1252 = vunpack.c.l.b16 %v906
      %v1253 = vunpack.c.l.b16 %v907
      %v1254 = vunpack.c.l.b16 %v908
      %v1255 = vunpack.c.l.b16 %v909
      %v1256 = vpack.c.b16 %v1241, %v1240
      %v1257 = vpack.c.b16 %v1243, %v1242
      %v1258 = vpack.c.b16 %v1245, %v1244
      %v1259 = vpack.c.b16 %v1247, %v1246
      %v1260 = vpack.c.b16 %v1249, %v1248
      %v1261 = vpack.c.b16 %v1251, %v1250
      %v1262 = vpack.c.b16 %v1253, %v1252
      %v1263 = vpack.c.b16 %v1255, %v1254
      %1272 = vmatprep.subr.bf16.mxu0 0
      %1273 = vmatpush1.bf16.msra.mxu0 %v1256
      %1274 = vmatprep.subr.bf16.mxu0 0
      %1275 = vmatpush1.bf16.msra.mxu0 %v1257
      %1276 = vmatprep.subr.bf16.mxu0 0
      %1277 = vmatpush1.bf16.msra.mxu0 %v1258
      %1278 = vmatprep.subr.bf16.mxu0 0
      %1279 = vmatpush1.bf16.msra.mxu0 %v1259
      %1280 = vmatprep.subr.bf16.mxu0 0
      %1281 = vmatpush1.bf16.msra.mxu0 %v1260
      %1282 = vmatprep.subr.bf16.mxu0 0
      %1283 = vmatpush1.bf16.msra.mxu0 %v1261
      %1284 = vmatprep.subr.bf16.mxu0 0
      %1285 = vmatpush1.bf16.msra.mxu0 %v1262
      %1286 = vmatprep.subr.bf16.mxu0 0
      %1287 = vmatpush1.bf16.msra.mxu0 %v1263
      %1288 = vmatprep.subr.bf16.mxu0 0
      %1289 = vmatpush1.bf16.msra.mxu0 0
      %1290 = vmatprep.subr.bf16.mxu0 0
      %1291 = vmatpush1.bf16.msra.mxu0 0
      %1292 = vmatprep.subr.bf16.mxu0 0
      %1293 = vmatpush1.bf16.msra.mxu0 0
      %1294 = vmatprep.subr.bf16.mxu0 0
      %1295 = vmatpush1.bf16.msra.mxu0 0
      %1296 = vmatprep.subr.bf16.mxu0 0
      %1297 = vmatpush1.bf16.msra.mxu0 0
      %1298 = vmatprep.subr.bf16.mxu0 0
      %1299 = vmatpush1.bf16.msra.mxu0 0
      %1300 = vmatprep.subr.bf16.mxu0 0
      %1301 = vmatpush1.bf16.msra.mxu0 0
      %1302 = vmatprep.subr.bf16.mxu0 0
      %1303 = vmatpush1.bf16.msra.mxu0 0
      %1304 = vmatprep.mubr.bf16.mxu0 0
      %1305 = vmatmul.mubr.bf16.gmra.mrb[0].mxu0 %v966
      %v1306 = vpop.f32.mrb[0].mxu0
      %v1307 = vadd.f32 %v1145, %v1306
      %v1308 = vpop.f32.mrb[0].mxu0
      %v1309 = vpop.f32.mrb[0].mxu0
      %v1310 = vadd.f32 %v1148, %v1309
      %v1311 = vpop.f32.mrb[0].mxu0
      %1312 = vmatprep.mubr.bf16.mxu0 0
      %1313 = vmatmul.mubr.bf16.gmra.mrb[0].mxu0 %v967
      %v1314 = vpop.f32.mrb[0].mxu0
      %v1315 = vadd.f32 %v1153, %v1314
      %v1316 = vpop.f32.mrb[0].mxu0
      %v1317 = vpop.f32.mrb[0].mxu0
      %v1318 = vadd.f32 %v1156, %v1317
      %v1319 = vpop.f32.mrb[0].mxu0
      %1320 = vmatprep.mubr.bf16.mxu0 0
      %1321 = vmatmul.mubr.bf16.gmra.mrb[0].mxu0 %v968
      %v1322 = vpop.f32.mrb[0].mxu0
      %v1323 = vadd.f32 %v1161, %v1322
      %v1324 = vpop.f32.mrb[0].mxu0
      %v1325 = vpop.f32.mrb[0].mxu0
      %v1326 = vadd.f32 %v1164, %v1325
      %v1327 = vpop.f32.mrb[0].mxu0
      %1328 = vmatprep.mubr.bf16.mxu0 0
      %1329 = vmatmul.mubr.bf16.gmra.mrb[0].mxu0 %v969
      %v1330 = vpop.f32.mrb[0].mxu0
      %v1331 = vadd.f32 %v1169, %v1330
      %v1332 = vpop.f32.mrb[0].mxu0
      %v1333 = vpop.f32.mrb[0].mxu0
      %v1334 = vadd.f32 %v1172, %v1333
      %v1335 = vpop.f32.mrb[0].mxu0
      %1336 = vmatprep.mubr.bf16.mxu0 0
      %1337 = vmatmul.mubr.bf16.gmra.mrb[0].mxu0 %v970
      %v1338 = vpop.f32.mrb[0].mxu0
      %v1339 = vadd.f32 %v1177, %v1338
      %v1340 = vpop.f32.mrb[0].mxu0
      %v1341 = vpop.f32.mrb[0].mxu0
      %v1342 = vadd.f32 %v1180, %v1341
      %v1343 = vpop.f32.mrb[0].mxu0
      %1344 = vmatprep.mubr.bf16.mxu0 0
      %1345 = vmatmul.mubr.bf16.gmra.mrb[0].mxu0 %v971
      %v1346 = vpop.f32.mrb[0].mxu0
      %v1347 = vadd.f32 %v1185, %v1346
      %v1348 = vpop.f32.mrb[0].mxu0
      %v1349 = vpop.f32.mrb[0].mxu0
      %v1350 = vadd.f32 %v1188, %v1349
      %v1351 = vpop.f32.mrb[0].mxu0
      %1352 = vmatprep.mubr.bf16.mxu0 0
      %1353 = vmatmul.mubr.bf16.gmra.mrb[0].mxu0 %v972
      %v1354 = vpop.f32.mrb[0].mxu0
      %v1355 = vadd.f32 %v1193, %v1354
      %v1356 = vpop.f32.mrb[0].mxu0
      %v1357 = vpop.f32.mrb[0].mxu0
      %v1358 = vadd.f32 %v1196, %v1357
      %v1359 = vpop.f32.mrb[0].mxu0
      %1360 = vmatprep.mubr.bf16.mxu0 0
      %1361 = vmatmul.mubr.bf16.gmra.mrb[0].mxu0 %v973
      %v1362 = vpop.f32.mrb[0].mxu0
      %v1363 = vadd.f32 %v1201, %v1362
      %v1364 = vpop.f32.mrb[0].mxu0
      %v1365 = vpop.f32.mrb[0].mxu0
      %v1366 = vadd.f32 %v1204, %v1365
      %v1367 = vpop.f32.mrb[0].mxu0
      %1368 = vmatprep.mubr.bf16.mxu0 0
      %1369 = vmatmul.mubr.bf16.gmra.mrb[0].mxu0 %v974
      %v1370 = vpop.f32.mrb[0].mxu0
      %v1371 = vadd.f32 %v1209, %v1370
      %v1372 = vpop.f32.mrb[0].mxu0
      %v1373 = vpop.f32.mrb[0].mxu0
      %v1374 = vadd.f32 %v1212, %v1373
      %v1375 = vpop.f32.mrb[0].mxu0
      %1376 = vdwg.mxu0
      %v1377 = vld [vmem:[#allocation2] sm:$0xe]
      %s1378 = scalar_lea.vmem %s4, 128
      %v1379 = vld [vmem:[%s1378] sm:$0xf]
      %v1380 = vld [vmem:[%s1378 + $0x4] sm:$0xf]
      %v1381 = vld [vmem:[%s1378 + $0x8] sm:$0xf]
      %v1382 = vld [vmem:[%s1378 + $0xc] sm:$0xf]
      %v1383 = vld [vmem:[%s1378 + $0x10] sm:$0xf]
      %v1384 = vld [vmem:[%s1378 + $0x14] sm:$0xf]
      %v1385 = vld [vmem:[%s1378 + $0x18] sm:$0xf]
      %v1386 = vld [vmem:[%s1378 + $0x1c] sm:$0xf]
      %v1387 = vld [vmem:[%s1378 + $0x20] sm:$0xf]
      %v1388 = vld [vmem:[%s1378 + $0x24] sm:$0xf]
      %v1389 = vld [vmem:[%s1378 + $0x28] sm:$0xf]
      %v1390 = vld [vmem:[%s1378 + $0x2c] sm:$0xf]
      %v1391 = vld [vmem:[%s1378 + $0x30] sm:$0xf]
      %v1392 = vld [vmem:[%s1378 + $0x34] sm:$0xf]
      %v1393 = vld [vmem:[%s1378 + $0x38] sm:$0xf]
      %v1394 = vld [vmem:[%s1378 + $0x3c] sm:$0xf]
      %v1396 = vunpack.c.l.b16 %v1377
      %v1397 = vpack.c.b16 %v948, %v1396
      %vm1398 = vcmask 1046528
      %v1399 = vrot.slane %v1397, 1
      %v1400 = vrot.slane %v967, 1
      %v1401 = vsel %vm1398, %v1399, %v1400
      %v1402 = vrot.slane %v968, 1
      %v1403 = vsel %vm1398, %v1400, %v1402
      %v1404 = vrot.slane %v969, 1
      %v1405 = vsel %vm1398, %v1402, %v1404
      %v1406 = vrot.slane %v970, 1
      %v1407 = vsel %vm1398, %v1404, %v1406
      %v1408 = vrot.slane %v971, 1
      %v1409 = vsel %vm1398, %v1406, %v1408
      %v1410 = vrot.slane %v972, 1
      %v1411 = vsel %vm1398, %v1408, %v1410
      %v1412 = vrot.slane %v973, 1
      %v1413 = vsel %vm1398, %v1410, %v1412
      %v1414 = vrot.slane %v974, 1
      %v1415 = vsel %vm1398, %v1412, %v1414
      %v1416 = vrot.slane %v975, 1
      %v1417 = vsel %vm1398, %v1414, %v1416
      %v1443 = vunpack.c.l.b16 %v1379
      %v1444 = vunpack.c.l.b16 %v1380
      %v1445 = vunpack.c.l.b16 %v1381
      %v1446 = vunpack.c.l.b16 %v1382
      %v1447 = vunpack.c.l.b16 %v1383
      %v1448 = vunpack.c.l.b16 %v1384
      %v1449 = vunpack.c.l.b16 %v1385
      %v1450 = vunpack.c.l.b16 %v1386
      %v1451 = vunpack.c.l.b16 %v1387
      %v1452 = vunpack.c.l.b16 %v1388
      %v1453 = vunpack.c.l.b16 %v1389
      %v1454 = vunpack.c.l.b16 %v1390
      %v1455 = vunpack.c.l.b16 %v1391
      %v1456 = vunpack.c.l.b16 %v1392
      %v1457 = vunpack.c.l.b16 %v1393
      %v1458 = vunpack.c.l.b16 %v1394
      %v1459 = vpack.c.b16 %v1444, %v1443
      %v1460 = vpack.c.b16 %v1446, %v1445
      %v1461 = vpack.c.b16 %v1448, %v1447
      %v1462 = vpack.c.b16 %v1450, %v1449
      %v1463 = vpack.c.b16 %v1452, %v1451
      %v1464 = vpack.c.b16 %v1454, %v1453
      %v1465 = vpack.c.b16 %v1456, %v1455
      %v1466 = vpack.c.b16 %v1458, %v1457
      %1475 = vmatprep.subr.bf16.mxu0 0
      %1476 = vmatpush1.bf16.msra.mxu0 %v1459
      %1477 = vmatprep.subr.bf16.mxu0 0
      %1478 = vmatpush1.bf16.msra.mxu0 %v1460
      %1479 = vmatprep.subr.bf16.mxu0 0
      %1480 = vmatpush1.bf16.msra.mxu0 %v1461
      %1481 = vmatprep.subr.bf16.mxu0 0
      %1482 = vmatpush1.bf16.msra.mxu0 %v1462
      %1483 = vmatprep.subr.bf16.mxu0 0
      %1484 = vmatpush1.bf16.msra.mxu0 %v1463
      %1485 = vmatprep.subr.bf16.mxu0 0
      %1486 = vmatpush1.bf16.msra.mxu0 %v1464
      %1487 = vmatprep.subr.bf16.mxu0 0
      %1488 = vmatpush1.bf16.msra.mxu0 %v1465
      %1489 = vmatprep.subr.bf16.mxu0 0
      %1490 = vmatpush1.bf16.msra.mxu0 %v1466
      %1491 = vmatprep.subr.bf16.mxu0 0
      %1492 = vmatpush1.bf16.msra.mxu0 0
      %1493 = vmatprep.subr.bf16.mxu0 0
      %1494 = vmatpush1.bf16.msra.mxu0 0
      %1495 = vmatprep.subr.bf16.mxu0 0
      %1496 = vmatpush1.bf16.msra.mxu0 0
      %1497 = vmatprep.subr.bf16.mxu0 0
      %1498 = vmatpush1.bf16.msra.mxu0 0
      %1499 = vmatprep.subr.bf16.mxu0 0
      %1500 = vmatpush1.bf16.msra.mxu0 0
      %1501 = vmatprep.subr.bf16.mxu0 0
      %1502 = vmatpush1.bf16.msra.mxu0 0
      %1503 = vmatprep.subr.bf16.mxu0 0
      %1504 = vmatpush1.bf16.msra.mxu0 0
      %1505 = vmatprep.subr.bf16.mxu0 0
      %1506 = vmatpush1.bf16.msra.mxu0 0
      %1507 = vmatprep.mubr.bf16.mxu0 0
      %1508 = vmatmul.mubr.bf16.gmra.mrb[0].mxu0 %v1401
      %v1509 = vpop.f32.mrb[0].mxu0
      %v1510 = vadd.f32 0.0, %v1509
      %v1511 = vpop.f32.mrb[0].mxu0
      %v1512 = vpop.f32.mrb[0].mxu0
      %v1513 = vadd.f32 0.0, %v1512
      %v1514 = vpop.f32.mrb[0].mxu0
      %1515 = vmatprep.mubr.bf16.mxu0 0
      %1516 = vmatmul.mubr.bf16.gmra.mrb[0].mxu0 %v1403
      %v1517 = vpop.f32.mrb[0].mxu0
      %v1518 = vadd.f32 0.0, %v1517
      %v1519 = vpop.f32.mrb[0].mxu0
      %v1520 = vpop.f32.mrb[0].mxu0
      %v1521 = vadd.f32 0.0, %v1520
      %v1522 = vpop.f32.mrb[0].mxu0
      %1523 = vmatprep.mubr.bf16.mxu0 0
      %1524 = vmatmul.mubr.bf16.gmra.mrb[0].mxu0 %v1405
      %v1525 = vpop.f32.mrb[0].mxu0
      %v1526 = vadd.f32 0.0, %v1525
      %v1527 = vpop.f32.mrb[0].mxu0
      %v1528 = vpop.f32.mrb[0].mxu0
      %v1529 = vadd.f32 0.0, %v1528
      %v1530 = vpop.f32.mrb[0].mxu0
      %1531 = vmatprep.mubr.bf16.mxu0 0
      %1532 = vmatmul.mubr.bf16.gmra.mrb[0].mxu0 %v1407
      %v1533 = vpop.f32.mrb[0].mxu0
      %v1534 = vadd.f32 0.0, %v1533
      %v1535 = vpop.f32.mrb[0].mxu0
      %v1536 = vpop.f32.mrb[0].mxu0
      %v1537 = vadd.f32 0.0, %v1536
      %v1538 = vpop.f32.mrb[0].mxu0
      %1539 = vmatprep.mubr.bf16.mxu0 0
      %1540 = vmatmul.mubr.bf16.gmra.mrb[0].mxu0 %v1409
      %v1541 = vpop.f32.mrb[0].mxu0
      %v1542 = vadd.f32 0.0, %v1541
      %v1543 = vpop.f32.mrb[0].mxu0
      %v1544 = vpop.f32.mrb[0].mxu0
      %v1545 = vadd.f32 0.0, %v1544
      %v1546 = vpop.f32.mrb[0].mxu0
      %1547 = vmatprep.mubr.bf16.mxu0 0
      %1548 = vmatmul.mubr.bf16.gmra.mrb[0].mxu0 %v1411
      %v1549 = vpop.f32.mrb[0].mxu0
      %v1550 = vadd.f32 0.0, %v1549
      %v1551 = vpop.f32.mrb[0].mxu0
      %v1552 = vpop.f32.mrb[0].mxu0
      %v1553 = vadd.f32 0.0, %v1552
      %v1554 = vpop.f32.mrb[0].mxu0
      %1555 = vmatprep.mubr.bf16.mxu0 0
      %1556 = vmatmul.mubr.bf16.gmra.mrb[0].mxu0 %v1413
      %v1557 = vpop.f32.mrb[0].mxu0
      %v1558 = vadd.f32 0.0, %v1557
      %v1559 = vpop.f32.mrb[0].mxu0
      %v1560 = vpop.f32.mrb[0].mxu0
      %v1561 = vadd.f32 0.0, %v1560
      %v1562 = vpop.f32.mrb[0].mxu0
      %1563 = vmatprep.mubr.bf16.mxu0 0
      %1564 = vmatmul.mubr.bf16.gmra.mrb[0].mxu0 %v1415
      %v1565 = vpop.f32.mrb[0].mxu0
      %v1566 = vadd.f32 0.0, %v1565
      %v1567 = vpop.f32.mrb[0].mxu0
      %v1568 = vpop.f32.mrb[0].mxu0
      %v1569 = vadd.f32 0.0, %v1568
      %v1570 = vpop.f32.mrb[0].mxu0
      %1571 = vmatprep.mubr.bf16.mxu0 0
      %1572 = vmatmul.mubr.bf16.gmra.mrb[0].mxu0 %v1417
      %v1573 = vpop.f32.mrb[0].mxu0
      %v1574 = vadd.f32 0.0, %v1573
      %v1575 = vpop.f32.mrb[0].mxu0
      %v1576 = vpop.f32.mrb[0].mxu0
      %v1577 = vadd.f32 0.0, %v1576
      %v1578 = vpop.f32.mrb[0].mxu0
      %1579 = vdwg.mxu0
      %v1580 = vadd.f32 %v1307, %v1510
      %v1581 = vadd.f32 %v1310, %v1513
      %v1582 = vadd.f32 %v1315, %v1518
      %v1583 = vadd.f32 %v1318, %v1521
      %v1584 = vadd.f32 %v1323, %v1526
      %v1585 = vadd.f32 %v1326, %v1529
      %v1586 = vadd.f32 %v1331, %v1534
      %v1587 = vadd.f32 %v1334, %v1537
      %v1588 = vadd.f32 %v1339, %v1542
      %v1589 = vadd.f32 %v1342, %v1545
      %v1590 = vadd.f32 %v1347, %v1550
      %v1591 = vadd.f32 %v1350, %v1553
      %v1592 = vadd.f32 %v1355, %v1558
      %v1593 = vadd.f32 %v1358, %v1561
      %v1594 = vadd.f32 %v1363, %v1566
      %v1595 = vadd.f32 %v1366, %v1569
      %v1596 = vadd.f32 %v1371, %v1574
      %v1597 = vadd.f32 %v1374, %v1577
      %v1598 = vld [vmem:[#allocation2 + $0x8] sm:$0xe]
      %v1599 = vld [vmem:[#allocation2 + $0xc] sm:$0xf]
      %v1600 = vld [vmem:[#allocation2 + $0x10] sm:$0xf]
      %v1601 = vld [vmem:[#allocation2 + $0x14] sm:$0xf]
      %v1602 = vld [vmem:[#allocation2 + $0x18] sm:$0xf]
      %v1603 = vld [vmem:[#allocation2 + $0x1c] sm:$0xf]
      %v1604 = vld [vmem:[#allocation2 + $0x20] sm:$0xf]
      %v1605 = vld [vmem:[#allocation2 + $0x24] sm:$0xf]
      %v1606 = vld [vmem:[#allocation2 + $0x28] sm:$0xf]
      %v1607 = vld [vmem:[#allocation2 + $0x2c] sm:$0xf]
      %v1608 = vld [vmem:[#allocation2 + $0x30] sm:$0xf]
      %v1609 = vld [vmem:[#allocation2 + $0x34] sm:$0xf]
      %v1610 = vld [vmem:[#allocation2 + $0x38] sm:$0xf]
      %v1611 = vld [vmem:[#allocation2 + $0x3c] sm:$0xf]
      %v1612 = vld [vmem:[#allocation2 + $0x40] sm:$0xf]
      %v1613 = vld [vmem:[#allocation2 + $0x44] sm:$0xf]
      %v1614 = vld [vmem:[#allocation2 + $0x48] sm:$0xf]
      %v1615 = vld [vmem:[#allocation2 + $0x4c] sm:$0xf]
      %v1616 = vld [vmem:[#allocation2 + $0x50] sm:$0x1]
      %s1617 = scalar_lea.vmem %s4, 192
      %v1618 = vld [vmem:[%s1617] sm:$0xf]
      %v1619 = vld [vmem:[%s1617 + $0x4] sm:$0xf]
      %v1620 = vld [vmem:[%s1617 + $0x8] sm:$0xf]
      %v1621 = vld [vmem:[%s1617 + $0xc] sm:$0xf]
      %v1622 = vld [vmem:[%s1617 + $0x10] sm:$0xf]
      %v1623 = vld [vmem:[%s1617 + $0x14] sm:$0xf]
      %v1624 = vld [vmem:[%s1617 + $0x18] sm:$0xf]
      %v1625 = vld [vmem:[%s1617 + $0x1c] sm:$0xf]
      %v1626 = vld [vmem:[%s1617 + $0x20] sm:$0xf]
      %v1627 = vld [vmem:[%s1617 + $0x24] sm:$0xf]
      %v1628 = vld [vmem:[%s1617 + $0x28] sm:$0xf]
      %v1629 = vld [vmem:[%s1617 + $0x2c] sm:$0xf]
      %v1630 = vld [vmem:[%s1617 + $0x30] sm:$0xf]
      %v1631 = vld [vmem:[%s1617 + $0x34] sm:$0xf]
      %v1632 = vld [vmem:[%s1617 + $0x38] sm:$0xf]
      %v1633 = vld [vmem:[%s1617 + $0x3c] sm:$0xf]
      %v1653 = vunpack.c.l.b16 %v1598
      %v1654 = vunpack.c.l.b16 %v1599
      %v1655 = vunpack.c.l.b16 %v1600
      %v1656 = vunpack.c.l.b16 %v1601
      %v1657 = vunpack.c.l.b16 %v1602
      %v1658 = vunpack.c.l.b16 %v1603
      %v1659 = vunpack.c.l.b16 %v1604
      %v1660 = vunpack.c.l.b16 %v1605
      %v1661 = vunpack.c.l.b16 %v1606
      %v1662 = vunpack.c.l.b16 %v1607
      %v1663 = vunpack.c.l.b16 %v1608
      %v1664 = vunpack.c.l.b16 %v1609
      %v1665 = vunpack.c.l.b16 %v1610
      %v1666 = vunpack.c.l.b16 %v1611
      %v1667 = vunpack.c.l.b16 %v1612
      %v1668 = vunpack.c.l.b16 %v1613
      %v1669 = vunpack.c.l.b16 %v1614
      %v1670 = vunpack.c.l.b16 %v1615
      %v1671 = vunpack.c.l.b16 %v1616
      %v1672 = vpack.c.b16 %v1654, %v1653
      %v1673 = vpack.c.b16 %v1656, %v1655
      %v1674 = vpack.c.b16 %v1658, %v1657
      %v1675 = vpack.c.b16 %v1660, %v1659
      %v1676 = vpack.c.b16 %v1662, %v1661
      %v1677 = vpack.c.b16 %v1664, %v1663
      %v1678 = vpack.c.b16 %v1666, %v1665
      %v1679 = vpack.c.b16 %v1668, %v1667
      %v1680 = vpack.c.b16 %v1670, %v1669
      %v1681 = vpack.c.b16 %v1671, %v1671
      %v1682 = vrot.slane %v1672, 1
      %v1683 = vrot.slane %v1673, 1
      %v1684 = vsel %vm1398, %v1682, %v1683
      %v1685 = vrot.slane %v1674, 1
      %v1686 = vsel %vm1398, %v1683, %v1685
      %v1687 = vrot.slane %v1675, 1
      %v1688 = vsel %vm1398, %v1685, %v1687
      %v1689 = vrot.slane %v1676, 1
      %v1690 = vsel %vm1398, %v1687, %v1689
      %v1691 = vrot.slane %v1677, 1
      %v1692 = vsel %vm1398, %v1689, %v1691
      %v1693 = vrot.slane %v1678, 1
      %v1694 = vsel %vm1398, %v1691, %v1693
      %v1695 = vrot.slane %v1679, 1
      %v1696 = vsel %vm1398, %v1693, %v1695
      %v1697 = vrot.slane %v1680, 1
      %v1698 = vsel %vm1398, %v1695, %v1697
      %v1699 = vrot.slane %v1681, 1
      %v1700 = vsel %vm1398, %v1697, %v1699
      %v1726 = vunpack.c.l.b16 %v1618
      %v1727 = vunpack.c.l.b16 %v1619
      %v1728 = vunpack.c.l.b16 %v1620
      %v1729 = vunpack.c.l.b16 %v1621
      %v1730 = vunpack.c.l.b16 %v1622
      %v1731 = vunpack.c.l.b16 %v1623
      %v1732 = vunpack.c.l.b16 %v1624
      %v1733 = vunpack.c.l.b16 %v1625
      %v1734 = vunpack.c.l.b16 %v1626
      %v1735 = vunpack.c.l.b16 %v1627
      %v1736 = vunpack.c.l.b16 %v1628
      %v1737 = vunpack.c.l.b16 %v1629
      %v1738 = vunpack.c.l.b16 %v1630
      %v1739 = vunpack.c.l.b16 %v1631
      %v1740 = vunpack.c.l.b16 %v1632
      %v1741 = vunpack.c.l.b16 %v1633
      %v1742 = vpack.c.b16 %v1727, %v1726
      %v1743 = vpack.c.b16 %v1729, %v1728
      %v1744 = vpack.c.b16 %v1731, %v1730
      %v1745 = vpack.c.b16 %v1733, %v1732
      %v1746 = vpack.c.b16 %v1735, %v1734
      %v1747 = vpack.c.b16 %v1737, %v1736
      %v1748 = vpack.c.b16 %v1739, %v1738
      %v1749 = vpack.c.b16 %v1741, %v1740
      %1758 = vmatprep.subr.bf16.mxu0 0
      %1759 = vmatpush1.bf16.msra.mxu0 %v1742
      %1760 = vmatprep.subr.bf16.mxu0 0
      %1761 = vmatpush1.bf16.msra.mxu0 %v1743
      %1762 = vmatprep.subr.bf16.mxu0 0
      %1763 = vmatpush1.bf16.msra.mxu0 %v1744
      %1764 = vmatprep.subr.bf16.mxu0 0
      %1765 = vmatpush1.bf16.msra.mxu0 %v1745
      %1766 = vmatprep.subr.bf16.mxu0 0
      %1767 = vmatpush1.bf16.msra.mxu0 %v1746
      %1768 = vmatprep.subr.bf16.mxu0 0
      %1769 = vmatpush1.bf16.msra.mxu0 %v1747
      %1770 = vmatprep.subr.bf16.mxu0 0
      %1771 = vmatpush1.bf16.msra.mxu0 %v1748
      %1772 = vmatprep.subr.bf16.mxu0 0
      %1773 = vmatpush1.bf16.msra.mxu0 %v1749
      %1774 = vmatprep.subr.bf16.mxu0 0
      %1775 = vmatpush1.bf16.msra.mxu0 0
      %1776 = vmatprep.subr.bf16.mxu0 0
      %1777 = vmatpush1.bf16.msra.mxu0 0
      %1778 = vmatprep.subr.bf16.mxu0 0
      %1779 = vmatpush1.bf16.msra.mxu0 0
      %1780 = vmatprep.subr.bf16.mxu0 0
      %1781 = vmatpush1.bf16.msra.mxu0 0
      %1782 = vmatprep.subr.bf16.mxu0 0
      %1783 = vmatpush1.bf16.msra.mxu0 0
      %1784 = vmatprep.subr.bf16.mxu0 0
      %1785 = vmatpush1.bf16.msra.mxu0 0
      %1786 = vmatprep.subr.bf16.mxu0 0
      %1787 = vmatpush1.bf16.msra.mxu0 0
      %1788 = vmatprep.subr.bf16.mxu0 0
      %1789 = vmatpush1.bf16.msra.mxu0 0
      %1790 = vmatprep.mubr.bf16.mxu0 0
      %1791 = vmatmul.mubr.bf16.gmra.mrb[0].mxu0 %v1684
      %v1792 = vpop.f32.mrb[0].mxu0
      %v1793 = vadd.f32 0.0, %v1792
      %v1794 = vpop.f32.mrb[0].mxu0
      %v1795 = vpop.f32.mrb[0].mxu0
      %v1796 = vadd.f32 0.0, %v1795
      %v1797 = vpop.f32.mrb[0].mxu0
      %1798 = vmatprep.mubr.bf16.mxu0 0
      %1799 = vmatmul.mubr.bf16.gmra.mrb[0].mxu0 %v1686
      %v1800 = vpop.f32.mrb[0].mxu0
      %v1801 = vadd.f32 0.0, %v1800
      %v1802 = vpop.f32.mrb[0].mxu0
      %v1803 = vpop.f32.mrb[0].mxu0
      %v1804 = vadd.f32 0.0, %v1803
      %v1805 = vpop.f32.mrb[0].mxu0
      %1806 = vmatprep.mubr.bf16.mxu0 0
      %1807 = vmatmul.mubr.bf16.gmra.mrb[0].mxu0 %v1688
      %v1808 = vpop.f32.mrb[0].mxu0
      %v1809 = vadd.f32 0.0, %v1808
      %v1810 = vpop.f32.mrb[0].mxu0
      %v1811 = vpop.f32.mrb[0].mxu0
      %v1812 = vadd.f32 0.0, %v1811
      %v1813 = vpop.f32.mrb[0].mxu0
      %1814 = vmatprep.mubr.bf16.mxu0 0
      %1815 = vmatmul.mubr.bf16.gmra.mrb[0].mxu0 %v1690
      %v1816 = vpop.f32.mrb[0].mxu0
      %v1817 = vadd.f32 0.0, %v1816
      %v1818 = vpop.f32.mrb[0].mxu0
      %v1819 = vpop.f32.mrb[0].mxu0
      %v1820 = vadd.f32 0.0, %v1819
      %v1821 = vpop.f32.mrb[0].mxu0
      %1822 = vmatprep.mubr.bf16.mxu0 0
      %1823 = vmatmul.mubr.bf16.gmra.mrb[0].mxu0 %v1692
      %v1824 = vpop.f32.mrb[0].mxu0
      %v1825 = vadd.f32 0.0, %v1824
      %v1826 = vpop.f32.mrb[0].mxu0
      %v1827 = vpop.f32.mrb[0].mxu0
      %v1828 = vadd.f32 0.0, %v1827
      %v1829 = vpop.f32.mrb[0].mxu0
      %1830 = vmatprep.mubr.bf16.mxu0 0
      %1831 = vmatmul.mubr.bf16.gmra.mrb[0].mxu0 %v1694
      %v1832 = vpop.f32.mrb[0].mxu0
      %v1833 = vadd.f32 0.0, %v1832
      %v1834 = vpop.f32.mrb[0].mxu0
      %v1835 = vpop.f32.mrb[0].mxu0
      %v1836 = vadd.f32 0.0, %v1835
      %v1837 = vpop.f32.mrb[0].mxu0
      %1838 = vmatprep.mubr.bf16.mxu0 0
      %1839 = vmatmul.mubr.bf16.gmra.mrb[0].mxu0 %v1696
      %v1840 = vpop.f32.mrb[0].mxu0
      %v1841 = vadd.f32 0.0, %v1840
      %v1842 = vpop.f32.mrb[0].mxu0
      %v1843 = vpop.f32.mrb[0].mxu0
      %v1844 = vadd.f32 0.0, %v1843
      %v1845 = vpop.f32.mrb[0].mxu0
      %1846 = vmatprep.mubr.bf16.mxu0 0
      %1847 = vmatmul.mubr.bf16.gmra.mrb[0].mxu0 %v1698
      %v1848 = vpop.f32.mrb[0].mxu0
      %v1849 = vadd.f32 0.0, %v1848
      %v1850 = vpop.f32.mrb[0].mxu0
      %v1851 = vpop.f32.mrb[0].mxu0
      %v1852 = vadd.f32 0.0, %v1851
      %v1853 = vpop.f32.mrb[0].mxu0
      %1854 = vmatprep.mubr.bf16.mxu0 0
      %1855 = vmatmul.mubr.bf16.gmra.mrb[0].mxu0 %v1700
      %v1856 = vpop.f32.mrb[0].mxu0
      %v1857 = vadd.f32 0.0, %v1856
      %v1858 = vpop.f32.mrb[0].mxu0
      %v1859 = vpop.f32.mrb[0].mxu0
      %v1860 = vadd.f32 0.0, %v1859
      %v1861 = vpop.f32.mrb[0].mxu0
      %1862 = vdwg.mxu0
      %v1863 = vadd.f32 %v1580, %v1793
      %v1864 = vadd.f32 %v1581, %v1796
      %v1865 = vadd.f32 %v1582, %v1801
      %v1866 = vadd.f32 %v1583, %v1804
      %v1867 = vadd.f32 %v1584, %v1809
      %v1868 = vadd.f32 %v1585, %v1812
      %v1869 = vadd.f32 %v1586, %v1817
      %v1870 = vadd.f32 %v1587, %v1820
      %v1871 = vadd.f32 %v1588, %v1825
      %v1872 = vadd.f32 %v1589, %v1828
      %v1873 = vadd.f32 %v1590, %v1833
      %v1874 = vadd.f32 %v1591, %v1836
      %v1875 = vadd.f32 %v1592, %v1841
      %v1876 = vadd.f32 %v1593, %v1844
      %v1877 = vadd.f32 %v1594, %v1849
      %v1878 = vadd.f32 %v1595, %v1852
      %v1879 = vadd.f32 %v1596, %v1857
      %v1880 = vadd.f32 %v1597, %v1860
      %v1881 = vld [vmem:[#allocation2 + $0x50] sm:$0x3]
      %s1882 = scalar_lea.vmem %s4, 256
      %v1883 = vld [vmem:[%s1882] sm:$0xf]
      %v1884 = vld [vmem:[%s1882 + $0x4] sm:$0xf]
      %v1885 = vld [vmem:[%s1882 + $0x8] sm:$0xf]
      %v1886 = vld [vmem:[%s1882 + $0xc] sm:$0xf]
      %v1887 = vld [vmem:[%s1882 + $0x10] sm:$0xf]
      %v1888 = vld [vmem:[%s1882 + $0x14] sm:$0xf]
      %v1889 = vld [vmem:[%s1882 + $0x18] sm:$0xf]
      %v1890 = vld [vmem:[%s1882 + $0x1c] sm:$0xf]
      %v1891 = vld [vmem:[%s1882 + $0x20] sm:$0xf]
      %v1892 = vld [vmem:[%s1882 + $0x24] sm:$0xf]
      %v1893 = vld [vmem:[%s1882 + $0x28] sm:$0xf]
      %v1894 = vld [vmem:[%s1882 + $0x2c] sm:$0xf]
      %v1895 = vld [vmem:[%s1882 + $0x30] sm:$0xf]
      %v1896 = vld [vmem:[%s1882 + $0x34] sm:$0xf]
      %v1897 = vld [vmem:[%s1882 + $0x38] sm:$0xf]
      %v1898 = vld [vmem:[%s1882 + $0x3c] sm:$0xf]
      %v1900 = vunpack.c.l.b16 %v1881
      %v1901 = vpack.c.b16 %v1900, %v1900
      %vm1902 = vsmask.f32 6400
      %v1904 = vshrl.u32 %v1672, 16
      %v1906 = vrot.slane %v1904, 1
      %v1907 = vshll.u32 %v1672, 16
      %v1909 = vrot.slane %v1907, 2
      %v1910 = vor.u32 %v1906, %v1909
      %v1912 = vshrl.u32 %v1673, 16
      %v1914 = vrot.slane %v1912, 1
      %v1915 = vshll.u32 %v1673, 16
      %v1917 = vrot.slane %v1915, 2
      %v1918 = vor.u32 %v1914, %v1917
      %v1919 = vsel %vm1902, %v1910, %v1918
      %v1921 = vshrl.u32 %v1674, 16
      %v1923 = vrot.slane %v1921, 1
      %v1924 = vshll.u32 %v1674, 16
      %v1926 = vrot.slane %v1924, 2
      %v1927 = vor.u32 %v1923, %v1926
      %v1928 = vsel %vm1902, %v1918, %v1927
      %v1930 = vshrl.u32 %v1675, 16
      %v1932 = vrot.slane %v1930, 1
      %v1933 = vshll.u32 %v1675, 16
      %v1935 = vrot.slane %v1933, 2
      %v1936 = vor.u32 %v1932, %v1935
      %v1937 = vsel %vm1902, %v1927, %v1936
      %v1939 = vshrl.u32 %v1676, 16
      %v1941 = vrot.slane %v1939, 1
      %v1942 = vshll.u32 %v1676, 16
      %v1944 = vrot.slane %v1942, 2
      %v1945 = vor.u32 %v1941, %v1944
      %v1946 = vsel %vm1902, %v1936, %v1945
      %v1948 = vshrl.u32 %v1677, 16
      %v1950 = vrot.slane %v1948, 1
      %v1951 = vshll.u32 %v1677, 16
      %v1953 = vrot.slane %v1951, 2
      %v1954 = vor.u32 %v1950, %v1953
      %v1955 = vsel %vm1902, %v1945, %v1954
      %v1957 = vshrl.u32 %v1678, 16
      %v1959 = vrot.slane %v1957, 1
      %v1960 = vshll.u32 %v1678, 16
      %v1962 = vrot.slane %v1960, 2
      %v1963 = vor.u32 %v1959, %v1962
      %v1964 = vsel %vm1902, %v1954, %v1963
      %v1966 = vshrl.u32 %v1679, 16
      %v1968 = vrot.slane %v1966, 1
      %v1969 = vshll.u32 %v1679, 16
      %v1971 = vrot.slane %v1969, 2
      %v1972 = vor.u32 %v1968, %v1971
      %v1973 = vsel %vm1902, %v1963, %v1972
      %v1975 = vshrl.u32 %v1680, 16
      %v1977 = vrot.slane %v1975, 1
      %v1978 = vshll.u32 %v1680, 16
      %v1980 = vrot.slane %v1978, 2
      %v1981 = vor.u32 %v1977, %v1980
      %v1982 = vsel %vm1902, %v1972, %v1981
      %v1984 = vshrl.u32 %v1901, 16
      %v1986 = vrot.slane %v1984, 1
      %v1987 = vshll.u32 %v1901, 16
      %v1989 = vrot.slane %v1987, 2
      %v1990 = vor.u32 %v1986, %v1989
      %v1991 = vsel %vm1902, %v1981, %v1990
      %v2017 = vunpack.c.l.b16 %v1883
      %v2018 = vunpack.c.l.b16 %v1884
      %v2019 = vunpack.c.l.b16 %v1885
      %v2020 = vunpack.c.l.b16 %v1886
      %v2021 = vunpack.c.l.b16 %v1887
      %v2022 = vunpack.c.l.b16 %v1888
      %v2023 = vunpack.c.l.b16 %v1889
      %v2024 = vunpack.c.l.b16 %v1890
      %v2025 = vunpack.c.l.b16 %v1891
      %v2026 = vunpack.c.l.b16 %v1892
      %v2027 = vunpack.c.l.b16 %v1893
      %v2028 = vunpack.c.l.b16 %v1894
      %v2029 = vunpack.c.l.b16 %v1895
      %v2030 = vunpack.c.l.b16 %v1896
      %v2031 = vunpack.c.l.b16 %v1897
      %v2032 = vunpack.c.l.b16 %v1898
      %v2033 = vpack.c.b16 %v2018, %v2017
      %v2034 = vpack.c.b16 %v2020, %v2019
      %v2035 = vpack.c.b16 %v2022, %v2021
      %v2036 = vpack.c.b16 %v2024, %v2023
      %v2037 = vpack.c.b16 %v2026, %v2025
      %v2038 = vpack.c.b16 %v2028, %v2027
      %v2039 = vpack.c.b16 %v2030, %v2029
      %v2040 = vpack.c.b16 %v2032, %v2031
      %2049 = vmatprep.subr.bf16.mxu0 0
      %2050 = vmatpush1.bf16.msra.mxu0 %v2033
      %2051 = vmatprep.subr.bf16.mxu0 0
      %2052 = vmatpush1.bf16.msra.mxu0 %v2034
      %2053 = vmatprep.subr.bf16.mxu0 0
      %2054 = vmatpush1.bf16.msra.mxu0 %v2035
      %2055 = vmatprep.subr.bf16.mxu0 0
      %2056 = vmatpush1.bf16.msra.mxu0 %v2036
      %2057 = vmatprep.subr.bf16.mxu0 0
      %2058 = vmatpush1.bf16.msra.mxu0 %v2037
      %2059 = vmatprep.subr.bf16.mxu0 0
      %2060 = vmatpush1.bf16.msra.mxu0 %v2038
      %2061 = vmatprep.subr.bf16.mxu0 0
      %2062 = vmatpush1.bf16.msra.mxu0 %v2039
      %2063 = vmatprep.subr.bf16.mxu0 0
      %2064 = vmatpush1.bf16.msra.mxu0 %v2040
      %2065 = vmatprep.subr.bf16.mxu0 0
      %2066 = vmatpush1.bf16.msra.mxu0 0
      %2067 = vmatprep.subr.bf16.mxu0 0
      %2068 = vmatpush1.bf16.msra.mxu0 0
      %2069 = vmatprep.subr.bf16.mxu0 0
      %2070 = vmatpush1.bf16.msra.mxu0 0
      %2071 = vmatprep.subr.bf16.mxu0 0
      %2072 = vmatpush1.bf16.msra.mxu0 0
      %2073 = vmatprep.subr.bf16.mxu0 0
      %2074 = vmatpush1.bf16.msra.mxu0 0
      %2075 = vmatprep.subr.bf16.mxu0 0
      %2076 = vmatpush1.bf16.msra.mxu0 0
      %2077 = vmatprep.subr.bf16.mxu0 0
      %2078 = vmatpush1.bf16.msra.mxu0 0
      %2079 = vmatprep.subr.bf16.mxu0 0
      %2080 = vmatpush1.bf16.msra.mxu0 0
      %2081 = vmatprep.mubr.bf16.mxu0 0
      %2082 = vmatmul.mubr.bf16.gmra.mrb[0].mxu0 %v1919
      %v2083 = vpop.f32.mrb[0].mxu0
      %v2084 = vadd.f32 0.0, %v2083
      %v2085 = vpop.f32.mrb[0].mxu0
      %v2086 = vpop.f32.mrb[0].mxu0
      %v2087 = vadd.f32 0.0, %v2086
      %v2088 = vpop.f32.mrb[0].mxu0
      %2089 = vmatprep.mubr.bf16.mxu0 0
      %2090 = vmatmul.mubr.bf16.gmra.mrb[0].mxu0 %v1928
      %v2091 = vpop.f32.mrb[0].mxu0
      %v2092 = vadd.f32 0.0, %v2091
      %v2093 = vpop.f32.mrb[0].mxu0
      %v2094 = vpop.f32.mrb[0].mxu0
      %v2095 = vadd.f32 0.0, %v2094
      %v2096 = vpop.f32.mrb[0].mxu0
      %2097 = vmatprep.mubr.bf16.mxu0 0
      %2098 = vmatmul.mubr.bf16.gmra.mrb[0].mxu0 %v1937
      %v2099 = vpop.f32.mrb[0].mxu0
      %v2100 = vadd.f32 0.0, %v2099
      %v2101 = vpop.f32.mrb[0].mxu0
      %v2102 = vpop.f32.mrb[0].mxu0
      %v2103 = vadd.f32 0.0, %v2102
      %v2104 = vpop.f32.mrb[0].mxu0
      %2105 = vmatprep.mubr.bf16.mxu0 0
      %2106 = vmatmul.mubr.bf16.gmra.mrb[0].mxu0 %v1946
      %v2107 = vpop.f32.mrb[0].mxu0
      %v2108 = vadd.f32 0.0, %v2107
      %v2109 = vpop.f32.mrb[0].mxu0
      %v2110 = vpop.f32.mrb[0].mxu0
      %v2111 = vadd.f32 0.0, %v2110
      %v2112 = vpop.f32.mrb[0].mxu0
      %2113 = vmatprep.mubr.bf16.mxu0 0
      %2114 = vmatmul.mubr.bf16.gmra.mrb[0].mxu0 %v1955
      %v2115 = vpop.f32.mrb[0].mxu0
      %v2116 = vadd.f32 0.0, %v2115
      %v2117 = vpop.f32.mrb[0].mxu0
      %v2118 = vpop.f32.mrb[0].mxu0
      %v2119 = vadd.f32 0.0, %v2118
      %v2120 = vpop.f32.mrb[0].mxu0
      %2121 = vmatprep.mubr.bf16.mxu0 0
      %2122 = vmatmul.mubr.bf16.gmra.mrb[0].mxu0 %v1964
      %v2123 = vpop.f32.mrb[0].mxu0
      %v2124 = vadd.f32 0.0, %v2123
      %v2125 = vpop.f32.mrb[0].mxu0
      %v2126 = vpop.f32.mrb[0].mxu0
      %v2127 = vadd.f32 0.0, %v2126
      %v2128 = vpop.f32.mrb[0].mxu0
      %2129 = vmatprep.mubr.bf16.mxu0 0
      %2130 = vmatmul.mubr.bf16.gmra.mrb[0].mxu0 %v1973
      %v2131 = vpop.f32.mrb[0].mxu0
      %v2132 = vadd.f32 0.0, %v2131
      %v2133 = vpop.f32.mrb[0].mxu0
      %v2134 = vpop.f32.mrb[0].mxu0
      %v2135 = vadd.f32 0.0, %v2134
      %v2136 = vpop.f32.mrb[0].mxu0
      %2137 = vmatprep.mubr.bf16.mxu0 0
      %2138 = vmatmul.mubr.bf16.gmra.mrb[0].mxu0 %v1982
      %v2139 = vpop.f32.mrb[0].mxu0
      %v2140 = vadd.f32 0.0, %v2139
      %v2141 = vpop.f32.mrb[0].mxu0
      %v2142 = vpop.f32.mrb[0].mxu0
      %v2143 = vadd.f32 0.0, %v2142
      %v2144 = vpop.f32.mrb[0].mxu0
      %2145 = vmatprep.mubr.bf16.mxu0 0
      %2146 = vmatmul.mubr.bf16.gmra.mrb[0].mxu0 %v1991
      %v2147 = vpop.f32.mrb[0].mxu0
      %v2148 = vadd.f32 0.0, %v2147
      %v2149 = vpop.f32.mrb[0].mxu0
      %v2150 = vpop.f32.mrb[0].mxu0
      %v2151 = vadd.f32 0.0, %v2150
      %v2152 = vpop.f32.mrb[0].mxu0
      %2153 = vdwg.mxu0
      %v2154 = vadd.f32 %v1863, %v2084
      %v2155 = vadd.f32 %v1864, %v2087
      %v2156 = vadd.f32 %v1865, %v2092
      %v2157 = vadd.f32 %v1866, %v2095
      %v2158 = vadd.f32 %v1867, %v2100
      %v2159 = vadd.f32 %v1868, %v2103
      %v2160 = vadd.f32 %v1869, %v2108
      %v2161 = vadd.f32 %v1870, %v2111
      %v2162 = vadd.f32 %v1871, %v2116
      %v2163 = vadd.f32 %v1872, %v2119
      %v2164 = vadd.f32 %v1873, %v2124
      %v2165 = vadd.f32 %v1874, %v2127
      %v2166 = vadd.f32 %v1875, %v2132
      %v2167 = vadd.f32 %v1876, %v2135
      %v2168 = vadd.f32 %v1877, %v2140
      %v2169 = vadd.f32 %v1878, %v2143
      %v2170 = vadd.f32 %v1879, %v2148
      %v2171 = vadd.f32 %v1880, %v2151
      %v2172 = vld [vmem:[#allocation2 + $0x8] sm:$0xc]
      %s2173 = scalar_lea.vmem %s4, 320
      %v2174 = vld [vmem:[%s2173] sm:$0xf]
      %v2175 = vld [vmem:[%s2173 + $0x4] sm:$0xf]
      %v2176 = vld [vmem:[%s2173 + $0x8] sm:$0xf]
      %v2177 = vld [vmem:[%s2173 + $0xc] sm:$0xf]
      %v2178 = vld [vmem:[%s2173 + $0x10] sm:$0xf]
      %v2179 = vld [vmem:[%s2173 + $0x14] sm:$0xf]
      %v2180 = vld [vmem:[%s2173 + $0x18] sm:$0xf]
      %v2181 = vld [vmem:[%s2173 + $0x1c] sm:$0xf]
      %v2182 = vld [vmem:[%s2173 + $0x20] sm:$0xf]
      %v2183 = vld [vmem:[%s2173 + $0x24] sm:$0xf]
      %v2184 = vld [vmem:[%s2173 + $0x28] sm:$0xf]
      %v2185 = vld [vmem:[%s2173 + $0x2c] sm:$0xf]
      %v2186 = vld [vmem:[%s2173 + $0x30] sm:$0xf]
      %v2187 = vld [vmem:[%s2173 + $0x34] sm:$0xf]
      %v2188 = vld [vmem:[%s2173 + $0x38] sm:$0xf]
      %v2189 = vld [vmem:[%s2173 + $0x3c] sm:$0xf]
      %v2191 = vunpack.c.l.b16 %v2172
      %v2192 = vpack.c.b16 %v1654, %v2191
      %vm2193 = vcmask 1045504
      %v2194 = vrot.slane %v2192, 2
      %v2195 = vrot.slane %v1673, 2
      %v2196 = vsel %vm2193, %v2194, %v2195
      %v2197 = vrot.slane %v1674, 2
      %v2198 = vsel %vm2193, %v2195, %v2197
      %v2199 = vrot.slane %v1675, 2
      %v2200 = vsel %vm2193, %v2197, %v2199
      %v2201 = vrot.slane %v1676, 2
      %v2202 = vsel %vm2193, %v2199, %v2201
      %v2203 = vrot.slane %v1677, 2
      %v2204 = vsel %vm2193, %v2201, %v2203
      %v2205 = vrot.slane %v1678, 2
      %v2206 = vsel %vm2193, %v2203, %v2205
      %v2207 = vrot.slane %v1679, 2
      %v2208 = vsel %vm2193, %v2205, %v2207
      %v2209 = vrot.slane %v1680, 2
      %v2210 = vsel %vm2193, %v2207, %v2209
      %v2211 = vrot.slane %v1901, 2
      %v2212 = vsel %vm2193, %v2209, %v2211
      %v2238 = vunpack.c.l.b16 %v2174
      %v2239 = vunpack.c.l.b16 %v2175
      %v2240 = vunpack.c.l.b16 %v2176
      %v2241 = vunpack.c.l.b16 %v2177
      %v2242 = vunpack.c.l.b16 %v2178
      %v2243 = vunpack.c.l.b16 %v2179
      %v2244 = vunpack.c.l.b16 %v2180
      %v2245 = vunpack.c.l.b16 %v2181
      %v2246 = vunpack.c.l.b16 %v2182
      %v2247 = vunpack.c.l.b16 %v2183
      %v2248 = vunpack.c.l.b16 %v2184
      %v2249 = vunpack.c.l.b16 %v2185
      %v2250 = vunpack.c.l.b16 %v2186
      %v2251 = vunpack.c.l.b16 %v2187
      %v2252 = vunpack.c.l.b16 %v2188
      %v2253 = vunpack.c.l.b16 %v2189
      %v2254 = vpack.c.b16 %v2239, %v2238
      %v2255 = vpack.c.b16 %v2241, %v2240
      %v2256 = vpack.c.b16 %v2243, %v2242
      %v2257 = vpack.c.b16 %v2245, %v2244
      %v2258 = vpack.c.b16 %v2247, %v2246
      %v2259 = vpack.c.b16 %v2249, %v2248
      %v2260 = vpack.c.b16 %v2251, %v2250
      %v2261 = vpack.c.b16 %v2253, %v2252
      %2270 = vmatprep.subr.bf16.mxu0 0
      %2271 = vmatpush1.bf16.msra.mxu0 %v2254
      %2272 = vmatprep.subr.bf16.mxu0 0
      %2273 = vmatpush1.bf16.msra.mxu0 %v2255
      %2274 = vmatprep.subr.bf16.mxu0 0
      %2275 = vmatpush1.bf16.msra.mxu0 %v2256
      %2276 = vmatprep.subr.bf16.mxu0 0
      %2277 = vmatpush1.bf16.msra.mxu0 %v2257
      %2278 = vmatprep.subr.bf16.mxu0 0
      %2279 = vmatpush1.bf16.msra.mxu0 %v2258
      %2280 = vmatprep.subr.bf16.mxu0 0
      %2281 = vmatpush1.bf16.msra.mxu0 %v2259
      %2282 = vmatprep.subr.bf16.mxu0 0
      %2283 = vmatpush1.bf16.msra.mxu0 %v2260
      %2284 = vmatprep.subr.bf16.mxu0 0
      %2285 = vmatpush1.bf16.msra.mxu0 %v2261
      %2286 = vmatprep.subr.bf16.mxu0 0
      %2287 = vmatpush1.bf16.msra.mxu0 0
      %2288 = vmatprep.subr.bf16.mxu0 0
      %2289 = vmatpush1.bf16.msra.mxu0 0
      %2290 = vmatprep.subr.bf16.mxu0 0
      %2291 = vmatpush1.bf16.msra.mxu0 0
      %2292 = vmatprep.subr.bf16.mxu0 0
      %2293 = vmatpush1.bf16.msra.mxu0 0
      %2294 = vmatprep.subr.bf16.mxu0 0
      %2295 = vmatpush1.bf16.msra.mxu0 0
      %2296 = vmatprep.subr.bf16.mxu0 0
      %2297 = vmatpush1.bf16.msra.mxu0 0
      %2298 = vmatprep.subr.bf16.mxu0 0
      %2299 = vmatpush1.bf16.msra.mxu0 0
      %2300 = vmatprep.subr.bf16.mxu0 0
      %2301 = vmatpush1.bf16.msra.mxu0 0
      %2302 = vmatprep.mubr.bf16.mxu0 0
      %2303 = vmatmul.mubr.bf16.gmra.mrb[0].mxu0 %v2196
      %v2304 = vpop.f32.mrb[0].mxu0
      %v2305 = vadd.f32 0.0, %v2304
      %v2306 = vpop.f32.mrb[0].mxu0
      %v2307 = vpop.f32.mrb[0].mxu0
      %v2308 = vadd.f32 0.0, %v2307
      %v2309 = vpop.f32.mrb[0].mxu0
      %2310 = vmatprep.mubr.bf16.mxu0 0
      %2311 = vmatmul.mubr.bf16.gmra.mrb[0].mxu0 %v2198
      %v2312 = vpop.f32.mrb[0].mxu0
      %v2313 = vadd.f32 0.0, %v2312
      %v2314 = vpop.f32.mrb[0].mxu0
      %v2315 = vpop.f32.mrb[0].mxu0
      %v2316 = vadd.f32 0.0, %v2315
      %v2317 = vpop.f32.mrb[0].mxu0
      %2318 = vmatprep.mubr.bf16.mxu0 0
      %2319 = vmatmul.mubr.bf16.gmra.mrb[0].mxu0 %v2200
      %v2320 = vpop.f32.mrb[0].mxu0
      %v2321 = vadd.f32 0.0, %v2320
      %v2322 = vpop.f32.mrb[0].mxu0
      %v2323 = vpop.f32.mrb[0].mxu0
      %v2324 = vadd.f32 0.0, %v2323
      %v2325 = vpop.f32.mrb[0].mxu0
      %2326 = vmatprep.mubr.bf16.mxu0 0
      %2327 = vmatmul.mubr.bf16.gmra.mrb[0].mxu0 %v2202
      %v2328 = vpop.f32.mrb[0].mxu0
      %v2329 = vadd.f32 0.0, %v2328
      %v2330 = vpop.f32.mrb[0].mxu0
      %v2331 = vpop.f32.mrb[0].mxu0
      %v2332 = vadd.f32 0.0, %v2331
      %v2333 = vpop.f32.mrb[0].mxu0
      %2334 = vmatprep.mubr.bf16.mxu0 0
      %2335 = vmatmul.mubr.bf16.gmra.mrb[0].mxu0 %v2204
      %v2336 = vpop.f32.mrb[0].mxu0
      %v2337 = vadd.f32 0.0, %v2336
      %v2338 = vpop.f32.mrb[0].mxu0
      %v2339 = vpop.f32.mrb[0].mxu0
      %v2340 = vadd.f32 0.0, %v2339
      %v2341 = vpop.f32.mrb[0].mxu0
      %2342 = vmatprep.mubr.bf16.mxu0 0
      %2343 = vmatmul.mubr.bf16.gmra.mrb[0].mxu0 %v2206
      %v2344 = vpop.f32.mrb[0].mxu0
      %v2345 = vadd.f32 0.0, %v2344
      %v2346 = vpop.f32.mrb[0].mxu0
      %v2347 = vpop.f32.mrb[0].mxu0
      %v2348 = vadd.f32 0.0, %v2347
      %v2349 = vpop.f32.mrb[0].mxu0
      %2350 = vmatprep.mubr.bf16.mxu0 0
      %2351 = vmatmul.mubr.bf16.gmra.mrb[0].mxu0 %v2208
      %v2352 = vpop.f32.mrb[0].mxu0
      %v2353 = vadd.f32 0.0, %v2352
      %v2354 = vpop.f32.mrb[0].mxu0
      %v2355 = vpop.f32.mrb[0].mxu0
      %v2356 = vadd.f32 0.0, %v2355
      %v2357 = vpop.f32.mrb[0].mxu0
      %2358 = vmatprep.mubr.bf16.mxu0 0
      %2359 = vmatmul.mubr.bf16.gmra.mrb[0].mxu0 %v2210
      %v2360 = vpop.f32.mrb[0].mxu0
      %v2361 = vadd.f32 0.0, %v2360
      %v2362 = vpop.f32.mrb[0].mxu0
      %v2363 = vpop.f32.mrb[0].mxu0
      %v2364 = vadd.f32 0.0, %v2363
      %v2365 = vpop.f32.mrb[0].mxu0
      %2366 = vmatprep.mubr.bf16.mxu0 0
      %2367 = vmatmul.mubr.bf16.gmra.mrb[0].mxu0 %v2212
      %v2368 = vpop.f32.mrb[0].mxu0
      %v2369 = vadd.f32 0.0, %v2368
      %v2370 = vpop.f32.mrb[0].mxu0
      %v2371 = vpop.f32.mrb[0].mxu0
      %v2372 = vadd.f32 0.0, %v2371
      %v2373 = vpop.f32.mrb[0].mxu0
      %2374 = vdwg.mxu0
      %v2375 = vadd.f32 %v2154, %v2305
      %v2376 = vadd.f32 %v2155, %v2308
      %v2377 = vadd.f32 %v2156, %v2313
      %v2378 = vadd.f32 %v2157, %v2316
      %v2379 = vadd.f32 %v2158, %v2321
      %v2380 = vadd.f32 %v2159, %v2324
      %v2381 = vadd.f32 %v2160, %v2329
      %v2382 = vadd.f32 %v2161, %v2332
      %v2383 = vadd.f32 %v2162, %v2337
      %v2384 = vadd.f32 %v2163, %v2340
      %v2385 = vadd.f32 %v2164, %v2345
      %v2386 = vadd.f32 %v2165, %v2348
      %v2387 = vadd.f32 %v2166, %v2353
      %v2388 = vadd.f32 %v2167, %v2356
      %v2389 = vadd.f32 %v2168, %v2361
      %v2390 = vadd.f32 %v2169, %v2364
      %v2391 = vadd.f32 %v2170, %v2369
      %v2392 = vadd.f32 %v2171, %v2372
      %v2393 = vld [vmem:[#allocation2 + $0x10] sm:$0xc]
      %v2394 = vld [vmem:[#allocation2 + $0x14] sm:$0xf]
      %v2395 = vld [vmem:[#allocation2 + $0x18] sm:$0xf]
      %v2396 = vld [vmem:[#allocation2 + $0x1c] sm:$0xf]
      %v2397 = vld [vmem:[#allocation2 + $0x20] sm:$0xf]
      %v2398 = vld [vmem:[#allocation2 + $0x24] sm:$0xf]
      %v2399 = vld [vmem:[#allocation2 + $0x28] sm:$0xf]
      %v2400 = vld [vmem:[#allocation2 + $0x2c] sm:$0xf]
      %v2401 = vld [vmem:[#allocation2 + $0x30] sm:$0xf]
      %v2402 = vld [vmem:[#allocation2 + $0x34] sm:$0xf]
      %v2403 = vld [vmem:[#allocation2 + $0x38] sm:$0xf]
      %v2404 = vld [vmem:[#allocation2 + $0x3c] sm:$0xf]
      %v2405 = vld [vmem:[#allocation2 + $0x40] sm:$0xf]
      %v2406 = vld [vmem:[#allocation2 + $0x44] sm:$0xf]
      %v2407 = vld [vmem:[#allocation2 + $0x48] sm:$0xf]
      %v2408 = vld [vmem:[#allocation2 + $0x4c] sm:$0xf]
      %v2409 = vld [vmem:[#allocation2 + $0x50] sm:$0xf]
      %v2410 = vld [vmem:[#allocation2 + $0x54] sm:$0xf]
      %v2411 = vld [vmem:[#allocation2 + $0x58] sm:$0x3]
      %s2412 = scalar_lea.vmem %s4, 384
      %v2413 = vld [vmem:[%s2412] sm:$0xf]
      %v2414 = vld [vmem:[%s2412 + $0x4] sm:$0xf]
      %v2415 = vld [vmem:[%s2412 + $0x8] sm:$0xf]
      %v2416 = vld [vmem:[%s2412 + $0xc] sm:$0xf]
      %v2417 = vld [vmem:[%s2412 + $0x10] sm:$0xf]
      %v2418 = vld [vmem:[%s2412 + $0x14] sm:$0xf]
      %v2419 = vld [vmem:[%s2412 + $0x18] sm:$0xf]
      %v2420 = vld [vmem:[%s2412 + $0x1c] sm:$0xf]
      %v2421 = vld [vmem:[%s2412 + $0x20] sm:$0xf]
      %v2422 = vld [vmem:[%s2412 + $0x24] sm:$0xf]
      %v2423 = vld [vmem:[%s2412 + $0x28] sm:$0xf]
      %v2424 = vld [vmem:[%s2412 + $0x2c] sm:$0xf]
      %v2425 = vld [vmem:[%s2412 + $0x30] sm:$0xf]
      %v2426 = vld [vmem:[%s2412 + $0x34] sm:$0xf]
      %v2427 = vld [vmem:[%s2412 + $0x38] sm:$0xf]
      %v2428 = vld [vmem:[%s2412 + $0x3c] sm:$0xf]
      %v2448 = vunpack.c.l.b16 %v2393
      %v2449 = vunpack.c.l.b16 %v2394
      %v2450 = vunpack.c.l.b16 %v2395
      %v2451 = vunpack.c.l.b16 %v2396
      %v2452 = vunpack.c.l.b16 %v2397
      %v2453 = vunpack.c.l.b16 %v2398
      %v2454 = vunpack.c.l.b16 %v2399
      %v2455 = vunpack.c.l.b16 %v2400
      %v2456 = vunpack.c.l.b16 %v2401
      %v2457 = vunpack.c.l.b16 %v2402
      %v2458 = vunpack.c.l.b16 %v2403
      %v2459 = vunpack.c.l.b16 %v2404
      %v2460 = vunpack.c.l.b16 %v2405
      %v2461 = vunpack.c.l.b16 %v2406
      %v2462 = vunpack.c.l.b16 %v2407
      %v2463 = vunpack.c.l.b16 %v2408
      %v2464 = vunpack.c.l.b16 %v2409
      %v2465 = vunpack.c.l.b16 %v2410
      %v2466 = vunpack.c.l.b16 %v2411
      %v2467 = vpack.c.b16 %v2449, %v2448
      %v2468 = vpack.c.b16 %v2451, %v2450
      %v2469 = vpack.c.b16 %v2453, %v2452
      %v2470 = vpack.c.b16 %v2455, %v2454
      %v2471 = vpack.c.b16 %v2457, %v2456
      %v2472 = vpack.c.b16 %v2459, %v2458
      %v2473 = vpack.c.b16 %v2461, %v2460
      %v2474 = vpack.c.b16 %v2463, %v2462
      %v2475 = vpack.c.b16 %v2465, %v2464
      %v2476 = vpack.c.b16 %v2466, %v2466
      %v2477 = vrot.slane %v2467, 2
      %v2478 = vrot.slane %v2468, 2
      %v2479 = vsel %vm2193, %v2477, %v2478
      %v2480 = vrot.slane %v2469, 2
      %v2481 = vsel %vm2193, %v2478, %v2480
      %v2482 = vrot.slane %v2470, 2
      %v2483 = vsel %vm2193, %v2480, %v2482
      %v2484 = vrot.slane %v2471, 2
      %v2485 = vsel %vm2193, %v2482, %v2484
      %v2486 = vrot.slane %v2472, 2
      %v2487 = vsel %vm2193, %v2484, %v2486
      %v2488 = vrot.slane %v2473, 2
      %v2489 = vsel %vm2193, %v2486, %v2488
      %v2490 = vrot.slane %v2474, 2
      %v2491 = vsel %vm2193, %v2488, %v2490
      %v2492 = vrot.slane %v2475, 2
      %v2493 = vsel %vm2193, %v2490, %v2492
      %v2494 = vrot.slane %v2476, 2
      %v2495 = vsel %vm2193, %v2492, %v2494
      %v2521 = vunpack.c.l.b16 %v2413
      %v2522 = vunpack.c.l.b16 %v2414
      %v2523 = vunpack.c.l.b16 %v2415
      %v2524 = vunpack.c.l.b16 %v2416
      %v2525 = vunpack.c.l.b16 %v2417
      %v2526 = vunpack.c.l.b16 %v2418
      %v2527 = vunpack.c.l.b16 %v2419
      %v2528 = vunpack.c.l.b16 %v2420
      %v2529 = vunpack.c.l.b16 %v2421
      %v2530 = vunpack.c.l.b16 %v2422
      %v2531 = vunpack.c.l.b16 %v2423
      %v2532 = vunpack.c.l.b16 %v2424
      %v2533 = vunpack.c.l.b16 %v2425
      %v2534 = vunpack.c.l.b16 %v2426
      %v2535 = vunpack.c.l.b16 %v2427
      %v2536 = vunpack.c.l.b16 %v2428
      %v2537 = vpack.c.b16 %v2522, %v2521
      %v2538 = vpack.c.b16 %v2524, %v2523
      %v2539 = vpack.c.b16 %v2526, %v2525
      %v2540 = vpack.c.b16 %v2528, %v2527
      %v2541 = vpack.c.b16 %v2530, %v2529
      %v2542 = vpack.c.b16 %v2532, %v2531
      %v2543 = vpack.c.b16 %v2534, %v2533
      %v2544 = vpack.c.b16 %v2536, %v2535
      %2553 = vmatprep.subr.bf16.mxu0 0
      %2554 = vmatpush1.bf16.msra.mxu0 %v2537
      %2555 = vmatprep.subr.bf16.mxu0 0
      %2556 = vmatpush1.bf16.msra.mxu0 %v2538
      %2557 = vmatprep.subr.bf16.mxu0 0
      %2558 = vmatpush1.bf16.msra.mxu0 %v2539
      %2559 = vmatprep.subr.bf16.mxu0 0
      %2560 = vmatpush1.bf16.msra.mxu0 %v2540
      %2561 = vmatprep.subr.bf16.mxu0 0
      %2562 = vmatpush1.bf16.msra.mxu0 %v2541
      %2563 = vmatprep.subr.bf16.mxu0 0
      %2564 = vmatpush1.bf16.msra.mxu0 %v2542
      %2565 = vmatprep.subr.bf16.mxu0 0
      %2566 = vmatpush1.bf16.msra.mxu0 %v2543
      %2567 = vmatprep.subr.bf16.mxu0 0
      %2568 = vmatpush1.bf16.msra.mxu0 %v2544
      %2569 = vmatprep.subr.bf16.mxu0 0
      %2570 = vmatpush1.bf16.msra.mxu0 0
      %2571 = vmatprep.subr.bf16.mxu0 0
      %2572 = vmatpush1.bf16.msra.mxu0 0
      %2573 = vmatprep.subr.bf16.mxu0 0
      %2574 = vmatpush1.bf16.msra.mxu0 0
      %2575 = vmatprep.subr.bf16.mxu0 0
      %2576 = vmatpush1.bf16.msra.mxu0 0
      %2577 = vmatprep.subr.bf16.mxu0 0
      %2578 = vmatpush1.bf16.msra.mxu0 0
      %2579 = vmatprep.subr.bf16.mxu0 0
      %2580 = vmatpush1.bf16.msra.mxu0 0
      %2581 = vmatprep.subr.bf16.mxu0 0
      %2582 = vmatpush1.bf16.msra.mxu0 0
      %2583 = vmatprep.subr.bf16.mxu0 0
      %2584 = vmatpush1.bf16.msra.mxu0 0
      %2585 = vmatprep.mubr.bf16.mxu0 0
      %2586 = vmatmul.mubr.bf16.gmra.mrb[0].mxu0 %v2479
      %v2587 = vpop.f32.mrb[0].mxu0
      %v2588 = vadd.f32 0.0, %v2587
      %v2589 = vpop.f32.mrb[0].mxu0
      %v2590 = vpop.f32.mrb[0].mxu0
      %v2591 = vadd.f32 0.0, %v2590
      %v2592 = vpop.f32.mrb[0].mxu0
      %2593 = vmatprep.mubr.bf16.mxu0 0
      %2594 = vmatmul.mubr.bf16.gmra.mrb[0].mxu0 %v2481
      %v2595 = vpop.f32.mrb[0].mxu0
      %v2596 = vadd.f32 0.0, %v2595
      %v2597 = vpop.f32.mrb[0].mxu0
      %v2598 = vpop.f32.mrb[0].mxu0
      %v2599 = vadd.f32 0.0, %v2598
      %v2600 = vpop.f32.mrb[0].mxu0
      %2601 = vmatprep.mubr.bf16.mxu0 0
      %2602 = vmatmul.mubr.bf16.gmra.mrb[0].mxu0 %v2483
      %v2603 = vpop.f32.mrb[0].mxu0
      %v2604 = vadd.f32 0.0, %v2603
      %v2605 = vpop.f32.mrb[0].mxu0
      %v2606 = vpop.f32.mrb[0].mxu0
      %v2607 = vadd.f32 0.0, %v2606
      %v2608 = vpop.f32.mrb[0].mxu0
      %2609 = vmatprep.mubr.bf16.mxu0 0
      %2610 = vmatmul.mubr.bf16.gmra.mrb[0].mxu0 %v2485
      %v2611 = vpop.f32.mrb[0].mxu0
      %v2612 = vadd.f32 0.0, %v2611
      %v2613 = vpop.f32.mrb[0].mxu0
      %v2614 = vpop.f32.mrb[0].mxu0
      %v2615 = vadd.f32 0.0, %v2614
      %v2616 = vpop.f32.mrb[0].mxu0
      %2617 = vmatprep.mubr.bf16.mxu0 0
      %2618 = vmatmul.mubr.bf16.gmra.mrb[0].mxu0 %v2487
      %v2619 = vpop.f32.mrb[0].mxu0
      %v2620 = vadd.f32 0.0, %v2619
      %v2621 = vpop.f32.mrb[0].mxu0
      %v2622 = vpop.f32.mrb[0].mxu0
      %v2623 = vadd.f32 0.0, %v2622
      %v2624 = vpop.f32.mrb[0].mxu0
      %2625 = vmatprep.mubr.bf16.mxu0 0
      %2626 = vmatmul.mubr.bf16.gmra.mrb[0].mxu0 %v2489
      %v2627 = vpop.f32.mrb[0].mxu0
      %v2628 = vadd.f32 0.0, %v2627
      %v2629 = vpop.f32.mrb[0].mxu0
      %v2630 = vpop.f32.mrb[0].mxu0
      %v2631 = vadd.f32 0.0, %v2630
      %v2632 = vpop.f32.mrb[0].mxu0
      %2633 = vmatprep.mubr.bf16.mxu0 0
      %2634 = vmatmul.mubr.bf16.gmra.mrb[0].mxu0 %v2491
      %v2635 = vpop.f32.mrb[0].mxu0
      %v2636 = vadd.f32 0.0, %v2635
      %v2637 = vpop.f32.mrb[0].mxu0
      %v2638 = vpop.f32.mrb[0].mxu0
      %v2639 = vadd.f32 0.0, %v2638
      %v2640 = vpop.f32.mrb[0].mxu0
      %2641 = vmatprep.mubr.bf16.mxu0 0
      %2642 = vmatmul.mubr.bf16.gmra.mrb[0].mxu0 %v2493
      %v2643 = vpop.f32.mrb[0].mxu0
      %v2644 = vadd.f32 0.0, %v2643
      %v2645 = vpop.f32.mrb[0].mxu0
      %v2646 = vpop.f32.mrb[0].mxu0
      %v2647 = vadd.f32 0.0, %v2646
      %v2648 = vpop.f32.mrb[0].mxu0
      %2649 = vmatprep.mubr.bf16.mxu0 0
      %2650 = vmatmul.mubr.bf16.gmra.mrb[0].mxu0 %v2495
      %v2651 = vpop.f32.mrb[0].mxu0
      %v2652 = vadd.f32 0.0, %v2651
      %v2653 = vpop.f32.mrb[0].mxu0
      %v2654 = vpop.f32.mrb[0].mxu0
      %v2655 = vadd.f32 0.0, %v2654
      %v2656 = vpop.f32.mrb[0].mxu0
      %2657 = vdwg.mxu0
      %v2658 = vadd.f32 %v2375, %v2588
      %v2659 = vadd.f32 %v2376, %v2591
      %v2660 = vadd.f32 %v2377, %v2596
      %v2661 = vadd.f32 %v2378, %v2599
      %v2662 = vadd.f32 %v2379, %v2604
      %v2663 = vadd.f32 %v2380, %v2607
      %v2664 = vadd.f32 %v2381, %v2612
      %v2665 = vadd.f32 %v2382, %v2615
      %v2666 = vadd.f32 %v2383, %v2620
      %v2667 = vadd.f32 %v2384, %v2623
      %v2668 = vadd.f32 %v2385, %v2628
      %v2669 = vadd.f32 %v2386, %v2631
      %v2670 = vadd.f32 %v2387, %v2636
      %v2671 = vadd.f32 %v2388, %v2639
      %v2672 = vadd.f32 %v2389, %v2644
      %v2673 = vadd.f32 %v2390, %v2647
      %v2674 = vadd.f32 %v2391, %v2652
      %v2675 = vadd.f32 %v2392, %v2655
      %v2676 = vld [vmem:[#allocation2 + $0x58] sm:$0x7]
      %s2677 = scalar_lea.vmem %s4, 448
      %v2678 = vld [vmem:[%s2677] sm:$0xf]
      %v2679 = vld [vmem:[%s2677 + $0x4] sm:$0xf]
      %v2680 = vld [vmem:[%s2677 + $0x8] sm:$0xf]
      %v2681 = vld [vmem:[%s2677 + $0xc] sm:$0xf]
      %v2682 = vld [vmem:[%s2677 + $0x10] sm:$0xf]
      %v2683 = vld [vmem:[%s2677 + $0x14] sm:$0xf]
      %v2684 = vld [vmem:[%s2677 + $0x18] sm:$0xf]
      %v2685 = vld [vmem:[%s2677 + $0x1c] sm:$0xf]
      %v2686 = vld [vmem:[%s2677 + $0x20] sm:$0xf]
      %v2687 = vld [vmem:[%s2677 + $0x24] sm:$0xf]
      %v2688 = vld [vmem:[%s2677 + $0x28] sm:$0xf]
      %v2689 = vld [vmem:[%s2677 + $0x2c] sm:$0xf]
      %v2690 = vld [vmem:[%s2677 + $0x30] sm:$0xf]
      %v2691 = vld [vmem:[%s2677 + $0x34] sm:$0xf]
      %v2692 = vld [vmem:[%s2677 + $0x38] sm:$0xf]
      %v2693 = vld [vmem:[%s2677 + $0x3c] sm:$0xf]
      %v2695 = vunpack.c.l.b16 %v2676
      %v2696 = vpack.c.b16 %v2695, %v2695
      %vm2697 = vsmask.f32 5376
      %v2699 = vshrl.u32 %v2467, 16
      %v2701 = vrot.slane %v2699, 2
      %v2702 = vshll.u32 %v2467, 16
      %v2704 = vrot.slane %v2702, 3
      %v2705 = vor.u32 %v2701, %v2704
      %v2707 = vshrl.u32 %v2468, 16
      %v2709 = vrot.slane %v2707, 2
      %v2710 = vshll.u32 %v2468, 16
      %v2712 = vrot.slane %v2710, 3
      %v2713 = vor.u32 %v2709, %v2712
      %v2714 = vsel %vm2697, %v2705, %v2713
      %v2716 = vshrl.u32 %v2469, 16
      %v2718 = vrot.slane %v2716, 2
      %v2719 = vshll.u32 %v2469, 16
      %v2721 = vrot.slane %v2719, 3
      %v2722 = vor.u32 %v2718, %v2721
      %v2723 = vsel %vm2697, %v2713, %v2722
      %v2725 = vshrl.u32 %v2470, 16
      %v2727 = vrot.slane %v2725, 2
      %v2728 = vshll.u32 %v2470, 16
      %v2730 = vrot.slane %v2728, 3
      %v2731 = vor.u32 %v2727, %v2730
      %v2732 = vsel %vm2697, %v2722, %v2731
      %v2734 = vshrl.u32 %v2471, 16
      %v2736 = vrot.slane %v2734, 2
      %v2737 = vshll.u32 %v2471, 16
      %v2739 = vrot.slane %v2737, 3
      %v2740 = vor.u32 %v2736, %v2739
      %v2741 = vsel %vm2697, %v2731, %v2740
      %v2743 = vshrl.u32 %v2472, 16
      %v2745 = vrot.slane %v2743, 2
      %v2746 = vshll.u32 %v2472, 16
      %v2748 = vrot.slane %v2746, 3
      %v2749 = vor.u32 %v2745, %v2748
      %v2750 = vsel %vm2697, %v2740, %v2749
      %v2752 = vshrl.u32 %v2473, 16
      %v2754 = vrot.slane %v2752, 2
      %v2755 = vshll.u32 %v2473, 16
      %v2757 = vrot.slane %v2755, 3
      %v2758 = vor.u32 %v2754, %v2757
      %v2759 = vsel %vm2697, %v2749, %v2758
      %v2761 = vshrl.u32 %v2474, 16
      %v2763 = vrot.slane %v2761, 2
      %v2764 = vshll.u32 %v2474, 16
      %v2766 = vrot.slane %v2764, 3
      %v2767 = vor.u32 %v2763, %v2766
      %v2768 = vsel %vm2697, %v2758, %v2767
      %v2770 = vshrl.u32 %v2475, 16
      %v2772 = vrot.slane %v2770, 2
      %v2773 = vshll.u32 %v2475, 16
      %v2775 = vrot.slane %v2773, 3
      %v2776 = vor.u32 %v2772, %v2775
      %v2777 = vsel %vm2697, %v2767, %v2776
      %v2779 = vshrl.u32 %v2696, 16
      %v2781 = vrot.slane %v2779, 2
      %v2782 = vshll.u32 %v2696, 16
      %v2784 = vrot.slane %v2782, 3
      %v2785 = vor.u32 %v2781, %v2784
      %v2786 = vsel %vm2697, %v2776, %v2785
      %v2812 = vunpack.c.l.b16 %v2678
      %v2813 = vunpack.c.l.b16 %v2679
      %v2814 = vunpack.c.l.b16 %v2680
      %v2815 = vunpack.c.l.b16 %v2681
      %v2816 = vunpack.c.l.b16 %v2682
      %v2817 = vunpack.c.l.b16 %v2683
      %v2818 = vunpack.c.l.b16 %v2684
      %v2819 = vunpack.c.l.b16 %v2685
      %v2820 = vunpack.c.l.b16 %v2686
      %v2821 = vunpack.c.l.b16 %v2687
      %v2822 = vunpack.c.l.b16 %v2688
      %v2823 = vunpack.c.l.b16 %v2689
      %v2824 = vunpack.c.l.b16 %v2690
      %v2825 = vunpack.c.l.b16 %v2691
      %v2826 = vunpack.c.l.b16 %v2692
      %v2827 = vunpack.c.l.b16 %v2693
      %v2828 = vpack.c.b16 %v2813, %v2812
      %v2829 = vpack.c.b16 %v2815, %v2814
      %v2830 = vpack.c.b16 %v2817, %v2816
      %v2831 = vpack.c.b16 %v2819, %v2818
      %v2832 = vpack.c.b16 %v2821, %v2820
      %v2833 = vpack.c.b16 %v2823, %v2822
      %v2834 = vpack.c.b16 %v2825, %v2824
      %v2835 = vpack.c.b16 %v2827, %v2826
      %2844 = vmatprep.subr.bf16.mxu0 0
      %2845 = vmatpush1.bf16.msra.mxu0 %v2828
      %2846 = vmatprep.subr.bf16.mxu0 0
      %2847 = vmatpush1.bf16.msra.mxu0 %v2829
      %2848 = vmatprep.subr.bf16.mxu0 0
      %2849 = vmatpush1.bf16.msra.mxu0 %v2830
      %2850 = vmatprep.subr.bf16.mxu0 0
      %2851 = vmatpush1.bf16.msra.mxu0 %v2831
      %2852 = vmatprep.subr.bf16.mxu0 0
      %2853 = vmatpush1.bf16.msra.mxu0 %v2832
      %2854 = vmatprep.subr.bf16.mxu0 0
      %2855 = vmatpush1.bf16.msra.mxu0 %v2833
      %2856 = vmatprep.subr.bf16.mxu0 0
      %2857 = vmatpush1.bf16.msra.mxu0 %v2834
      %2858 = vmatprep.subr.bf16.mxu0 0
      %2859 = vmatpush1.bf16.msra.mxu0 %v2835
      %2860 = vmatprep.subr.bf16.mxu0 0
      %2861 = vmatpush1.bf16.msra.mxu0 0
      %2862 = vmatprep.subr.bf16.mxu0 0
      %2863 = vmatpush1.bf16.msra.mxu0 0
      %2864 = vmatprep.subr.bf16.mxu0 0
      %2865 = vmatpush1.bf16.msra.mxu0 0
      %2866 = vmatprep.subr.bf16.mxu0 0
      %2867 = vmatpush1.bf16.msra.mxu0 0
      %2868 = vmatprep.subr.bf16.mxu0 0
      %2869 = vmatpush1.bf16.msra.mxu0 0
      %2870 = vmatprep.subr.bf16.mxu0 0
      %2871 = vmatpush1.bf16.msra.mxu0 0
      %2872 = vmatprep.subr.bf16.mxu0 0
      %2873 = vmatpush1.bf16.msra.mxu0 0
      %2874 = vmatprep.subr.bf16.mxu0 0
      %2875 = vmatpush1.bf16.msra.mxu0 0
      %2876 = vmatprep.mubr.bf16.mxu0 0
      %2877 = vmatmul.mubr.bf16.gmra.mrb[0].mxu0 %v2714
      %v2878 = vpop.f32.mrb[0].mxu0
      %v2879 = vadd.f32 0.0, %v2878
      %v2880 = vpop.f32.mrb[0].mxu0
      %v2881 = vpop.f32.mrb[0].mxu0
      %v2882 = vadd.f32 0.0, %v2881
      %v2883 = vpop.f32.mrb[0].mxu0
      %2884 = vmatprep.mubr.bf16.mxu0 0
      %2885 = vmatmul.mubr.bf16.gmra.mrb[0].mxu0 %v2723
      %v2886 = vpop.f32.mrb[0].mxu0
      %v2887 = vadd.f32 0.0, %v2886
      %v2888 = vpop.f32.mrb[0].mxu0
      %v2889 = vpop.f32.mrb[0].mxu0
      %v2890 = vadd.f32 0.0, %v2889
      %v2891 = vpop.f32.mrb[0].mxu0
      %2892 = vmatprep.mubr.bf16.mxu0 0
      %2893 = vmatmul.mubr.bf16.gmra.mrb[0].mxu0 %v2732
      %v2894 = vpop.f32.mrb[0].mxu0
      %v2895 = vadd.f32 0.0, %v2894
      %v2896 = vpop.f32.mrb[0].mxu0
      %v2897 = vpop.f32.mrb[0].mxu0
      %v2898 = vadd.f32 0.0, %v2897
      %v2899 = vpop.f32.mrb[0].mxu0
      %2900 = vmatprep.mubr.bf16.mxu0 0
      %2901 = vmatmul.mubr.bf16.gmra.mrb[0].mxu0 %v2741
      %v2902 = vpop.f32.mrb[0].mxu0
      %v2903 = vadd.f32 0.0, %v2902
      %v2904 = vpop.f32.mrb[0].mxu0
      %v2905 = vpop.f32.mrb[0].mxu0
      %v2906 = vadd.f32 0.0, %v2905
      %v2907 = vpop.f32.mrb[0].mxu0
      %2908 = vmatprep.mubr.bf16.mxu0 0
      %2909 = vmatmul.mubr.bf16.gmra.mrb[0].mxu0 %v2750
      %v2910 = vpop.f32.mrb[0].mxu0
      %v2911 = vadd.f32 0.0, %v2910
      %v2912 = vpop.f32.mrb[0].mxu0
      %v2913 = vpop.f32.mrb[0].mxu0
      %v2914 = vadd.f32 0.0, %v2913
      %v2915 = vpop.f32.mrb[0].mxu0
      %2916 = vmatprep.mubr.bf16.mxu0 0
      %2917 = vmatmul.mubr.bf16.gmra.mrb[0].mxu0 %v2759
      %v2918 = vpop.f32.mrb[0].mxu0
      %v2919 = vadd.f32 0.0, %v2918
      %v2920 = vpop.f32.mrb[0].mxu0
      %v2921 = vpop.f32.mrb[0].mxu0
      %v2922 = vadd.f32 0.0, %v2921
      %v2923 = vpop.f32.mrb[0].mxu0
      %2924 = vmatprep.mubr.bf16.mxu0 0
      %2925 = vmatmul.mubr.bf16.gmra.mrb[0].mxu0 %v2768
      %v2926 = vpop.f32.mrb[0].mxu0
      %v2927 = vadd.f32 0.0, %v2926
      %v2928 = vpop.f32.mrb[0].mxu0
      %v2929 = vpop.f32.mrb[0].mxu0
      %v2930 = vadd.f32 0.0, %v2929
      %v2931 = vpop.f32.mrb[0].mxu0
      %2932 = vmatprep.mubr.bf16.mxu0 0
      %2933 = vmatmul.mubr.bf16.gmra.mrb[0].mxu0 %v2777
      %v2934 = vpop.f32.mrb[0].mxu0
      %v2935 = vadd.f32 0.0, %v2934
      %v2936 = vpop.f32.mrb[0].mxu0
      %v2937 = vpop.f32.mrb[0].mxu0
      %v2938 = vadd.f32 0.0, %v2937
      %v2939 = vpop.f32.mrb[0].mxu0
      %2940 = vmatprep.mubr.bf16.mxu0 0
      %2941 = vmatmul.mubr.bf16.gmra.mrb[0].mxu0 %v2786
      %v2942 = vpop.f32.mrb[0].mxu0
      %v2943 = vadd.f32 0.0, %v2942
      %v2944 = vpop.f32.mrb[0].mxu0
      %v2945 = vpop.f32.mrb[0].mxu0
      %v2946 = vadd.f32 0.0, %v2945
      %v2947 = vpop.f32.mrb[0].mxu0
      %2948 = vdwg.mxu0
      %v2949 = vadd.f32 %v2658, %v2879
      %v2950 = vadd.f32 %v2659, %v2882
      %v2951 = vadd.f32 %v2660, %v2887
      %v2952 = vadd.f32 %v2661, %v2890
      %v2953 = vadd.f32 %v2662, %v2895
      %v2954 = vadd.f32 %v2663, %v2898
      %v2955 = vadd.f32 %v2664, %v2903
      %v2956 = vadd.f32 %v2665, %v2906
      %v2957 = vadd.f32 %v2666, %v2911
      %v2958 = vadd.f32 %v2667, %v2914
      %v2959 = vadd.f32 %v2668, %v2919
      %v2960 = vadd.f32 %v2669, %v2922
      %v2961 = vadd.f32 %v2670, %v2927
      %v2962 = vadd.f32 %v2671, %v2930
      %v2963 = vadd.f32 %v2672, %v2935
      %v2964 = vadd.f32 %v2673, %v2938
      %v2965 = vadd.f32 %v2674, %v2943
      %v2966 = vadd.f32 %v2675, %v2946
      %v2967 = vld [vmem:[#allocation2 + $0x10] sm:$0x8]
      %s2968 = scalar_lea.vmem %s4, 512
      %v2969 = vld [vmem:[%s2968] sm:$0xf]
      %v2970 = vld [vmem:[%s2968 + $0x4] sm:$0xf]
      %v2971 = vld [vmem:[%s2968 + $0x8] sm:$0xf]
      %v2972 = vld [vmem:[%s2968 + $0xc] sm:$0xf]
      %v2973 = vld [vmem:[%s2968 + $0x10] sm:$0xf]
      %v2974 = vld [vmem:[%s2968 + $0x14] sm:$0xf]
      %v2975 = vld [vmem:[%s2968 + $0x18] sm:$0xf]
      %v2976 = vld [vmem:[%s2968 + $0x1c] sm:$0xf]
      %v2977 = vld [vmem:[%s2968 + $0x20] sm:$0xf]
      %v2978 = vld [vmem:[%s2968 + $0x24] sm:$0xf]
      %v2979 = vld [vmem:[%s2968 + $0x28] sm:$0xf]
      %v2980 = vld [vmem:[%s2968 + $0x2c] sm:$0xf]
      %v2981 = vld [vmem:[%s2968 + $0x30] sm:$0xf]
      %v2982 = vld [vmem:[%s2968 + $0x34] sm:$0xf]
      %v2983 = vld [vmem:[%s2968 + $0x38] sm:$0xf]
      %v2984 = vld [vmem:[%s2968 + $0x3c] sm:$0xf]
      %v2986 = vunpack.c.l.b16 %v2967
      %v2987 = vpack.c.b16 %v2449, %v2986
      %vm2988 = vcmask 1044480
      %v2989 = vrot.slane %v2987, 3
      %v2990 = vrot.slane %v2468, 3
      %v2991 = vsel %vm2988, %v2989, %v2990
      %v2992 = vrot.slane %v2469, 3
      %v2993 = vsel %vm2988, %v2990, %v2992
      %v2994 = vrot.slane %v2470, 3
      %v2995 = vsel %vm2988, %v2992, %v2994
      %v2996 = vrot.slane %v2471, 3
      %v2997 = vsel %vm2988, %v2994, %v2996
      %v2998 = vrot.slane %v2472, 3
      %v2999 = vsel %vm2988, %v2996, %v2998
      %v3000 = vrot.slane %v2473, 3
      %v3001 = vsel %vm2988, %v2998, %v3000
      %v3002 = vrot.slane %v2474, 3
      %v3003 = vsel %vm2988, %v3000, %v3002
      %v3004 = vrot.slane %v2475, 3
      %v3005 = vsel %vm2988, %v3002, %v3004
      %v3006 = vrot.slane %v2696, 3
      %v3007 = vsel %vm2988, %v3004, %v3006
      %v3033 = vunpack.c.l.b16 %v2969
      %v3034 = vunpack.c.l.b16 %v2970
      %v3035 = vunpack.c.l.b16 %v2971
      %v3036 = vunpack.c.l.b16 %v2972
      %v3037 = vunpack.c.l.b16 %v2973
      %v3038 = vunpack.c.l.b16 %v2974
      %v3039 = vunpack.c.l.b16 %v2975
      %v3040 = vunpack.c.l.b16 %v2976
      %v3041 = vunpack.c.l.b16 %v2977
      %v3042 = vunpack.c.l.b16 %v2978
      %v3043 = vunpack.c.l.b16 %v2979
      %v3044 = vunpack.c.l.b16 %v2980
      %v3045 = vunpack.c.l.b16 %v2981
      %v3046 = vunpack.c.l.b16 %v2982
      %v3047 = vunpack.c.l.b16 %v2983
      %v3048 = vunpack.c.l.b16 %v2984
      %v3049 = vpack.c.b16 %v3034, %v3033
      %v3050 = vpack.c.b16 %v3036, %v3035
      %v3051 = vpack.c.b16 %v3038, %v3037
      %v3052 = vpack.c.b16 %v3040, %v3039
      %v3053 = vpack.c.b16 %v3042, %v3041
      %v3054 = vpack.c.b16 %v3044, %v3043
      %v3055 = vpack.c.b16 %v3046, %v3045
      %v3056 = vpack.c.b16 %v3048, %v3047
      %3065 = vmatprep.subr.bf16.mxu0 0
      %3066 = vmatpush1.bf16.msra.mxu0 %v3049
      %3067 = vmatprep.subr.bf16.mxu0 0
      %3068 = vmatpush1.bf16.msra.mxu0 %v3050
      %3069 = vmatprep.subr.bf16.mxu0 0
      %3070 = vmatpush1.bf16.msra.mxu0 %v3051
      %3071 = vmatprep.subr.bf16.mxu0 0
      %3072 = vmatpush1.bf16.msra.mxu0 %v3052
      %3073 = vmatprep.subr.bf16.mxu0 0
      %3074 = vmatpush1.bf16.msra.mxu0 %v3053
      %3075 = vmatprep.subr.bf16.mxu0 0
      %3076 = vmatpush1.bf16.msra.mxu0 %v3054
      %3077 = vmatprep.subr.bf16.mxu0 0
      %3078 = vmatpush1.bf16.msra.mxu0 %v3055
      %3079 = vmatprep.subr.bf16.mxu0 0
      %3080 = vmatpush1.bf16.msra.mxu0 %v3056
      %3081 = vmatprep.subr.bf16.mxu0 0
      %3082 = vmatpush1.bf16.msra.mxu0 0
      %3083 = vmatprep.subr.bf16.mxu0 0
      %3084 = vmatpush1.bf16.msra.mxu0 0
      %3085 = vmatprep.subr.bf16.mxu0 0
      %3086 = vmatpush1.bf16.msra.mxu0 0
      %3087 = vmatprep.subr.bf16.mxu0 0
      %3088 = vmatpush1.bf16.msra.mxu0 0
      %3089 = vmatprep.subr.bf16.mxu0 0
      %3090 = vmatpush1.bf16.msra.mxu0 0
      %3091 = vmatprep.subr.bf16.mxu0 0
      %3092 = vmatpush1.bf16.msra.mxu0 0
      %3093 = vmatprep.subr.bf16.mxu0 0
      %3094 = vmatpush1.bf16.msra.mxu0 0
      %3095 = vmatprep.subr.bf16.mxu0 0
      %3096 = vmatpush1.bf16.msra.mxu0 0
      %3097 = vmatprep.mubr.bf16.mxu0 0
      %3098 = vmatmul.mubr.bf16.gmra.mrb[0].mxu0 %v2991
      %v3099 = vpop.f32.mrb[0].mxu0
      %v3100 = vadd.f32 0.0, %v3099
      %v3101 = vpop.f32.mrb[0].mxu0
      %v3102 = vpop.f32.mrb[0].mxu0
      %v3103 = vadd.f32 0.0, %v3102
      %v3104 = vpop.f32.mrb[0].mxu0
      %3105 = vmatprep.mubr.bf16.mxu0 0
      %3106 = vmatmul.mubr.bf16.gmra.mrb[0].mxu0 %v2993
      %v3107 = vpop.f32.mrb[0].mxu0
      %v3108 = vadd.f32 0.0, %v3107
      %v3109 = vpop.f32.mrb[0].mxu0
      %v3110 = vpop.f32.mrb[0].mxu0
      %v3111 = vadd.f32 0.0, %v3110
      %v3112 = vpop.f32.mrb[0].mxu0
      %3113 = vmatprep.mubr.bf16.mxu0 0
      %3114 = vmatmul.mubr.bf16.gmra.mrb[0].mxu0 %v2995
      %v3115 = vpop.f32.mrb[0].mxu0
      %v3116 = vadd.f32 0.0, %v3115
      %v3117 = vpop.f32.mrb[0].mxu0
      %v3118 = vpop.f32.mrb[0].mxu0
      %v3119 = vadd.f32 0.0, %v3118
      %v3120 = vpop.f32.mrb[0].mxu0
      %3121 = vmatprep.mubr.bf16.mxu0 0
      %3122 = vmatmul.mubr.bf16.gmra.mrb[0].mxu0 %v2997
      %v3123 = vpop.f32.mrb[0].mxu0
      %v3124 = vadd.f32 0.0, %v3123
      %v3125 = vpop.f32.mrb[0].mxu0
      %v3126 = vpop.f32.mrb[0].mxu0
      %v3127 = vadd.f32 0.0, %v3126
      %v3128 = vpop.f32.mrb[0].mxu0
      %3129 = vmatprep.mubr.bf16.mxu0 0
      %3130 = vmatmul.mubr.bf16.gmra.mrb[0].mxu0 %v2999
      %v3131 = vpop.f32.mrb[0].mxu0
      %v3132 = vadd.f32 0.0, %v3131
      %v3133 = vpop.f32.mrb[0].mxu0
      %v3134 = vpop.f32.mrb[0].mxu0
      %v3135 = vadd.f32 0.0, %v3134
      %v3136 = vpop.f32.mrb[0].mxu0
      %3137 = vmatprep.mubr.bf16.mxu0 0
      %3138 = vmatmul.mubr.bf16.gmra.mrb[0].mxu0 %v3001
      %v3139 = vpop.f32.mrb[0].mxu0
      %v3140 = vadd.f32 0.0, %v3139
      %v3141 = vpop.f32.mrb[0].mxu0
      %v3142 = vpop.f32.mrb[0].mxu0
      %v3143 = vadd.f32 0.0, %v3142
      %v3144 = vpop.f32.mrb[0].mxu0
      %3145 = vmatprep.mubr.bf16.mxu0 0
      %3146 = vmatmul.mubr.bf16.gmra.mrb[0].mxu0 %v3003
      %v3147 = vpop.f32.mrb[0].mxu0
      %v3148 = vadd.f32 0.0, %v3147
      %v3149 = vpop.f32.mrb[0].mxu0
      %v3150 = vpop.f32.mrb[0].mxu0
      %v3151 = vadd.f32 0.0, %v3150
      %v3152 = vpop.f32.mrb[0].mxu0
      %3153 = vmatprep.mubr.bf16.mxu0 0
      %3154 = vmatmul.mubr.bf16.gmra.mrb[0].mxu0 %v3005
      %v3155 = vpop.f32.mrb[0].mxu0
      %v3156 = vadd.f32 0.0, %v3155
      %v3157 = vpop.f32.mrb[0].mxu0
      %v3158 = vpop.f32.mrb[0].mxu0
      %v3159 = vadd.f32 0.0, %v3158
      %v3160 = vpop.f32.mrb[0].mxu0
      %3161 = vmatprep.mubr.bf16.mxu0 0
      %3162 = vmatmul.mubr.bf16.gmra.mrb[0].mxu0 %v3007
      %v3163 = vpop.f32.mrb[0].mxu0
      %v3164 = vadd.f32 0.0, %v3163
      %v3165 = vpop.f32.mrb[0].mxu0
      %v3166 = vpop.f32.mrb[0].mxu0
      %v3167 = vadd.f32 0.0, %v3166
      %v3168 = vpop.f32.mrb[0].mxu0
      %3169 = vdwg.mxu0
      %v3170 = vadd.f32 %v2949, %v3100
      %v3171 = vadd.f32 %v2950, %v3103
      %v3172 = vadd.f32 %v2951, %v3108
      %v3173 = vadd.f32 %v2952, %v3111
      %v3174 = vadd.f32 %v2953, %v3116
      %v3175 = vadd.f32 %v2954, %v3119
      %v3176 = vadd.f32 %v2955, %v3124
      %v3177 = vadd.f32 %v2956, %v3127
      %v3178 = vadd.f32 %v2957, %v3132
      %v3179 = vadd.f32 %v2958, %v3135
      %v3180 = vadd.f32 %v2959, %v3140
      %v3181 = vadd.f32 %v2960, %v3143
      %v3182 = vadd.f32 %v2961, %v3148
      %v3183 = vadd.f32 %v2962, %v3151
      %v3184 = vadd.f32 %v2963, %v3156
      %v3185 = vadd.f32 %v2964, %v3159
      %v3186 = vadd.f32 %v2965, %v3164
      %v3187 = vadd.f32 %v2966, %v3167
      %v3188 = vpack.c.bf16 %v3171, %v3170
      %v3190 = vunpack.c.l.b16 %v3188
      %v3191 = vunpack.c.h.b16 %v3188
      %v3192 = vpack.c.b16 %v3190, %v3190
      %v3193 = vpack.c.b16 %v3191, %v3191
      %3196 = vst [vmem:[%s336] sm:$0xf] %v3192
      %3197 = vst [vmem:[%s336 + $0x4] sm:$0xf] %v3193
      %v3198 = vadd.f32 %v3170, %v3171
      %v3199 = vrot.slane %v3198, 4
      %v3200 = vadd.f32 %v3198, %v3199
      %v3201 = vrot.slane %v3200, 2
      %v3202 = vadd.f32 %v3200, %v3201
      %v3203 = vrot.slane %v3202, 1
      %v3204 = vadd.f32 %v3202, %v3203
      %v3205 = vadd.f32 %v3204, 0.0
      %v3206 = vmul.f32 %v3170, %v3170
      %v3207 = vmul.f32 %v3171, %v3171
      %v3208 = vadd.f32 %v3206, %v3207
      %v3209 = vrot.slane %v3208, 4
      %v3210 = vadd.f32 %v3208, %v3209
      %v3211 = vrot.slane %v3210, 2
      %v3212 = vadd.f32 %v3210, %v3211
      %v3213 = vrot.slane %v3212, 1
      %v3214 = vadd.f32 %v3212, %v3213
      %v3215 = vadd.f32 %v3214, 0.0
      %v3216 = vpack.c.bf16 %v3173, %v3172
      %v3217 = vpack.c.bf16 %v3174, %v3174
      %v3220 = vunpack.c.l.b16 %v3216
      %v3221 = vunpack.c.h.b16 %v3216
      %v3222 = vunpack.c.l.b16 %v3217
      %v3223 = vpack.c.b16 %v3220, %v3220
      %v3224 = vpack.c.b16 %v3221, %v3221
      %v3225 = vpack.c.b16 %v3222, %v3222
      %vm3226 = vcmask 1046532
      %vm3227 = vmor %vm668, %vm3226
      %v3228 = vrot.slane %v3223, 5
      %v3229 = vrot.slane %v3228, 4
      %v3230 = vrot.slane %v3224, 5
      %v3231 = vsel %vm3227, %v3229, %v3230
      %v3232 = vrot.slane %v3230, 4
      %v3233 = vrot.slane %v3225, 5
      %v3234 = vsel %vm3227, %v3232, %v3233
      %3237 = vst [vmem:[%s336 + $0x8] sm:$0xf] %v3231
      %3238 = vst [vmem:[%s336 + $0xc] sm:$0xf] %v3234
      %vm3242 = vcmask 1045504
      %v3243 = vrot.slane %v3172, 2
      %v3244 = vrot.slane %v3173, 2
      %v3245 = vsel %vm3242, %v3243, %v3244
      %v3246 = vrot.slane %v3174, 2
      %v3247 = vsel %vm3242, %v3244, %v3246
      %v3250 = vadd.f32 %v3245, %v3247
      %v3251 = vrot.slane %v3250, 4
      %v3252 = vadd.f32 %v3250, %v3251
      %v3253 = vrot.slane %v3252, 2
      %v3254 = vadd.f32 %v3252, %v3253
      %v3255 = vrot.slane %v3254, 1
      %v3256 = vadd.f32 %v3254, %v3255
      %v3257 = vadd.f32 %v3205, %v3256
      %v3258 = vmul.f32 %v3172, %v3172
      %v3259 = vmul.f32 %v3173, %v3173
      %v3260 = vmul.f32 %v3174, %v3174
      %v3264 = vrot.slane %v3258, 2
      %v3265 = vrot.slane %v3259, 2
      %v3266 = vsel %vm3242, %v3264, %v3265
      %v3267 = vrot.slane %v3260, 2
      %v3268 = vsel %vm3242, %v3265, %v3267
      %v3271 = vadd.f32 %v3266, %v3268
      %v3272 = vrot.slane %v3271, 4
      %v3273 = vadd.f32 %v3271, %v3272
      %v3274 = vrot.slane %v3273, 2
      %v3275 = vadd.f32 %v3273, %v3274
      %v3276 = vrot.slane %v3275, 1
      %v3277 = vadd.f32 %v3275, %v3276
      %v3278 = vadd.f32 %v3215, %v3277
      %v3279 = vpack.c.bf16 %v3175, %v3174
      %v3280 = vpack.c.bf16 %v3176, %v3176
      %v3283 = vunpack.c.l.b16 %v3279
      %v3284 = vunpack.c.h.b16 %v3279
      %v3285 = vunpack.c.l.b16 %v3280
      %v3286 = vpack.c.b16 %v3283, %v3283
      %v3287 = vpack.c.b16 %v3284, %v3284
      %v3288 = vpack.c.b16 %v3285, %v3285
      %vm3289 = vcmask 1045508
      %vm3290 = vmor %vm594, %vm3289
      %v3291 = vrot.slane %v3286, 6
      %v3292 = vrot.slane %v3291, 4
      %v3293 = vrot.slane %v3287, 6
      %v3294 = vsel %vm3290, %v3292, %v3293
      %v3295 = vrot.slane %v3293, 4
      %v3296 = vrot.slane %v3288, 6
      %v3297 = vsel %vm3290, %v3295, %v3296
      %3300 = vst [vmem:[%s336 + $0x10] sm:$0xf] %v3294
      %3301 = vst [vmem:[%s336 + $0x14] sm:$0xf] %v3297
      %vm3304 = vcmask 1043456
      %v3305 = vrot.slane %v3174, 4
      %v3306 = vrot.slane %v3175, 4
      %v3307 = vsel %vm3304, %v3305, %v3306
      %v3308 = vrot.slane %v3176, 4
      %v3309 = vsel %vm3304, %v3306, %v3308
      %v3312 = vadd.f32 %v3307, %v3309
      %v3313 = vrot.slane %v3312, 4
      %v3314 = vadd.f32 %v3312, %v3313
      %v3315 = vrot.slane %v3314, 2
      %v3316 = vadd.f32 %v3314, %v3315
      %v3317 = vrot.slane %v3316, 1
      %v3318 = vadd.f32 %v3316, %v3317
      %v3319 = vadd.f32 %v3257, %v3318
      %v3320 = vmul.f32 %v3175, %v3175
      %v3321 = vmul.f32 %v3176, %v3176
      %v3324 = vrot.slane %v3260, 4
      %v3325 = vrot.slane %v3320, 4
      %v3326 = vsel %vm3304, %v3324, %v3325
      %v3327 = vrot.slane %v3321, 4
      %v3328 = vsel %vm3304, %v3325, %v3327
      %v3331 = vadd.f32 %v3326, %v3328
      %v3332 = vrot.slane %v3331, 4
      %v3333 = vadd.f32 %v3331, %v3332
      %v3334 = vrot.slane %v3333, 2
      %v3335 = vadd.f32 %v3333, %v3334
      %v3336 = vrot.slane %v3335, 1
      %v3337 = vadd.f32 %v3335, %v3336
      %v3338 = vadd.f32 %v3278, %v3337
      %v3339 = vpack.c.bf16 %v3177, %v3176
      %v3340 = vpack.c.bf16 %v3178, %v3178
      %v3343 = vunpack.c.l.b16 %v3339
      %v3344 = vunpack.c.h.b16 %v3339
      %v3345 = vunpack.c.l.b16 %v3340
      %v3346 = vpack.c.b16 %v3343, %v3343
      %v3347 = vpack.c.b16 %v3344, %v3344
      %v3348 = vpack.c.b16 %v3345, %v3345
      %vm3349 = vcmask 1044484
      %vm3350 = vmor %vm453, %vm3349
      %v3351 = vrot.slane %v3346, 7
      %v3352 = vrot.slane %v3351, 4
      %v3353 = vrot.slane %v3347, 7
      %v3354 = vsel %vm3350, %v3352, %v3353
      %v3355 = vrot.slane %v3353, 4
      %v3356 = vrot.slane %v3348, 7
      %v3357 = vsel %vm3350, %v3355, %v3356
      %3360 = vst [vmem:[%s336 + $0x18] sm:$0xf] %v3354
      %3361 = vst [vmem:[%s336 + $0x1c] sm:$0xf] %v3357
      %vm3364 = vcmask 1041408
      %v3365 = vrot.slane %v3176, 6
      %v3366 = vrot.slane %v3177, 6
      %v3367 = vsel %vm3364, %v3365, %v3366
      %v3368 = vrot.slane %v3178, 6
      %v3369 = vsel %vm3364, %v3366, %v3368
      %v3372 = vadd.f32 %v3367, %v3369
      %v3373 = vrot.slane %v3372, 4
      %v3374 = vadd.f32 %v3372, %v3373
      %v3375 = vrot.slane %v3374, 2
      %v3376 = vadd.f32 %v3374, %v3375
      %v3377 = vrot.slane %v3376, 1
      %v3378 = vadd.f32 %v3376, %v3377
      %v3379 = vadd.f32 %v3319, %v3378
      %v3380 = vmul.f32 %v3177, %v3177
      %v3381 = vmul.f32 %v3178, %v3178
      %v3384 = vrot.slane %v3321, 6
      %v3385 = vrot.slane %v3380, 6
      %v3386 = vsel %vm3364, %v3384, %v3385
      %v3387 = vrot.slane %v3381, 6
      %v3388 = vsel %vm3364, %v3385, %v3387
      %v3391 = vadd.f32 %v3386, %v3388
      %v3392 = vrot.slane %v3391, 4
      %v3393 = vadd.f32 %v3391, %v3392
      %v3394 = vrot.slane %v3393, 2
      %v3395 = vadd.f32 %v3393, %v3394
      %v3396 = vrot.slane %v3395, 1
      %v3397 = vadd.f32 %v3395, %v3396
      %v3398 = vadd.f32 %v3338, %v3397
      %v3399 = vpack.c.bf16 %v3180, %v3179
      %v3401 = vunpack.c.l.b16 %v3399
      %v3402 = vunpack.c.h.b16 %v3399
      %v3403 = vpack.c.b16 %v3401, %v3401
      %v3404 = vpack.c.b16 %v3402, %v3402
      %3407 = vst [vmem:[%s336 + $0x20] sm:$0xf] %v3403
      %3408 = vst [vmem:[%s336 + $0x24] sm:$0xf] %v3404
      %v3409 = vadd.f32 %v3179, %v3180
      %v3410 = vrot.slane %v3409, 4
      %v3411 = vadd.f32 %v3409, %v3410
      %v3412 = vrot.slane %v3411, 2
      %v3413 = vadd.f32 %v3411, %v3412
      %v3414 = vrot.slane %v3413, 1
      %v3415 = vadd.f32 %v3413, %v3414
      %v3416 = vadd.f32 %v3379, %v3415
      %v3417 = vmul.f32 %v3179, %v3179
      %v3418 = vmul.f32 %v3180, %v3180
      %v3419 = vadd.f32 %v3417, %v3418
      %v3420 = vrot.slane %v3419, 4
      %v3421 = vadd.f32 %v3419, %v3420
      %v3422 = vrot.slane %v3421, 2
      %v3423 = vadd.f32 %v3421, %v3422
      %v3424 = vrot.slane %v3423, 1
      %v3425 = vadd.f32 %v3423, %v3424
      %v3426 = vadd.f32 %v3398, %v3425
      %v3427 = vpack.c.bf16 %v3182, %v3181
      %v3428 = vpack.c.bf16 %v3183, %v3183
      %v3431 = vunpack.c.l.b16 %v3427
      %v3432 = vunpack.c.h.b16 %v3427
      %v3433 = vunpack.c.l.b16 %v3428
      %v3434 = vpack.c.b16 %v3431, %v3431
      %v3435 = vpack.c.b16 %v3432, %v3432
      %v3436 = vpack.c.b16 %v3433, %v3433
      %v3437 = vrot.slane %v3434, 5
      %v3438 = vrot.slane %v3437, 4
      %v3439 = vrot.slane %v3435, 5
      %v3440 = vsel %vm3227, %v3438, %v3439
      %v3441 = vrot.slane %v3439, 4
      %v3442 = vrot.slane %v3436, 5
      %v3443 = vsel %vm3227, %v3441, %v3442
      %3446 = vst [vmem:[%s336 + $0x28] sm:$0xf] %v3440
      %3447 = vst [vmem:[%s336 + $0x2c] sm:$0xf] %v3443
      %v3451 = vrot.slane %v3181, 2
      %v3452 = vrot.slane %v3182, 2
      %v3453 = vsel %vm3242, %v3451, %v3452
      %v3454 = vrot.slane %v3183, 2
      %v3455 = vsel %vm3242, %v3452, %v3454
      %v3458 = vadd.f32 %v3453, %v3455
      %v3459 = vrot.slane %v3458, 4
      %v3460 = vadd.f32 %v3458, %v3459
      %v3461 = vrot.slane %v3460, 2
      %v3462 = vadd.f32 %v3460, %v3461
      %v3463 = vrot.slane %v3462, 1
      %v3464 = vadd.f32 %v3462, %v3463
      %v3465 = vadd.f32 %v3416, %v3464
      %v3466 = vmul.f32 %v3181, %v3181
      %v3467 = vmul.f32 %v3182, %v3182
      %v3468 = vmul.f32 %v3183, %v3183
      %v3472 = vrot.slane %v3466, 2
      %v3473 = vrot.slane %v3467, 2
      %v3474 = vsel %vm3242, %v3472, %v3473
      %v3475 = vrot.slane %v3468, 2
      %v3476 = vsel %vm3242, %v3473, %v3475
      %v3479 = vadd.f32 %v3474, %v3476
      %v3480 = vrot.slane %v3479, 4
      %v3481 = vadd.f32 %v3479, %v3480
      %v3482 = vrot.slane %v3481, 2
      %v3483 = vadd.f32 %v3481, %v3482
      %v3484 = vrot.slane %v3483, 1
      %v3485 = vadd.f32 %v3483, %v3484
      %v3486 = vadd.f32 %v3426, %v3485
      %v3487 = vpack.c.bf16 %v3184, %v3183
      %v3488 = vpack.c.bf16 %v3185, %v3185
      %v3491 = vunpack.c.l.b16 %v3487
      %v3492 = vunpack.c.h.b16 %v3487
      %v3493 = vunpack.c.l.b16 %v3488
      %v3494 = vpack.c.b16 %v3491, %v3491
      %v3495 = vpack.c.b16 %v3492, %v3492
      %v3496 = vpack.c.b16 %v3493, %v3493
      %v3497 = vrot.slane %v3494, 6
      %v3498 = vrot.slane %v3497, 4
      %v3499 = vrot.slane %v3495, 6
      %v3500 = vsel %vm3290, %v3498, %v3499
      %v3501 = vrot.slane %v3499, 4
      %v3502 = vrot.slane %v3496, 6
      %v3503 = vsel %vm3290, %v3501, %v3502
      %3506 = vst [vmem:[%s336 + $0x30] sm:$0xf] %v3500
      %3507 = vst [vmem:[%s336 + $0x34] sm:$0xf] %v3503
      %v3510 = vrot.slane %v3183, 4
      %v3511 = vrot.slane %v3184, 4
      %v3512 = vsel %vm3304, %v3510, %v3511
      %v3513 = vrot.slane %v3185, 4
      %v3514 = vsel %vm3304, %v3511, %v3513
      %v3517 = vadd.f32 %v3512, %v3514
      %v3518 = vrot.slane %v3517, 4
      %v3519 = vadd.f32 %v3517, %v3518
      %v3520 = vrot.slane %v3519, 2
      %v3521 = vadd.f32 %v3519, %v3520
      %v3522 = vrot.slane %v3521, 1
      %v3523 = vadd.f32 %v3521, %v3522
      %v3524 = vadd.f32 %v3465, %v3523
      %v3525 = vmul.f32 %v3184, %v3184
      %v3526 = vmul.f32 %v3185, %v3185
      %v3529 = vrot.slane %v3468, 4
      %v3530 = vrot.slane %v3525, 4
      %v3531 = vsel %vm3304, %v3529, %v3530
      %v3532 = vrot.slane %v3526, 4
      %v3533 = vsel %vm3304, %v3530, %v3532
      %v3536 = vadd.f32 %v3531, %v3533
      %v3537 = vrot.slane %v3536, 4
      %v3538 = vadd.f32 %v3536, %v3537
      %v3539 = vrot.slane %v3538, 2
      %v3540 = vadd.f32 %v3538, %v3539
      %v3541 = vrot.slane %v3540, 1
      %v3542 = vadd.f32 %v3540, %v3541
      %v3543 = vadd.f32 %v3486, %v3542
      %v3544 = vpack.c.bf16 %v3186, %v3185
      %v3545 = vpack.c.bf16 %v3187, %v3187
      %v3548 = vunpack.c.l.b16 %v3544
      %v3549 = vunpack.c.h.b16 %v3544
      %v3550 = vunpack.c.l.b16 %v3545
      %v3551 = vpack.c.b16 %v3548, %v3548
      %v3552 = vpack.c.b16 %v3549, %v3549
      %v3553 = vpack.c.b16 %v3550, %v3550
      %v3554 = vrot.slane %v3551, 7
      %v3555 = vrot.slane %v3554, 4
      %v3556 = vrot.slane %v3552, 7
      %v3557 = vsel %vm3350, %v3555, %v3556
      %v3558 = vrot.slane %v3556, 4
      %v3559 = vrot.slane %v3553, 7
      %v3560 = vsel %vm3350, %v3558, %v3559
      %3563 = vst [vmem:[%s336 + $0x38] sm:$0xf] %v3557
      %3564 = vst [vmem:[%s336 + $0x3c] sm:$0xf] %v3560
      %v3567 = vrot.slane %v3185, 6
      %v3568 = vrot.slane %v3186, 6
      %v3569 = vsel %vm3364, %v3567, %v3568
      %v3570 = vrot.slane %v3187, 6
      %v3571 = vsel %vm3364, %v3568, %v3570
      %v3574 = vadd.f32 %v3569, %v3571
      %v3575 = vrot.slane %v3574, 4
      %v3576 = vadd.f32 %v3574, %v3575
      %v3577 = vrot.slane %v3576, 2
      %v3578 = vadd.f32 %v3576, %v3577
      %v3579 = vrot.slane %v3578, 1
      %v3580 = vadd.f32 %v3578, %v3579
      %v3581 = vadd.f32 %v3524, %v3580
      %v3582 = vmul.f32 %v3186, %v3186
      %v3583 = vmul.f32 %v3187, %v3187
      %v3586 = vrot.slane %v3526, 6
      %v3587 = vrot.slane %v3582, 6
      %v3588 = vsel %vm3364, %v3586, %v3587
      %v3589 = vrot.slane %v3583, 6
      %v3590 = vsel %vm3364, %v3587, %v3589
      %v3593 = vadd.f32 %v3588, %v3590
      %v3594 = vrot.slane %v3593, 4
      %v3595 = vadd.f32 %v3593, %v3594
      %v3596 = vrot.slane %v3595, 2
      %v3597 = vadd.f32 %v3595, %v3596
      %v3598 = vrot.slane %v3597, 1
      %v3599 = vadd.f32 %v3597, %v3598
      %v3600 = vadd.f32 %v3543, %v3599
      %3601 = vst [vmem:[%s345] sm:$0x1] %v3581
      %3602 = vst [vmem:[%s345 + $0x1] sm:$0x1] %v3600
      %s3603 = smul.u32 16, %s23
      %p3604 = scmp.lt.s32.totalorder %s22, 1
      %s3605 = scalar_select %p3604, %s22, 1
      %p3606 = scmp.lt.s32.totalorder %s3603, 31
      %s3607 = scalar_select %p3606, %s3603, 31
      %s3608 = smul.addr %s3605, 32
      %s3609 = sadd.s32 %s3607, %s3608
      %s3610 = smul.addr %s3609, 4
      %s3611 = scalar_lea.vmem %s5, %s3610
      %p3612 = scmp.lt.s32.totalorder %s22, 1
      %s3613 = scalar_select %p3612, %s22, 1
      %p3614 = scmp.lt.s32.totalorder %s23, 1
      %s3615 = scalar_select %p3614, %s23, 1
      %s3616 = smul.addr %s3613, 2
      %s3617 = sadd.s32 %s3615, %s3616
      %s3618 = smul.addr %s3617, 2
      %s3619 = scalar_lea.vmem %s6, %s3618
      // Predicated region
      $region41: #{double_conv.4} parent=39 // pred_check
        %p3620 = pneg %p169
      $region42: #{double_conv.4} parent=39 // pred_check_branch
        %3622 = sbr.rel (%p3620) target = $region44
      $region43: #{double_conv.4} parent=39 // pred_region
        %s3623 = smul.u32 16, %s23
      $region44: #{double_conv.4} parent=39 // pred_fallthru
        _
      // Predicated region
      $region45: #{double_conv.4} parent=39 // pred_check
        %p3624 = pneg %p197
      $region46: #{double_conv.4} parent=39 // pred_check_branch
        %3626 = sbr.rel (%p3624) target = $region48
      $region47: #{double_conv.4} parent=39 // pred_region
        _
      $region48: #{double_conv.4} parent=39 // pred_fallthru
        _
    $region40: #{double_conv.4} parent=5 // pred_fallthru
      _
    %p3627 = scmp.le.s32.totalorder 2, %s13
    // Predicated region
    $region49: #{double_conv.4} parent=5 // pred_check
      %p3628 = pneg %p3627
    $region50: #{double_conv.4} parent=5 // pred_check_branch
      %3630 = sbr.rel (%p3628) target = $region52
    $region51: #{double_conv.4} parent=5 // pred_region
      %s3631 = ssub.s32 %s13, 2
      // Predicated region
      $region53: #{double_conv.4} parent=51 // pred_check
        %p3632 = pneg %p175
      $region54: #{double_conv.4} parent=51 // pred_check_branch
        %3634 = sbr.rel (%p3632) target = $region56
      $region55: #{double_conv.4} parent=51 // pred_region
        %s3635 = smul.u32 16, %s25
        %p3636 = scmp.lt.s32.totalorder %s24, 1
        %s3637 = scalar_select %p3636, %s24, 1
        %p3638 = scmp.lt.s32.totalorder %s3635, 31
        %s3639 = scalar_select %p3638, %s3635, 31
        %s3640 = smul.addr %s3637, 32
        %s3641 = sadd.s32 %s3639, %s3640
        %s3642 = smul.addr %s3641, 4
        %s3643 = scalar_lea.vmem %s5, %s3642
      $region56: #{double_conv.4} parent=51 // pred_fallthru
        _
      // Predicated region
      $region57: #{double_conv.4} parent=51 // pred_check
        %p3644 = pneg %p203
      $region58: #{double_conv.4} parent=51 // pred_check_branch
        %3646 = sbr.rel (%p3644) target = $region60
      $region59: #{double_conv.4} parent=51 // pred_region
        %p3647 = scmp.lt.s32.totalorder %s24, 1
        %s3648 = scalar_select %p3647, %s24, 1
        %p3649 = scmp.lt.s32.totalorder %s25, 1
        %s3650 = scalar_select %p3649, %s25, 1
        %s3651 = smul.addr %s3648, 2
        %s3652 = sadd.s32 %s3650, %s3651
        %s3653 = smul.addr %s3652, 2
        %s3654 = scalar_lea.vmem %s6, %s3653
      $region60: #{double_conv.4} parent=51 // pred_fallthru
        _
    $region52: #{double_conv.4} parent=5 // pred_fallthru
      _
  $region6: #{double_conv.4} parent=0 // loop_footer
    %s17 = sadd.s32 1, %s13
  $region7: #{double_conv.4} parent=0 // loop_footer_branch
    %12 = sbr.rel target = $region3
  $region8: #{double_conv.4} parent=0 // loop_exit
    _

</llo_original>
